<compile_context>
chip_gen: v7x
topology: tpu7x:2x2x1
jax: 0.10.0
libtpu: 0.0.40
codegen_flags: <defaults>
</compile_context>

<pallas_src>
import functools
import math

import jax
import jax.numpy as jnp
from jax.experimental import pallas as pl
from jax.experimental.pallas import tpu as pltpu


# dot_general dimension numbers for A(m,k) @ B(n,k)^T -> (m,n)  (contract last dims),
# same as the reference Pallas flash-attention kernel.
TRANS_B_DIMS = (((1,), (1,)), ((), ()))


# ----------------------------------------------------------------------------
# In-kernel helpers
# ----------------------------------------------------------------------------
def _layernorm(v, eps=1e-6):
    # LayerNorm with elementwise_affine=False (standard DiT block norm).
    mu = jnp.mean(v, axis=-1, keepdims=True)
    var = jnp.mean(jnp.square(v - mu), axis=-1, keepdims=True)
    return (v - mu) * jax.lax.rsqrt(var + eps)


def _modulate(v, shift, scale):
    # v: (S, D); shift/scale: (1, D) per-batch adaLN rows broadcast over tokens.
    return v * (1.0 + scale) + shift


def _mha(q2, k2, v2, wo_ref, H, dh):
    """Multi-head attention + fused output projection.

    q2: (Sq, H*dh) bf16 (1/sqrt(dh) already folded into the Q weights)
    k2, v2: (Sk, H*dh) bf16
    wo_ref: weight ref, block (1, H, dh, Dout) bf16
    Returns (Sq, Dout) f32.

    head_dim is lane-aligned (multiple of 128 at the chosen shapes) so the per-head
    column slices are vreg-aligned views; per-head output projections (dh-deep
    contraction, Dout-wide output) are accumulated, so no lane concatenate is needed.
    """
    out = None
    for h in range(H):
        sl = slice(h * dh, (h + 1) * dh)
        s = jax.lax.dot_general(q2[:, sl], k2[:, sl], TRANS_B_DIMS,
                                preferred_element_type=jnp.float32)        # (Sq, Sk)
        s = s - jnp.max(s, axis=-1, keepdims=True)
        p = jnp.exp(s)
        # approx reciprocal -> EUP slot; tiny rel. error vs exact softmax (inference).
        p = p * pl.reciprocal(jnp.sum(p, axis=-1, keepdims=True), approx=True)
        o = jnp.dot(p.astype(jnp.bfloat16), v2[:, sl],
                    preferred_element_type=jnp.float32)                    # (Sq, dh)
        proj = jnp.dot(o.astype(jnp.bfloat16), wo_ref[0, h],
                       preferred_element_type=jnp.float32)                 # (Sq, Dout)
        out = proj if out is None else out + proj
    return out


# ----------------------------------------------------------------------------
# Fused Pallas kernel: all CrossDiTBlocks + FinalLayer, grid=(B, nlayers)
# ----------------------------------------------------------------------------
def _make_dit_kernel(nhead):
    def kernel(x_ref, y_ref, modx_ref, mody_ref, modf_ref,
               sa_wqkv, sa_bqkv, sa_wo, sa_bo,
               ca_wq, ca_bq, ca_wkv, ca_bkv, ca_wo, ca_bo,
               mlp_w1, mlp_b1, mlp_w2, mlp_b2,
               fin_w, fin_b,
               out_ref, x_scr):
        l = pl.program_id(1)
        S, D = x_scr.shape
        H = nhead
        dh = D // H

        @pl.when(l == 0)
        def _init():
            x_scr[...] = x_ref[0]       # residual stream enters VMEM once per batch elt

        x = x_scr[...]                                   # (S, D)  f32
        y = y_ref[0]                                     # (Sy, Dy) bf16
        modx = modx_ref[0, 0].astype(jnp.float32)        # (6, D) shift/scale/gate x2
        mody = mody_ref[0, 0].astype(jnp.float32)        # (3, D) shift/scale/gate (cross)

        # Cross-attention K/V depend only on cond tokens + this layer's weights;
        # issue their fused MXU work first so it overlaps the self-attn softmax.
        kv_c = (jnp.dot(y, ca_wkv[0], preferred_element_type=jnp.float32)
                + ca_bkv[0]).astype(jnp.bfloat16)        # (Sy, 2D)
        k_c = kv_c[:, :D]
        v_c = kv_c[:, D:]

        # ---- self-attention branch (adaLN-modulated, gated residual) ------------
        h = _modulate(_layernorm(x), modx[0:1], modx[1:2]).astype(jnp.bfloat16)
        qkv = (jnp.dot(h, sa_wqkv[0], preferred_element_type=jnp.float32)
               + sa_bqkv[0]).astype(jnp.bfloat16)        # (S, 3D): one full-width matmul
        a = _mha(qkv[:, :D], qkv[:, D:2 * D], qkv[:, 2 * D:], sa_wo, H, dh) + sa_bo[0]
        x = x + modx[2:3] * a

        # ---- cross-attention branch (K/V from cond_act) ---------------------------
        hc = _modulate(_layernorm(x), mody[0:1], mody[1:2]).astype(jnp.bfloat16)
        qc = (jnp.dot(hc, ca_wq[0], preferred_element_type=jnp.float32)
              + ca_bq[0]).astype(jnp.bfloat16)           # (S, D)
        ac = _mha(qc, k_c, v_c, ca_wo, H, dh) + ca_bo[0]
        x = x + mody[2:3] * ac

        # ---- MLP branch ------------------------------------------------------------
        hm = _modulate(_layernorm(x), modx[3:4], modx[4:5]).astype(jnp.bfloat16)
        hm = jnp.dot(hm, mlp_w1[0], preferred_element_type=jnp.float32) + mlp_b1[0]
        # TODO(synk): nn.GELU() default is exact erf-GELU; tanh approximation used here.
        hm = jax.nn.gelu(hm, approximate=True).astype(jnp.bfloat16)
        hm = jnp.dot(hm, mlp_w2[0], preferred_element_type=jnp.float32) + mlp_b2[0]
        x = x + modx[5:6] * hm

        x_scr[...] = x        # carry the residual stream to layer l+1 (stays in VMEM)

        # ---- FinalLayer fused into the last layer step ------------------------------
        @pl.when(l == pl.num_programs(1) - 1)
        def _final():
            modf = modf_ref[0].astype(jnp.float32)       # (2, D): shift / scale
            hf = _modulate(_layernorm(x), modf[0:1], modf[1:2]).astype(jnp.bfloat16)
            out = (jnp.dot(hf, fin_w[...], preferred_element_type=jnp.float32)
                   + fin_b[...])                          # (S, act_pad), lane-dense store
            out_ref[0] = out.astype(out_ref.dtype)

    return kernel


# ----------------------------------------------------------------------------
# pallas_call wrapper
# ----------------------------------------------------------------------------
def dit_stack(xf, yf, modx, mody, modf, blk, fin, nhead):
    B, S, D = xf.shape
    L = blk["sa_wqkv"].shape[0]
    act_pad = fin["lin_w"].shape[-1]

    def batch_const(shape):          # per-batch block, constant across the layer axis
        nd = len(shape)
        return pl.BlockSpec((1,) + tuple(shape[1:]),
                            lambda b, l, _n=nd: (b,) + (0,) * (_n - 1))

    def per_layer(shape):            # layer-indexed weight slab (prefetched l+1 ahead)
        nd = len(shape)
        return pl.BlockSpec((1,) + tuple(shape[1:]),
                            lambda b, l, _n=nd: (l,) + (0,) * (_n - 1))

    def per_layer_batch(shape):      # (L, B, n, D) adaLN modulation rows
        return pl.BlockSpec((1, 1) + tuple(shape[2:]), lambda b, l: (l, b, 0, 0))

    def const(shape):                # same block for every grid step
        nd = len(shape)
        return pl.BlockSpec(tuple(shape), lambda b, l, _n=nd: (0,) * _n)

    weights = [blk["sa_wqkv"], blk["sa_bqkv"], blk["sa_wo"], blk["sa_bo"],
               blk["ca_wq"], blk["ca_bq"], blk["ca_wkv"], blk["ca_bkv"],
               blk["ca_wo"], blk["ca_bo"],
               blk["mlp_w1"], blk["mlp_b1"], blk["mlp_w2"], blk["mlp_b2"]]

    in_specs = ([batch_const(xf.shape), batch_const(yf.shape),
                 per_layer_batch(modx.shape), per_layer_batch(mody.shape),
                 batch_const(modf.shape)]
                + [per_layer(w.shape) for w in weights]
                + [const(fin["lin_w"].shape), const(fin["lin_b"].shape)])

    return pl.pallas_call(
        _make_dit_kernel(nhead),
        out_shape=jax.ShapeDtypeStruct((B, S, act_pad), jnp.float32),
        grid=(B, L),
        in_specs=in_specs,
        out_specs=pl.BlockSpec((1, S, act_pad), lambda b, l: (b, 0, 0)),
        scratch_shapes=[pltpu.VMEM((S, D), jnp.float32)],
        compiler_params=pltpu.CompilerParams(
            # batch axis feeds megacore (v7x: 2 TCs); layer axis carries the residual.
            dimension_semantics=("parallel", "arbitrary"),
            vmem_limit_bytes=32 * 1024 * 1024),
    )(xf, yf, modx, mody, modf, *weights, fin["lin_w"], fin["lin_b"])


# ----------------------------------------------------------------------------
# Plain-JAX glue (positional table, timestep/label embedders, adaLN MLPs)
# ----------------------------------------------------------------------------
def positional_encoding(S, D):
    pos = jnp.arange(S, dtype=jnp.float32)[:, None]
    div = jnp.exp(jnp.arange(0, D, 2, dtype=jnp.float32) * (-jnp.log(10000.0) / D))
    pe = jnp.zeros((S, D), jnp.float32)
    pe = pe.at[:, 0::2].set(jnp.sin(pos * div))
    pe = pe.at[:, 1::2].set(jnp.cos(pos * div))
    return pe


def timestep_frequency_embedding(t, dim=256, max_period=10000.0):
    half = dim // 2
    freqs = jnp.exp(-jnp.log(max_period) * jnp.arange(half, dtype=jnp.float32) / half)
    args = t.astype(jnp.float32)[:, None] * freqs[None, :]
    return jnp.concatenate([jnp.cos(args), jnp.sin(args)], axis=-1)


def timestep_embedder(p, t):
    h = timestep_frequency_embedding(t, dim=256)
    h = h @ p["w1"] + p["b1"]
    h = jax.nn.silu(h)
    return h @ p["w2"] + p["b2"]


def transformer_forward(params, x, t, cond_act, label, *, nhead, act_dim):
    B, S, D = x.shape
    Sy, Dy = cond_act.shape[1], cond_act.shape[2]

    pe = positional_encoding(max(S, Sy), D)
    x = x + pe[None, :S]                     # pos_encoder(x)        (dropout = eval no-op)
    y = cond_act + pe[None, :Sy, :Dy]        # pos_encoder(cond_act) (requires con_dim == hid_dim)

    c = timestep_embedder(params["t_emb"], t) + timestep_embedder(params["label_emb"], label)
    ca = jax.nn.silu(c)                      # shared SiLU of every adaLN_modulation Sequential

    blk, fin = params["blocks"], params["final"]
    L = blk["sa_wqkv"].shape[0]

    # adaLN modulation at PER-BATCH granularity, bf16 over the DMA; the kernel
    # broadcasts the (n, D) rows over tokens for free (no S-fold HBM/VMEM inflation).
    modx = jnp.einsum("bd,lde->lbe", ca, blk["adaln_x_w"]) + blk["adaln_x_b"][:, None, :]
    modx = modx.reshape(L, B, 6, D).astype(jnp.bfloat16)
    mody = jnp.einsum("bd,lde->lbe", ca, blk["adaln_y_w"]) + blk["adaln_y_b"][:, None, :]
    mody = mody.reshape(L, B, 3, D).astype(jnp.bfloat16)
    modf = (ca @ fin["adaln_w"] + fin["adaln_b"]).reshape(B, 2, D).astype(jnp.bfloat16)

    out = dit_stack(x.astype(jnp.float32), y.astype(jnp.bfloat16),
                    modx, mody, modf, blk, fin, nhead)
    return out[:, :, :act_dim]               # strip the lane padding of the final linear


# ----------------------------------------------------------------------------
# Deterministic parameter construction (stacked per-layer, fused/kernel layout)
# ----------------------------------------------------------------------------
def init_params(key, act_dim, con_dim, hid_dim, nhead, nlayers, freq_dim=256):
    D, Dy, H, L = hid_dim, con_dim, nhead, nlayers
    Dm = int(hid_dim * 4.0)
    dh = D // H
    act_pad = ((act_dim + 127) // 128) * 128          # lane-dense final output
    qscale = 1.0 / math.sqrt(dh)                      # folded into Q weights/bias

    def nrm(k, shape, std=0.02):
        return std * jax.random.normal(k, shape, jnp.float32)

    def bf(a):
        return a.astype(jnp.bfloat16)

    ks = iter(jax.random.split(key, 40))

    # self-attention: fused QKV (one (D,3D) matmul), 1/sqrt(dh) folded into Q columns
    sa_wqkv = bf(jnp.concatenate([nrm(next(ks), (L, D, D)) * qscale,
                                  nrm(next(ks), (L, D, D)),
                                  nrm(next(ks), (L, D, D))], axis=-1))            # (L, D, 3D)
    sa_bqkv = jnp.concatenate([nrm(next(ks), (L, 1, D)) * qscale,
                               nrm(next(ks), (L, 1, D)),
                               nrm(next(ks), (L, 1, D))], axis=-1)                # (L, 1, 3D)
    sa_wo = bf(nrm(next(ks), (L, D, D)).reshape(L, H, dh, D))                     # (L, H, dh, D)
    sa_bo = nrm(next(ks), (L, 1, D))

    # cross-attention: fused KV from cond features, Q scaled
    ca_wq = bf(nrm(next(ks), (L, D, D)) * qscale)
    ca_bq = nrm(next(ks), (L, 1, D)) * qscale
    ca_wkv = bf(jnp.concatenate([nrm(next(ks), (L, Dy, D)),
                                 nrm(next(ks), (L, Dy, D))], axis=-1))            # (L, Dy, 2D)
    ca_bkv = jnp.concatenate([nrm(next(ks), (L, 1, D)),
                              nrm(next(ks), (L, 1, D))], axis=-1)                 # (L, 1, 2D)
    ca_wo = bf(nrm(next(ks), (L, D, D)).reshape(L, H, dh, D))
    ca_bo = nrm(next(ks), (L, 1, D))

    params = {
        "t_emb": {"w1": nrm(next(ks), (freq_dim, D)), "b1": jnp.zeros((D,), jnp.float32),
                  "w2": nrm(next(ks), (D, D)), "b2": jnp.zeros((D,), jnp.float32)},
        "label_emb": {"w1": nrm(next(ks), (freq_dim, D)), "b1": jnp.zeros((D,), jnp.float32),
                      "w2": nrm(next(ks), (D, D)), "b2": jnp.zeros((D,), jnp.float32)},
        "blocks": {
            # adaLN modulation MLPs (tiny [B,D]-sized ops -> evaluated in plain JAX).
            # Random (not the reference zero-init) so the kernel does real compute.
            "adaln_x_w": nrm(next(ks), (L, D, 6 * D)), "adaln_x_b": nrm(next(ks), (L, 6 * D)),
            "adaln_y_w": nrm(next(ks), (L, D, 3 * D)), "adaln_y_b": nrm(next(ks), (L, 3 * D)),
            "sa_wqkv": sa_wqkv, "sa_bqkv": sa_bqkv, "sa_wo": sa_wo, "sa_bo": sa_bo,
            "ca_wq": ca_wq, "ca_bq": ca_bq, "ca_wkv": ca_wkv, "ca_bkv": ca_bkv,
            "ca_wo": ca_wo, "ca_bo": ca_bo,
            # MLP (mlp_ratio = 4.0 -> lane width multiple of 256)
            "mlp_w1": bf(nrm(next(ks), (L, D, Dm))), "mlp_b1": nrm(next(ks), (L, 1, Dm)),
            "mlp_w2": bf(nrm(next(ks), (L, Dm, D))), "mlp_b2": nrm(next(ks), (L, 1, D)),
        },
        "final": {
            "adaln_w": nrm(next(ks), (D, 2 * D)), "adaln_b": nrm(next(ks), (2 * D,)),
            # final linear padded to a lane-dense 128-multiple; sliced in the wrapper
            "lin_w": bf(jnp.zeros((D, act_pad), jnp.float32)
                        .at[:, :act_dim].set(nrm(next(ks), (D, act_dim)))),
            "lin_b": jnp.zeros((1, act_pad), jnp.float32)
                     .at[:, :act_dim].set(nrm(next(ks), (1, act_dim))),
        },
    }
    return params


# ----------------------------------------------------------------------------
if __name__ == "__main__":
    # Small, forward-consistent shapes.  hid_dim=256 / nhead=2 gives head_dim=128 so the
    # per-head column slices and output-projection contractions are exactly lane/MXU
    # aligned.  con_dim == hid_dim (pos_encoder is applied to cond_act too); self.linear
    # / text_embed_proj are never used in the reference forward(), so x enters with
    # hid_dim features already.
    B, S, hid_dim, act_dim, con_dim, nhead, nlayers = 2, 8, 256, 4, 256, 2, 2

    params = init_params(jax.random.PRNGKey(0), act_dim, con_dim, hid_dim, nhead, nlayers)

    kx, kc, _, _ = jax.random.split(jax.random.PRNGKey(0), 4)
    x = jax.random.normal(kx, (B, S, hid_dim), jnp.float32)
    cond_act = jax.random.normal(kc, (B, S, con_dim), jnp.float32)
    t = jnp.array([3.0, 17.0], jnp.float32)
    label = jnp.array([0.0, 5.0], jnp.float32)

    fwd = jax.jit(functools.partial(transformer_forward, nhead=nhead, act_dim=act_dim))
    out = fwd(params, x, t, cond_act, label)
    out = jax.block_until_ready(out)
    assert out.shape == (B, S, act_dim), out.shape
    assert bool(jnp.all(jnp.isfinite(out)))
    print("KERNEL_OK")
</pallas_src>

<mosaic_0001>
module attributes {stable_mosaic.version = 11 : i64} {
  func.func @kernel(%arg0: i32, %arg1: i32, %arg2: memref<1x8x256xf32, #tpu.memory_space<vmem>>, %arg3: memref<1x8x256xbf16, #tpu.memory_space<vmem>>, %arg4: memref<1x1x6x256xbf16, #tpu.memory_space<vmem>>, %arg5: memref<1x1x3x256xbf16, #tpu.memory_space<vmem>>, %arg6: memref<1x2x256xbf16, #tpu.memory_space<vmem>>, %arg7: memref<1x256x768xbf16, #tpu.memory_space<vmem>>, %arg8: memref<1x1x768xf32, #tpu.memory_space<vmem>>, %arg9: memref<1x2x128x256xbf16, #tpu.memory_space<vmem>>, %arg10: memref<1x1x256xf32, #tpu.memory_space<vmem>>, %arg11: memref<1x256x256xbf16, #tpu.memory_space<vmem>>, %arg12: memref<1x1x256xf32, #tpu.memory_space<vmem>>, %arg13: memref<1x256x512xbf16, #tpu.memory_space<vmem>>, %arg14: memref<1x1x512xf32, #tpu.memory_space<vmem>>, %arg15: memref<1x2x128x256xbf16, #tpu.memory_space<vmem>>, %arg16: memref<1x1x256xf32, #tpu.memory_space<vmem>>, %arg17: memref<1x256x1024xbf16, #tpu.memory_space<vmem>>, %arg18: memref<1x1x1024xf32, #tpu.memory_space<vmem>>, %arg19: memref<1x1024x256xbf16, #tpu.memory_space<vmem>>, %arg20: memref<1x1x256xf32, #tpu.memory_space<vmem>>, %arg21: memref<256x128xbf16, #tpu.memory_space<vmem>>, %arg22: memref<1x128xf32, #tpu.memory_space<vmem>>, %arg23: memref<1x8x128xf32, #tpu.memory_space<vmem>>, %arg24: memref<8x256xf32, #tpu.memory_space<vmem>>) attributes {dimension_semantics = [#tpu.dimension_semantics<parallel>, #tpu.dimension_semantics<arbitrary>], iteration_bounds = array<i64: 2, 2>, scalar_prefetch = 0 : i64, scratch_operands = 1 : i64, tpu.core_type = #tpu.core_type<tc>, window_params = [{transform_indices = @transform_0, window_bounds = array<i64: 1, 8, 256>}, {transform_indices = @transform_1, window_bounds = array<i64: 1, 8, 256>}, {transform_indices = @transform_2, window_bounds = array<i64: 1, 1, 6, 256>}, {transform_indices = @transform_3, window_bounds = array<i64: 1, 1, 3, 256>}, {transform_indices = @transform_4, window_bounds = array<i64: 1, 2, 256>}, {transform_indices = @transform_5, window_bounds = array<i64: 1, 256, 768>}, {transform_indices = @transform_6, window_bounds = array<i64: 1, 1, 768>}, {transform_indices = @transform_7, window_bounds = array<i64: 1, 2, 128, 256>}, {transform_indices = @transform_8, window_bounds = array<i64: 1, 1, 256>}, {transform_indices = @transform_9, window_bounds = array<i64: 1, 256, 256>}, {transform_indices = @transform_10, window_bounds = array<i64: 1, 1, 256>}, {transform_indices = @transform_11, window_bounds = array<i64: 1, 256, 512>}, {transform_indices = @transform_12, window_bounds = array<i64: 1, 1, 512>}, {transform_indices = @transform_13, window_bounds = array<i64: 1, 2, 128, 256>}, {transform_indices = @transform_14, window_bounds = array<i64: 1, 1, 256>}, {transform_indices = @transform_15, window_bounds = array<i64: 1, 256, 1024>}, {transform_indices = @transform_16, window_bounds = array<i64: 1, 1, 1024>}, {transform_indices = @transform_17, window_bounds = array<i64: 1, 1024, 256>}, {transform_indices = @transform_18, window_bounds = array<i64: 1, 1, 256>}, {pipeline_mode = #tpu.pipeline_mode<synchronous>, transform_indices = @transform_19, window_bounds = array<i64: 256, 128>}, {pipeline_mode = #tpu.pipeline_mode<synchronous>, transform_indices = @transform_20, window_bounds = array<i64: 1, 128>}, {transform_indices = @transform_21, window_bounds = array<i64: 1, 8, 128>}]} {
    %c0_i32 = arith.constant 0 : i32
    %0 = arith.cmpi eq, %arg1, %c0_i32 : i32
    %1 = arith.extui %0 : i1 to i32
    %c0_i32_0 = arith.constant 0 : i32
    %2 = arith.cmpi ne, %1, %c0_i32_0 : i32
    scf.if %2 {
      %c0_113 = arith.constant 0 : index
      %c0_114 = arith.constant 0 : index
      %c0_115 = arith.constant 0 : index
      %256 = vector.load %arg2[%c0_113, %c0_114, %c0_115] : memref<1x8x256xf32, #tpu.memory_space<vmem>>, vector<1x8x256xf32>
      %257 = vector.shape_cast %256 : vector<1x8x256xf32> to vector<8x256xf32>
      %c0_116 = arith.constant 0 : index
      %c0_117 = arith.constant 0 : index
      %258 = vector.load %arg24[%c0_116, %c0_117] : memref<8x256xf32, #tpu.memory_space<vmem>>, vector<8x256xf32>
      tpu.vector_store %arg24[%c0_116, %c0_117], %257 {strides = array<i32>} : memref<8x256xf32, #tpu.memory_space<vmem>>, vector<8x256xf32>,
    } else {
    }
    %c0 = arith.constant 0 : index
    %c0_1 = arith.constant 0 : index
    %3 = vector.load %arg24[%c0, %c0_1] : memref<8x256xf32, #tpu.memory_space<vmem>>, vector<8x256xf32>
    %c0_2 = arith.constant 0 : index
    %c0_3 = arith.constant 0 : index
    %c0_4 = arith.constant 0 : index
    %4 = vector.load %arg3[%c0_2, %c0_3, %c0_4] : memref<1x8x256xbf16, #tpu.memory_space<vmem>>, vector<1x8x256xbf16>
    %5 = vector.shape_cast %4 : vector<1x8x256xbf16> to vector<8x256xbf16>
    %c0_5 = arith.constant 0 : index
    %c0_6 = arith.constant 0 : index
    %c0_7 = arith.constant 0 : index
    %c0_8 = arith.constant 0 : index
    %6 = vector.load %arg4[%c0_5, %c0_6, %c0_7, %c0_8] : memref<1x1x6x256xbf16, #tpu.memory_space<vmem>>, vector<1x1x6x256xbf16>
    %7 = vector.shape_cast %6 : vector<1x1x6x256xbf16> to vector<6x256xbf16>
    %8 = arith.extf %7 : vector<6x256xbf16> to vector<6x256xf32>
    %c0_9 = arith.constant 0 : index
    %c0_10 = arith.constant 0 : index
    %c0_11 = arith.constant 0 : index
    %c0_12 = arith.constant 0 : index
    %9 = vector.load %arg5[%c0_9, %c0_10, %c0_11, %c0_12] : memref<1x1x3x256xbf16, #tpu.memory_space<vmem>>, vector<1x1x3x256xbf16>
    %10 = vector.shape_cast %9 : vector<1x1x3x256xbf16> to vector<3x256xbf16>
    %11 = arith.extf %10 : vector<3x256xbf16> to vector<3x256xf32>
    %c0_13 = arith.constant 0 : index
    %c0_14 = arith.constant 0 : index
    %c0_15 = arith.constant 0 : index
    %12 = vector.load %arg13[%c0_13, %c0_14, %c0_15] : memref<1x256x512xbf16, #tpu.memory_space<vmem>>, vector<1x256x512xbf16>
    %13 = vector.shape_cast %12 : vector<1x256x512xbf16> to vector<256x512xbf16>
    %cst = arith.constant dense<0.000000e+00> : vector<8x512xf32>
    %14 = tpu.matmul %5, %13, %cst {dimension_numbers = #tpu.dot_dimension_numbers<[1], [0], [0], [1], [0, 0, 1, 1], [], []>} : vector<8x256xbf16>, vector<256x512xbf16>, vector<8x512xf32> -> vector<8x512xf32>
    %c0_16 = arith.constant 0 : index
    %c0_17 = arith.constant 0 : index
    %c0_18 = arith.constant 0 : index
    %15 = vector.load %arg14[%c0_16, %c0_17, %c0_18] : memref<1x1x512xf32, #tpu.memory_space<vmem>>, vector<1x1x512xf32>
    %16 = vector.shape_cast %15 : vector<1x1x512xf32> to vector<1x512xf32>
    %17 = vector.broadcast %16 : vector<1x512xf32> to vector<8x512xf32>
    %18 = arith.addf %14, %17 : vector<8x512xf32>
    %19 = arith.truncf %18 : vector<8x512xf32> to vector<8x512xbf16>
    %20 = vector.extract_strided_slice %19 {offsets = [0, 0], sizes = [8, 256], strides = [1, 1]} : vector<8x512xbf16> to vector<8x256xbf16>
    %21 = vector.extract_strided_slice %19 {offsets = [0, 256], sizes = [8, 256], strides = [1, 1]} : vector<8x512xbf16> to vector<8x256xbf16>
    %cst_19 = arith.constant dense<0.000000e+00> : vector<8xf32>
    %22 = vector.multi_reduction <add>, %3, %cst_19 [1] : vector<8x256xf32> to vector<8xf32>
    %23 = vector.shape_cast %22 : vector<8xf32> to vector<8x1xf32>
    %cst_20 = arith.constant 2.560000e+02 : f32
    %24 = vector.broadcast %cst_20 : f32 to vector<8x1xf32>
    %25 = arith.divf %23, %24 : vector<8x1xf32>
    %26 = vector.broadcast %25 : vector<8x1xf32> to vector<8x256xf32>
    %27 = arith.subf %3, %26 : vector<8x256xf32>
    %28 = arith.mulf %27, %27 : vector<8x256xf32>
    %cst_21 = arith.constant dense<0.000000e+00> : vector<8xf32>
    %29 = vector.multi_reduction <add>, %28, %cst_21 [1] : vector<8x256xf32> to vector<8xf32>
    %30 = vector.shape_cast %29 : vector<8xf32> to vector<8x1xf32>
    %cst_22 = arith.constant 2.560000e+02 : f32
    %31 = vector.broadcast %cst_22 : f32 to vector<8x1xf32>
    %32 = arith.divf %30, %31 : vector<8x1xf32>
    %33 = vector.broadcast %25 : vector<8x1xf32> to vector<8x256xf32>
    %34 = arith.subf %3, %33 : vector<8x256xf32>
    %cst_23 = arith.constant 9.99999997E-7 : f32
    %35 = vector.broadcast %cst_23 : f32 to vector<8x1xf32>
    %36 = arith.addf %32, %35 : vector<8x1xf32>
    %37 = math.rsqrt %36 : vector<8x1xf32>
    %38 = vector.broadcast %37 : vector<8x1xf32> to vector<8x256xf32>
    %39 = arith.mulf %34, %38 : vector<8x256xf32>
    %40 = vector.extract_strided_slice %8 {offsets = [0, 0], sizes = [1, 256], strides = [1, 1]} : vector<6x256xf32> to vector<1x256xf32>
    %41 = vector.extract_strided_slice %8 {offsets = [1, 0], sizes = [1, 256], strides = [1, 1]} : vector<6x256xf32> to vector<1x256xf32>
    %cst_24 = arith.constant 1.000000e+00 : f32
    %42 = vector.broadcast %cst_24 : f32 to vector<1x256xf32>
    %43 = arith.addf %42, %41 : vector<1x256xf32>
    %44 = vector.broadcast %43 : vector<1x256xf32> to vector<8x256xf32>
    %45 = arith.mulf %39, %44 : vector<8x256xf32>
    %46 = vector.broadcast %40 : vector<1x256xf32> to vector<8x256xf32>
    %47 = arith.addf %45, %46 : vector<8x256xf32>
    %48 = arith.truncf %47 : vector<8x256xf32> to vector<8x256xbf16>
    %c0_25 = arith.constant 0 : index
    %c0_26 = arith.constant 0 : index
    %c0_27 = arith.constant 0 : index
    %49 = vector.load %arg7[%c0_25, %c0_26, %c0_27] : memref<1x256x768xbf16, #tpu.memory_space<vmem>>, vector<1x256x768xbf16>
    %50 = vector.shape_cast %49 : vector<1x256x768xbf16> to vector<256x768xbf16>
    %cst_28 = arith.constant dense<0.000000e+00> : vector<8x768xf32>
    %51 = tpu.matmul %48, %50, %cst_28 {dimension_numbers = #tpu.dot_dimension_numbers<[1], [0], [0], [1], [0, 0, 1, 1], [], []>} : vector<8x256xbf16>, vector<256x768xbf16>, vector<8x768xf32> -> vector<8x768xf32>
    %c0_29 = arith.constant 0 : index
    %c0_30 = arith.constant 0 : index
    %c0_31 = arith.constant 0 : index
    %52 = vector.load %arg8[%c0_29, %c0_30, %c0_31] : memref<1x1x768xf32, #tpu.memory_space<vmem>>, vector<1x1x768xf32>
    %53 = vector.shape_cast %52 : vector<1x1x768xf32> to vector<1x768xf32>
    %54 = vector.broadcast %53 : vector<1x768xf32> to vector<8x768xf32>
    %55 = arith.addf %51, %54 : vector<8x768xf32>
    %56 = arith.truncf %55 : vector<8x768xf32> to vector<8x768xbf16>
    %57 = vector.extract_strided_slice %56 {offsets = [0, 0], sizes = [8, 256], strides = [1, 1]} : vector<8x768xbf16> to vector<8x256xbf16>
    %58 = vector.extract_strided_slice %56 {offsets = [0, 256], sizes = [8, 256], strides = [1, 1]} : vector<8x768xbf16> to vector<8x256xbf16>
    %59 = vector.extract_strided_slice %56 {offsets = [0, 512], sizes = [8, 256], strides = [1, 1]} : vector<8x768xbf16> to vector<8x256xbf16>
    %60 = vector.extract_strided_slice %57 {offsets = [0, 0], sizes = [8, 128], strides = [1, 1]} : vector<8x256xbf16> to vector<8x128xbf16>
    %61 = vector.extract_strided_slice %58 {offsets = [0, 0], sizes = [8, 128], strides = [1, 1]} : vector<8x256xbf16> to vector<8x128xbf16>
    %cst_32 = arith.constant dense<0.000000e+00> : vector<8x8xf32>
    %62 = tpu.matmul %60, %61, %cst_32 {dimension_numbers = #tpu.dot_dimension_numbers<[1], [1], [0], [0], [0, 0, 1, 0], [], []>} : vector<8x128xbf16>, vector<8x128xbf16>, vector<8x8xf32> -> vector<8x8xf32>
    %cst_33 = arith.constant dense<0xFF800000> : vector<8xf32>
    %63 = vector.multi_reduction <maximumf>, %62, %cst_33 [1] : vector<8x8xf32> to vector<8xf32>
    %64 = vector.shape_cast %63 : vector<8xf32> to vector<8x1xf32>
    %65 = vector.broadcast %64 : vector<8x1xf32> to vector<8x8xf32>
    %66 = arith.subf %62, %65 : vector<8x8xf32>
    %67 = math.exp %66 : vector<8x8xf32>
    %cst_34 = arith.constant dense<0.000000e+00> : vector<8xf32>
    %68 = vector.multi_reduction <add>, %67, %cst_34 [1] : vector<8x8xf32> to vector<8xf32>
    %69 = vector.shape_cast %68 : vector<8xf32> to vector<8x1xf32>
    %70 = tpu.reciprocal %69 {approx = true} : vector<8x1xf32> -> vector<8x1xf32>
    %71 = vector.broadcast %70 : vector<8x1xf32> to vector<8x8xf32>
    %72 = arith.mulf %67, %71 : vector<8x8xf32>
    %73 = arith.truncf %72 : vector<8x8xf32> to vector<8x8xbf16>
    %74 = vector.extract_strided_slice %59 {offsets = [0, 0], sizes = [8, 128], strides = [1, 1]} : vector<8x256xbf16> to vector<8x128xbf16>
    %cst_35 = arith.constant dense<0.000000e+00> : vector<8x128xf32>
    %75 = tpu.matmul %73, %74, %cst_35 {dimension_numbers = #tpu.dot_dimension_numbers<[1], [0], [0], [1], [0, 0, 1, 1], [], []>} : vector<8x8xbf16>, vector<8x128xbf16>, vector<8x128xf32> -> vector<8x128xf32>
    %76 = arith.truncf %75 : vector<8x128xf32> to vector<8x128xbf16>
    %c0_36 = arith.constant 0 : index
    %c0_37 = arith.constant 0 : index
    %c0_38 = arith.constant 0 : index
    %c0_39 = arith.constant 0 : index
    %77 = vector.load %arg9[%c0_36, %c0_37, %c0_38, %c0_39] : memref<1x2x128x256xbf16, #tpu.memory_space<vmem>>, vector<1x1x128x256xbf16>
    %78 = vector.shape_cast %77 : vector<1x1x128x256xbf16> to vector<128x256xbf16>
    %cst_40 = arith.constant dense<0.000000e+00> : vector<8x256xf32>
    %79 = tpu.matmul %76, %78, %cst_40 {dimension_numbers = #tpu.dot_dimension_numbers<[1], [0], [0], [1], [0, 0, 1, 1], [], []>} : vector<8x128xbf16>, vector<128x256xbf16>, vector<8x256xf32> -> vector<8x256xf32>
    %80 = vector.extract_strided_slice %57 {offsets = [0, 128], sizes = [8, 128], strides = [1, 1]} : vector<8x256xbf16> to vector<8x128xbf16>
    %81 = vector.extract_strided_slice %58 {offsets = [0, 128], sizes = [8, 128], strides = [1, 1]} : vector<8x256xbf16> to vector<8x128xbf16>
    %cst_41 = arith.constant dense<0.000000e+00> : vector<8x8xf32>
    %82 = tpu.matmul %80, %81, %cst_41 {dimension_numbers = #tpu.dot_dimension_numbers<[1], [1], [0], [0], [0, 0, 1, 0], [], []>} : vector<8x128xbf16>, vector<8x128xbf16>, vector<8x8xf32> -> vector<8x8xf32>
    %cst_42 = arith.constant dense<0xFF800000> : vector<8xf32>
    %83 = vector.multi_reduction <maximumf>, %82, %cst_42 [1] : vector<8x8xf32> to vector<8xf32>
    %84 = vector.shape_cast %83 : vector<8xf32> to vector<8x1xf32>
    %85 = vector.broadcast %84 : vector<8x1xf32> to vector<8x8xf32>
    %86 = arith.subf %82, %85 : vector<8x8xf32>
    %87 = math.exp %86 : vector<8x8xf32>
    %cst_43 = arith.constant dense<0.000000e+00> : vector<8xf32>
    %88 = vector.multi_reduction <add>, %87, %cst_43 [1] : vector<8x8xf32> to vector<8xf32>
    %89 = vector.shape_cast %88 : vector<8xf32> to vector<8x1xf32>
    %90 = tpu.reciprocal %89 {approx = true} : vector<8x1xf32> -> vector<8x1xf32>
    %91 = vector.broadcast %90 : vector<8x1xf32> to vector<8x8xf32>
    %92 = arith.mulf %87, %91 : vector<8x8xf32>
    %93 = arith.truncf %92 : vector<8x8xf32> to vector<8x8xbf16>
    %94 = vector.extract_strided_slice %59 {offsets = [0, 128], sizes = [8, 128], strides = [1, 1]} : vector<8x256xbf16> to vector<8x128xbf16>
    %cst_44 = arith.constant dense<0.000000e+00> : vector<8x128xf32>
    %95 = tpu.matmul %93, %94, %cst_44 {dimension_numbers = #tpu.dot_dimension_numbers<[1], [0], [0], [1], [0, 0, 1, 1], [], []>} : vector<8x8xbf16>, vector<8x128xbf16>, vector<8x128xf32> -> vector<8x128xf32>
    %96 = arith.truncf %95 : vector<8x128xf32> to vector<8x128xbf16>
    %c0_45 = arith.constant 0 : index
    %c1 = arith.constant 1 : index
    %c0_46 = arith.constant 0 : index
    %c0_47 = arith.constant 0 : index
    %97 = vector.load %arg9[%c0_45, %c1, %c0_46, %c0_47] : memref<1x2x128x256xbf16, #tpu.memory_space<vmem>>, vector<1x1x128x256xbf16>
    %98 = vector.shape_cast %97 : vector<1x1x128x256xbf16> to vector<128x256xbf16>
    %cst_48 = arith.constant dense<0.000000e+00> : vector<8x256xf32>
    %99 = tpu.matmul %96, %98, %cst_48 {dimension_numbers = #tpu.dot_dimension_numbers<[1], [0], [0], [1], [0, 0, 1, 1], [], []>} : vector<8x128xbf16>, vector<128x256xbf16>, vector<8x256xf32> -> vector<8x256xf32>
    %100 = arith.addf %79, %99 : vector<8x256xf32>
    %c0_49 = arith.constant 0 : index
    %c0_50 = arith.constant 0 : index
    %c0_51 = arith.constant 0 : index
    %101 = vector.load %arg10[%c0_49, %c0_50, %c0_51] : memref<1x1x256xf32, #tpu.memory_space<vmem>>, vector<1x1x256xf32>
    %102 = vector.shape_cast %101 : vector<1x1x256xf32> to vector<1x256xf32>
    %103 = vector.broadcast %102 : vector<1x256xf32> to vector<8x256xf32>
    %104 = arith.addf %100, %103 : vector<8x256xf32>
    %105 = vector.extract_strided_slice %8 {offsets = [2, 0], sizes = [1, 256], strides = [1, 1]} : vector<6x256xf32> to vector<1x256xf32>
    %106 = vector.broadcast %105 : vector<1x256xf32> to vector<8x256xf32>
    %107 = arith.mulf %106, %104 : vector<8x256xf32>
    %108 = arith.addf %3, %107 : vector<8x256xf32>
    %cst_52 = arith.constant dense<0.000000e+00> : vector<8xf32>
    %109 = vector.multi_reduction <add>, %108, %cst_52 [1] : vector<8x256xf32> to vector<8xf32>
    %110 = vector.shape_cast %109 : vector<8xf32> to vector<8x1xf32>
    %cst_53 = arith.constant 2.560000e+02 : f32
    %111 = vector.broadcast %cst_53 : f32 to vector<8x1xf32>
    %112 = arith.divf %110, %111 : vector<8x1xf32>
    %113 = vector.broadcast %112 : vector<8x1xf32> to vector<8x256xf32>
    %114 = arith.subf %108, %113 : vector<8x256xf32>
    %115 = arith.mulf %114, %114 : vector<8x256xf32>
    %cst_54 = arith.constant dense<0.000000e+00> : vector<8xf32>
    %116 = vector.multi_reduction <add>, %115, %cst_54 [1] : vector<8x256xf32> to vector<8xf32>
    %117 = vector.shape_cast %116 : vector<8xf32> to vector<8x1xf32>
    %cst_55 = arith.constant 2.560000e+02 : f32
    %118 = vector.broadcast %cst_55 : f32 to vector<8x1xf32>
    %119 = arith.divf %117, %118 : vector<8x1xf32>
    %120 = vector.broadcast %112 : vector<8x1xf32> to vector<8x256xf32>
    %121 = arith.subf %108, %120 : vector<8x256xf32>
    %cst_56 = arith.constant 9.99999997E-7 : f32
    %122 = vector.broadcast %cst_56 : f32 to vector<8x1xf32>
    %123 = arith.addf %119, %122 : vector<8x1xf32>
    %124 = math.rsqrt %123 : vector<8x1xf32>
    %125 = vector.broadcast %124 : vector<8x1xf32> to vector<8x256xf32>
    %126 = arith.mulf %121, %125 : vector<8x256xf32>
    %127 = vector.extract_strided_slice %11 {offsets = [0, 0], sizes = [1, 256], strides = [1, 1]} : vector<3x256xf32> to vector<1x256xf32>
    %128 = vector.extract_strided_slice %11 {offsets = [1, 0], sizes = [1, 256], strides = [1, 1]} : vector<3x256xf32> to vector<1x256xf32>
    %cst_57 = arith.constant 1.000000e+00 : f32
    %129 = vector.broadcast %cst_57 : f32 to vector<1x256xf32>
    %130 = arith.addf %129, %128 : vector<1x256xf32>
    %131 = vector.broadcast %130 : vector<1x256xf32> to vector<8x256xf32>
    %132 = arith.mulf %126, %131 : vector<8x256xf32>
    %133 = vector.broadcast %127 : vector<1x256xf32> to vector<8x256xf32>
    %134 = arith.addf %132, %133 : vector<8x256xf32>
    %135 = arith.truncf %134 : vector<8x256xf32> to vector<8x256xbf16>
    %c0_58 = arith.constant 0 : index
    %c0_59 = arith.constant 0 : index
    %c0_60 = arith.constant 0 : index
    %136 = vector.load %arg11[%c0_58, %c0_59, %c0_60] : memref<1x256x256xbf16, #tpu.memory_space<vmem>>, vector<1x256x256xbf16>
    %137 = vector.shape_cast %136 : vector<1x256x256xbf16> to vector<256x256xbf16>
    %cst_61 = arith.constant dense<0.000000e+00> : vector<8x256xf32>
    %138 = tpu.matmul %135, %137, %cst_61 {dimension_numbers = #tpu.dot_dimension_numbers<[1], [0], [0], [1], [0, 0, 1, 1], [], []>} : vector<8x256xbf16>, vector<256x256xbf16>, vector<8x256xf32> -> vector<8x256xf32>
    %c0_62 = arith.constant 0 : index
    %c0_63 = arith.constant 0 : index
    %c0_64 = arith.constant 0 : index
    %139 = vector.load %arg12[%c0_62, %c0_63, %c0_64] : memref<1x1x256xf32, #tpu.memory_space<vmem>>, vector<1x1x256xf32>
    %140 = vector.shape_cast %139 : vector<1x1x256xf32> to vector<1x256xf32>
    %141 = vector.broadcast %140 : vector<1x256xf32> to vector<8x256xf32>
    %142 = arith.addf %138, %141 : vector<8x256xf32>
    %143 = arith.truncf %142 : vector<8x256xf32> to vector<8x256xbf16>
    %144 = vector.extract_strided_slice %143 {offsets = [0, 0], sizes = [8, 128], strides = [1, 1]} : vector<8x256xbf16> to vector<8x128xbf16>
    %145 = vector.extract_strided_slice %20 {offsets = [0, 0], sizes = [8, 128], strides = [1, 1]} : vector<8x256xbf16> to vector<8x128xbf16>
    %cst_65 = arith.constant dense<0.000000e+00> : vector<8x8xf32>
    %146 = tpu.matmul %144, %145, %cst_65 {dimension_numbers = #tpu.dot_dimension_numbers<[1], [1], [0], [0], [0, 0, 1, 0], [], []>} : vector<8x128xbf16>, vector<8x128xbf16>, vector<8x8xf32> -> vector<8x8xf32>
    %cst_66 = arith.constant dense<0xFF800000> : vector<8xf32>
    %147 = vector.multi_reduction <maximumf>, %146, %cst_66 [1] : vector<8x8xf32> to vector<8xf32>
    %148 = vector.shape_cast %147 : vector<8xf32> to vector<8x1xf32>
    %149 = vector.broadcast %148 : vector<8x1xf32> to vector<8x8xf32>
    %150 = arith.subf %146, %149 : vector<8x8xf32>
    %151 = math.exp %150 : vector<8x8xf32>
    %cst_67 = arith.constant dense<0.000000e+00> : vector<8xf32>
    %152 = vector.multi_reduction <add>, %151, %cst_67 [1] : vector<8x8xf32> to vector<8xf32>
    %153 = vector.shape_cast %152 : vector<8xf32> to vector<8x1xf32>
    %154 = tpu.reciprocal %153 {approx = true} : vector<8x1xf32> -> vector<8x1xf32>
    %155 = vector.broadcast %154 : vector<8x1xf32> to vector<8x8xf32>
    %156 = arith.mulf %151, %155 : vector<8x8xf32>
    %157 = arith.truncf %156 : vector<8x8xf32> to vector<8x8xbf16>
    %158 = vector.extract_strided_slice %21 {offsets = [0, 0], sizes = [8, 128], strides = [1, 1]} : vector<8x256xbf16> to vector<8x128xbf16>
    %cst_68 = arith.constant dense<0.000000e+00> : vector<8x128xf32>
    %159 = tpu.matmul %157, %158, %cst_68 {dimension_numbers = #tpu.dot_dimension_numbers<[1], [0], [0], [1], [0, 0, 1, 1], [], []>} : vector<8x8xbf16>, vector<8x128xbf16>, vector<8x128xf32> -> vector<8x128xf32>
    %160 = arith.truncf %159 : vector<8x128xf32> to vector<8x128xbf16>
    %c0_69 = arith.constant 0 : index
    %c0_70 = arith.constant 0 : index
    %c0_71 = arith.constant 0 : index
    %c0_72 = arith.constant 0 : index
    %161 = vector.load %arg15[%c0_69, %c0_70, %c0_71, %c0_72] : memref<1x2x128x256xbf16, #tpu.memory_space<vmem>>, vector<1x1x128x256xbf16>
    %162 = vector.shape_cast %161 : vector<1x1x128x256xbf16> to vector<128x256xbf16>
    %cst_73 = arith.constant dense<0.000000e+00> : vector<8x256xf32>
    %163 = tpu.matmul %160, %162, %cst_73 {dimension_numbers = #tpu.dot_dimension_numbers<[1], [0], [0], [1], [0, 0, 1, 1], [], []>} : vector<8x128xbf16>, vector<128x256xbf16>, vector<8x256xf32> -> vector<8x256xf32>
    %164 = vector.extract_strided_slice %143 {offsets = [0, 128], sizes = [8, 128], strides = [1, 1]} : vector<8x256xbf16> to vector<8x128xbf16>
    %165 = vector.extract_strided_slice %20 {offsets = [0, 128], sizes = [8, 128], strides = [1, 1]} : vector<8x256xbf16> to vector<8x128xbf16>
    %cst_74 = arith.constant dense<0.000000e+00> : vector<8x8xf32>
    %166 = tpu.matmul %164, %165, %cst_74 {dimension_numbers = #tpu.dot_dimension_numbers<[1], [1], [0], [0], [0, 0, 1, 0], [], []>} : vector<8x128xbf16>, vector<8x128xbf16>, vector<8x8xf32> -> vector<8x8xf32>
    %cst_75 = arith.constant dense<0xFF800000> : vector<8xf32>
    %167 = vector.multi_reduction <maximumf>, %166, %cst_75 [1] : vector<8x8xf32> to vector<8xf32>
    %168 = vector.shape_cast %167 : vector<8xf32> to vector<8x1xf32>
    %169 = vector.broadcast %168 : vector<8x1xf32> to vector<8x8xf32>
    %170 = arith.subf %166, %169 : vector<8x8xf32>
    %171 = math.exp %170 : vector<8x8xf32>
    %cst_76 = arith.constant dense<0.000000e+00> : vector<8xf32>
    %172 = vector.multi_reduction <add>, %171, %cst_76 [1] : vector<8x8xf32> to vector<8xf32>
    %173 = vector.shape_cast %172 : vector<8xf32> to vector<8x1xf32>
    %174 = tpu.reciprocal %173 {approx = true} : vector<8x1xf32> -> vector<8x1xf32>
    %175 = vector.broadcast %174 : vector<8x1xf32> to vector<8x8xf32>
    %176 = arith.mulf %171, %175 : vector<8x8xf32>
    %177 = arith.truncf %176 : vector<8x8xf32> to vector<8x8xbf16>
    %178 = vector.extract_strided_slice %21 {offsets = [0, 128], sizes = [8, 128], strides = [1, 1]} : vector<8x256xbf16> to vector<8x128xbf16>
    %cst_77 = arith.constant dense<0.000000e+00> : vector<8x128xf32>
    %179 = tpu.matmul %177, %178, %cst_77 {dimension_numbers = #tpu.dot_dimension_numbers<[1], [0], [0], [1], [0, 0, 1, 1], [], []>} : vector<8x8xbf16>, vector<8x128xbf16>, vector<8x128xf32> -> vector<8x128xf32>
    %180 = arith.truncf %179 : vector<8x128xf32> to vector<8x128xbf16>
    %c0_78 = arith.constant 0 : index
    %c1_79 = arith.constant 1 : index
    %c0_80 = arith.constant 0 : index
    %c0_81 = arith.constant 0 : index
    %181 = vector.load %arg15[%c0_78, %c1_79, %c0_80, %c0_81] : memref<1x2x128x256xbf16, #tpu.memory_space<vmem>>, vector<1x1x128x256xbf16>
    %182 = vector.shape_cast %181 : vector<1x1x128x256xbf16> to vector<128x256xbf16>
    %cst_82 = arith.constant dense<0.000000e+00> : vector<8x256xf32>
    %183 = tpu.matmul %180, %182, %cst_82 {dimension_numbers = #tpu.dot_dimension_numbers<[1], [0], [0], [1], [0, 0, 1, 1], [], []>} : vector<8x128xbf16>, vector<128x256xbf16>, vector<8x256xf32> -> vector<8x256xf32>
    %184 = arith.addf %163, %183 : vector<8x256xf32>
    %c0_83 = arith.constant 0 : index
    %c0_84 = arith.constant 0 : index
    %c0_85 = arith.constant 0 : index
    %185 = vector.load %arg16[%c0_83, %c0_84, %c0_85] : memref<1x1x256xf32, #tpu.memory_space<vmem>>, vector<1x1x256xf32>
    %186 = vector.shape_cast %185 : vector<1x1x256xf32> to vector<1x256xf32>
    %187 = vector.broadcast %186 : vector<1x256xf32> to vector<8x256xf32>
    %188 = arith.addf %184, %187 : vector<8x256xf32>
    %189 = vector.extract_strided_slice %11 {offsets = [2, 0], sizes = [1, 256], strides = [1, 1]} : vector<3x256xf32> to vector<1x256xf32>
    %190 = vector.broadcast %189 : vector<1x256xf32> to vector<8x256xf32>
    %191 = arith.mulf %190, %188 : vector<8x256xf32>
    %192 = arith.addf %108, %191 : vector<8x256xf32>
    %cst_86 = arith.constant dense<0.000000e+00> : vector<8xf32>
    %193 = vector.multi_reduction <add>, %192, %cst_86 [1] : vector<8x256xf32> to vector<8xf32>
    %194 = vector.shape_cast %193 : vector<8xf32> to vector<8x1xf32>
    %cst_87 = arith.constant 2.560000e+02 : f32
    %195 = vector.broadcast %cst_87 : f32 to vector<8x1xf32>
    %196 = arith.divf %194, %195 : vector<8x1xf32>
    %197 = vector.broadcast %196 : vector<8x1xf32> to vector<8x256xf32>
    %198 = arith.subf %192, %197 : vector<8x256xf32>
    %199 = arith.mulf %198, %198 : vector<8x256xf32>
    %cst_88 = arith.constant dense<0.000000e+00> : vector<8xf32>
    %200 = vector.multi_reduction <add>, %199, %cst_88 [1] : vector<8x256xf32> to vector<8xf32>
    %201 = vector.shape_cast %200 : vector<8xf32> to vector<8x1xf32>
    %cst_89 = arith.constant 2.560000e+02 : f32
    %202 = vector.broadcast %cst_89 : f32 to vector<8x1xf32>
    %203 = arith.divf %201, %202 : vector<8x1xf32>
    %204 = vector.broadcast %196 : vector<8x1xf32> to vector<8x256xf32>
    %205 = arith.subf %192, %204 : vector<8x256xf32>
    %cst_90 = arith.constant 9.99999997E-7 : f32
    %206 = vector.broadcast %cst_90 : f32 to vector<8x1xf32>
    %207 = arith.addf %203, %206 : vector<8x1xf32>
    %208 = math.rsqrt %207 : vector<8x1xf32>
    %209 = vector.broadcast %208 : vector<8x1xf32> to vector<8x256xf32>
    %210 = arith.mulf %205, %209 : vector<8x256xf32>
    %211 = vector.extract_strided_slice %8 {offsets = [3, 0], sizes = [1, 256], strides = [1, 1]} : vector<6x256xf32> to vector<1x256xf32>
    %212 = vector.extract_strided_slice %8 {offsets = [4, 0], sizes = [1, 256], strides = [1, 1]} : vector<6x256xf32> to vector<1x256xf32>
    %cst_91 = arith.constant 1.000000e+00 : f32
    %213 = vector.broadcast %cst_91 : f32 to vector<1x256xf32>
    %214 = arith.addf %213, %212 : vector<1x256xf32>
    %215 = vector.broadcast %214 : vector<1x256xf32> to vector<8x256xf32>
    %216 = arith.mulf %210, %215 : vector<8x256xf32>
    %217 = vector.broadcast %211 : vector<1x256xf32> to vector<8x256xf32>
    %218 = arith.addf %216, %217 : vector<8x256xf32>
    %219 = arith.truncf %218 : vector<8x256xf32> to vector<8x256xbf16>
    %c0_92 = arith.constant 0 : index
    %c0_93 = arith.constant 0 : index
    %c0_94 = arith.constant 0 : index
    %220 = vector.load %arg17[%c0_92, %c0_93, %c0_94] : memref<1x256x1024xbf16, #tpu.memory_space<vmem>>, vector<1x256x1024xbf16>
    %221 = vector.shape_cast %220 : vector<1x256x1024xbf16> to vector<256x1024xbf16>
    %cst_95 = arith.constant dense<0.000000e+00> : vector<8x1024xf32>
    %222 = tpu.matmul %219, %221, %cst_95 {dimension_numbers = #tpu.dot_dimension_numbers<[1], [0], [0], [1], [0, 0, 1, 1], [], []>} : vector<8x256xbf16>, vector<256x1024xbf16>, vector<8x1024xf32> -> vector<8x1024xf32>
    %c0_96 = arith.constant 0 : index
    %c0_97 = arith.constant 0 : index
    %c0_98 = arith.constant 0 : index
    %223 = vector.load %arg18[%c0_96, %c0_97, %c0_98] : memref<1x1x1024xf32, #tpu.memory_space<vmem>>, vector<1x1x1024xf32>
    %224 = vector.shape_cast %223 : vector<1x1x1024xf32> to vector<1x1024xf32>
    %225 = vector.broadcast %224 : vector<1x1024xf32> to vector<8x1024xf32>
    %226 = arith.addf %222, %225 : vector<8x1024xf32>
    %227 = arith.mulf %226, %226 : vector<8x1024xf32>
    %228 = arith.mulf %226, %227 : vector<8x1024xf32>
    %cst_99 = arith.constant 4.471500e-02 : f32
    %229 = vector.broadcast %cst_99 : f32 to vector<8x1024xf32>
    %230 = arith.mulf %229, %228 : vector<8x1024xf32>
    %231 = arith.addf %226, %230 : vector<8x1024xf32>
    %cst_100 = arith.constant 0.797884583 : f32
    %232 = vector.broadcast %cst_100 : f32 to vector<8x1024xf32>
    %233 = arith.mulf %232, %231 : vector<8x1024xf32>
    %234 = math.tanh %233 : vector<8x1024xf32>
    %cst_101 = arith.constant 1.000000e+00 : f32
    %235 = vector.broadcast %cst_101 : f32 to vector<8x1024xf32>
    %236 = arith.addf %235, %234 : vector<8x1024xf32>
    %cst_102 = arith.constant 5.000000e-01 : f32
    %237 = vector.broadcast %cst_102 : f32 to vector<8x1024xf32>
    %238 = arith.mulf %237, %236 : vector<8x1024xf32>
    %239 = arith.mulf %226, %238 : vector<8x1024xf32>
    %240 = arith.truncf %239 : vector<8x1024xf32> to vector<8x1024xbf16>
    %c0_103 = arith.constant 0 : index
    %c0_104 = arith.constant 0 : index
    %c0_105 = arith.constant 0 : index
    %241 = vector.load %arg19[%c0_103, %c0_104, %c0_105] : memref<1x1024x256xbf16, #tpu.memory_space<vmem>>, vector<1x1024x256xbf16>
    %242 = vector.shape_cast %241 : vector<1x1024x256xbf16> to vector<1024x256xbf16>
    %cst_106 = arith.constant dense<0.000000e+00> : vector<8x256xf32>
    %243 = tpu.matmul %240, %242, %cst_106 {dimension_numbers = #tpu.dot_dimension_numbers<[1], [0], [0], [1], [0, 0, 1, 1], [], []>} : vector<8x1024xbf16>, vector<1024x256xbf16>, vector<8x256xf32> -> vector<8x256xf32>
    %c0_107 = arith.constant 0 : index
    %c0_108 = arith.constant 0 : index
    %c0_109 = arith.constant 0 : index
    %244 = vector.load %arg20[%c0_107, %c0_108, %c0_109] : memref<1x1x256xf32, #tpu.memory_space<vmem>>, vector<1x1x256xf32>
    %245 = vector.shape_cast %244 : vector<1x1x256xf32> to vector<1x256xf32>
    %246 = vector.broadcast %245 : vector<1x256xf32> to vector<8x256xf32>
    %247 = arith.addf %243, %246 : vector<8x256xf32>
    %248 = vector.extract_strided_slice %8 {offsets = [5, 0], sizes = [1, 256], strides = [1, 1]} : vector<6x256xf32> to vector<1x256xf32>
    %249 = vector.broadcast %248 : vector<1x256xf32> to vector<8x256xf32>
    %250 = arith.mulf %249, %247 : vector<8x256xf32>
    %251 = arith.addf %192, %250 : vector<8x256xf32>
    %c0_110 = arith.constant 0 : index
    %c0_111 = arith.constant 0 : index
    %252 = vector.load %arg24[%c0_110, %c0_111] : memref<8x256xf32, #tpu.memory_space<vmem>>, vector<8x256xf32>
    tpu.vector_store %arg24[%c0_110, %c0_111], %251 {strides = array<i32>} : memref<8x256xf32, #tpu.memory_space<vmem>>, vector<8x256xf32>,
    %c1_i32 = arith.constant 1 : i32
    %253 = arith.cmpi eq, %arg1, %c1_i32 : i32
    %254 = arith.extui %253 : i1 to i32
    %c0_i32_112 = arith.constant 0 : i32
    %255 = arith.cmpi ne, %254, %c0_i32_112 : i32
    scf.if %255 {
      %c0_113 = arith.constant 0 : index
      %c0_114 = arith.constant 0 : index
      %c0_115 = arith.constant 0 : index
      %256 = vector.load %arg6[%c0_113, %c0_114, %c0_115] : memref<1x2x256xbf16, #tpu.memory_space<vmem>>, vector<1x2x256xbf16>
      %257 = vector.shape_cast %256 : vector<1x2x256xbf16> to vector<2x256xbf16>
      %258 = arith.extf %257 : vector<2x256xbf16> to vector<2x256xf32>
      %cst_116 = arith.constant dense<0.000000e+00> : vector<8xf32>
      %259 = vector.multi_reduction <add>, %251, %cst_116 [1] : vector<8x256xf32> to vector<8xf32>
      %260 = vector.shape_cast %259 : vector<8xf32> to vector<8x1xf32>
      %cst_117 = arith.constant 2.560000e+02 : f32
      %261 = vector.broadcast %cst_117 : f32 to vector<8x1xf32>
      %262 = arith.divf %260, %261 : vector<8x1xf32>
      %263 = vector.broadcast %262 : vector<8x1xf32> to vector<8x256xf32>
      %264 = arith.subf %251, %263 : vector<8x256xf32>
      %265 = arith.mulf %264, %264 : vector<8x256xf32>
      %cst_118 = arith.constant dense<0.000000e+00> : vector<8xf32>
      %266 = vector.multi_reduction <add>, %265, %cst_118 [1] : vector<8x256xf32> to vector<8xf32>
      %267 = vector.shape_cast %266 : vector<8xf32> to vector<8x1xf32>
      %cst_119 = arith.constant 2.560000e+02 : f32
      %268 = vector.broadcast %cst_119 : f32 to vector<8x1xf32>
      %269 = arith.divf %267, %268 : vector<8x1xf32>
      %270 = vector.broadcast %262 : vector<8x1xf32> to vector<8x256xf32>
      %271 = arith.subf %251, %270 : vector<8x256xf32>
      %cst_120 = arith.constant 9.99999997E-7 : f32
      %272 = vector.broadcast %cst_120 : f32 to vector<8x1xf32>
      %273 = arith.addf %269, %272 : vector<8x1xf32>
      %274 = math.rsqrt %273 : vector<8x1xf32>
      %275 = vector.broadcast %274 : vector<8x1xf32> to vector<8x256xf32>
      %276 = arith.mulf %271, %275 : vector<8x256xf32>
      %277 = vector.extract_strided_slice %258 {offsets = [0, 0], sizes = [1, 256], strides = [1, 1]} : vector<2x256xf32> to vector<1x256xf32>
      %278 = vector.extract_strided_slice %258 {offsets = [1, 0], sizes = [1, 256], strides = [1, 1]} : vector<2x256xf32> to vector<1x256xf32>
      %cst_121 = arith.constant 1.000000e+00 : f32
      %279 = vector.broadcast %cst_121 : f32 to vector<1x256xf32>
      %280 = arith.addf %279, %278 : vector<1x256xf32>
      %281 = vector.broadcast %280 : vector<1x256xf32> to vector<8x256xf32>
      %282 = arith.mulf %276, %281 : vector<8x256xf32>
      %283 = vector.broadcast %277 : vector<1x256xf32> to vector<8x256xf32>
      %284 = arith.addf %282, %283 : vector<8x256xf32>
      %285 = arith.truncf %284 : vector<8x256xf32> to vector<8x256xbf16>
      %c0_122 = arith.constant 0 : index
      %c0_123 = arith.constant 0 : index
      %286 = vector.load %arg21[%c0_122, %c0_123] : memref<256x128xbf16, #tpu.memory_space<vmem>>, vector<256x128xbf16>
      %cst_124 = arith.constant dense<0.000000e+00> : vector<8x128xf32>
      %287 = tpu.matmul %285, %286, %cst_124 {dimension_numbers = #tpu.dot_dimension_numbers<[1], [0], [0], [1], [0, 0, 1, 1], [], []>} : vector<8x256xbf16>, vector<256x128xbf16>, vector<8x128xf32> -> vector<8x128xf32>
      %c0_125 = arith.constant 0 : index
      %c0_126 = arith.constant 0 : index
      %288 = vector.load %arg22[%c0_125, %c0_126] : memref<1x128xf32, #tpu.memory_space<vmem>>, vector<1x128xf32>
      %289 = vector.broadcast %288 : vector<1x128xf32> to vector<8x128xf32>
      %290 = arith.addf %287, %289 : vector<8x128xf32>
      %c0_127 = arith.constant 0 : index
      %c0_128 = arith.constant 0 : index
      %c0_129 = arith.constant 0 : index
      %291 = vector.load %arg23[%c0_127, %c0_128, %c0_129] : memref<1x8x128xf32, #tpu.memory_space<vmem>>, vector<1x8x128xf32>
      %292 = vector.shape_cast %291 : vector<1x8x128xf32> to vector<8x128xf32>
      %293 = vector.shape_cast %290 : vector<8x128xf32> to vector<1x8x128xf32>
      tpu.vector_store %arg23[%c0_127, %c0_128, %c0_129], %293 {strides = array<i32>} : memref<1x8x128xf32, #tpu.memory_space<vmem>>, vector<1x8x128xf32>,
    } else {
    }
    return
  }
  func.func @transform_0(%arg0: i32, %arg1: i32) -> (i32, i32, i32) {
    %c0_i32 = arith.constant 0 : i32
    %c0_i32_0 = arith.constant 0 : i32
    %c0_i32_1 = arith.constant 0 : i32
    return %arg0, %c0_i32, %c0_i32_0 : i32, i32, i32
  }
  func.func @transform_1(%arg0: i32, %arg1: i32) -> (i32, i32, i32) {
    %c0_i32 = arith.constant 0 : i32
    %c0_i32_0 = arith.constant 0 : i32
    %c0_i32_1 = arith.constant 0 : i32
    return %arg0, %c0_i32, %c0_i32_0 : i32, i32, i32
  }
  func.func @transform_2(%arg0: i32, %arg1: i32) -> (i32, i32, i32, i32) {
    %c0_i32 = arith.constant 0 : i32
    %c0_i32_0 = arith.constant 0 : i32
    %c0_i32_1 = arith.constant 0 : i32
    return %arg1, %arg0, %c0_i32, %c0_i32_0 : i32, i32, i32, i32
  }
  func.func @transform_3(%arg0: i32, %arg1: i32) -> (i32, i32, i32, i32) {
    %c0_i32 = arith.constant 0 : i32
    %c0_i32_0 = arith.constant 0 : i32
    %c0_i32_1 = arith.constant 0 : i32
    return %arg1, %arg0, %c0_i32, %c0_i32_0 : i32, i32, i32, i32
  }
  func.func @transform_4(%arg0: i32, %arg1: i32) -> (i32, i32, i32) {
    %c0_i32 = arith.constant 0 : i32
    %c0_i32_0 = arith.constant 0 : i32
    %c0_i32_1 = arith.constant 0 : i32
    return %arg0, %c0_i32, %c0_i32_0 : i32, i32, i32
  }
  func.func @transform_5(%arg0: i32, %arg1: i32) -> (i32, i32, i32) {
    %c0_i32 = arith.constant 0 : i32
    %c0_i32_0 = arith.constant 0 : i32
    %c0_i32_1 = arith.constant 0 : i32
    return %arg1, %c0_i32, %c0_i32_0 : i32, i32, i32
  }
  func.func @transform_6(%arg0: i32, %arg1: i32) -> (i32, i32, i32) {
    %c0_i32 = arith.constant 0 : i32
    %c0_i32_0 = arith.constant 0 : i32
    %c0_i32_1 = arith.constant 0 : i32
    return %arg1, %c0_i32, %c0_i32_0 : i32, i32, i32
  }
  func.func @transform_7(%arg0: i32, %arg1: i32) -> (i32, i32, i32, i32) {
    %c0_i32 = arith.constant 0 : i32
    %c0_i32_0 = arith.constant 0 : i32
    %c0_i32_1 = arith.constant 0 : i32
    %c0_i32_2 = arith.constant 0 : i32
    return %arg1, %c0_i32, %c0_i32_0, %c0_i32_1 : i32, i32, i32, i32
  }
  func.func @transform_8(%arg0: i32, %arg1: i32) -> (i32, i32, i32) {
    %c0_i32 = arith.constant 0 : i32
    %c0_i32_0 = arith.constant 0 : i32
    %c0_i32_1 = arith.constant 0 : i32
    return %arg1, %c0_i32, %c0_i32_0 : i32, i32, i32
  }
  func.func @transform_9(%arg0: i32, %arg1: i32) -> (i32, i32, i32) {
    %c0_i32 = arith.constant 0 : i32
    %c0_i32_0 = arith.constant 0 : i32
    %c0_i32_1 = arith.constant 0 : i32
    return %arg1, %c0_i32, %c0_i32_0 : i32, i32, i32
  }
  func.func @transform_10(%arg0: i32, %arg1: i32) -> (i32, i32, i32) {
    %c0_i32 = arith.constant 0 : i32
    %c0_i32_0 = arith.constant 0 : i32
    %c0_i32_1 = arith.constant 0 : i32
    return %arg1, %c0_i32, %c0_i32_0 : i32, i32, i32
  }
  func.func @transform_11(%arg0: i32, %arg1: i32) -> (i32, i32, i32) {
    %c0_i32 = arith.constant 0 : i32
    %c0_i32_0 = arith.constant 0 : i32
    %c0_i32_1 = arith.constant 0 : i32
    return %arg1, %c0_i32, %c0_i32_0 : i32, i32, i32
  }
  func.func @transform_12(%arg0: i32, %arg1: i32) -> (i32, i32, i32) {
    %c0_i32 = arith.constant 0 : i32
    %c0_i32_0 = arith.constant 0 : i32
    %c0_i32_1 = arith.constant 0 : i32
    return %arg1, %c0_i32, %c0_i32_0 : i32, i32, i32
  }
  func.func @transform_13(%arg0: i32, %arg1: i32) -> (i32, i32, i32, i32) {
    %c0_i32 = arith.constant 0 : i32
    %c0_i32_0 = arith.constant 0 : i32
    %c0_i32_1 = arith.constant 0 : i32
    %c0_i32_2 = arith.constant 0 : i32
    return %arg1, %c0_i32, %c0_i32_0, %c0_i32_1 : i32, i32, i32, i32
  }
  func.func @transform_14(%arg0: i32, %arg1: i32) -> (i32, i32, i32) {
    %c0_i32 = arith.constant 0 : i32
    %c0_i32_0 = arith.constant 0 : i32
    %c0_i32_1 = arith.constant 0 : i32
    return %arg1, %c0_i32, %c0_i32_0 : i32, i32, i32
  }
  func.func @transform_15(%arg0: i32, %arg1: i32) -> (i32, i32, i32) {
    %c0_i32 = arith.constant 0 : i32
    %c0_i32_0 = arith.constant 0 : i32
    %c0_i32_1 = arith.constant 0 : i32
    return %arg1, %c0_i32, %c0_i32_0 : i32, i32, i32
  }
  func.func @transform_16(%arg0: i32, %arg1: i32) -> (i32, i32, i32) {
    %c0_i32 = arith.constant 0 : i32
    %c0_i32_0 = arith.constant 0 : i32
    %c0_i32_1 = arith.constant 0 : i32
    return %arg1, %c0_i32, %c0_i32_0 : i32, i32, i32
  }
  func.func @transform_17(%arg0: i32, %arg1: i32) -> (i32, i32, i32) {
    %c0_i32 = arith.constant 0 : i32
    %c0_i32_0 = arith.constant 0 : i32
    %c0_i32_1 = arith.constant 0 : i32
    return %arg1, %c0_i32, %c0_i32_0 : i32, i32, i32
  }
  func.func @transform_18(%arg0: i32, %arg1: i32) -> (i32, i32, i32) {
    %c0_i32 = arith.constant 0 : i32
    %c0_i32_0 = arith.constant 0 : i32
    %c0_i32_1 = arith.constant 0 : i32
    return %arg1, %c0_i32, %c0_i32_0 : i32, i32, i32
  }
  func.func @transform_19(%arg0: i32, %arg1: i32) -> (i32, i32) {
    %c0_i32 = arith.constant 0 : i32
    %c0_i32_0 = arith.constant 0 : i32
    %c0_i32_1 = arith.constant 0 : i32
    return %c0_i32, %c0_i32_0 : i32, i32
  }
  func.func @transform_20(%arg0: i32, %arg1: i32) -> (i32, i32) {
    %c0_i32 = arith.constant 0 : i32
    %c0_i32_0 = arith.constant 0 : i32
    %c0_i32_1 = arith.constant 0 : i32
    return %c0_i32, %c0_i32_0 : i32, i32
  }
  func.func @transform_21(%arg0: i32, %arg1: i32) -> (i32, i32, i32) {
    %c0_i32 = arith.constant 0 : i32
    %c0_i32_0 = arith.constant 0 : i32
    %c0_i32_1 = arith.constant 0 : i32
    return %arg0, %c0_i32, %c0_i32_0 : i32, i32, i32
  }
}

</mosaic_0001>

<llo_original>
// kernel: transformer_forward.1
$region0: #{transformer_forward.1}
  #allocation0 [shape = 'u32[]', space=smem, size = 0x4, offset = 0x4, fixed_abs, tag = 'smem constant byte address 0x4 - core index']
  #allocation1 [shape = 'u32[144,128]{1,0:T(1,128)}', space=vmem, size = 0x12000, scoped, tag = 'internal scratch']
  #allocation2 [shape = 'f32[8,256]{1,0:T(8,128)}', space=vmem, size = 0x2000, scoped, tag = 'scratch operand']
  %s0 = inlined_call_operand.vmem [shape: f32[2,8,256], index: 0, kind: input, shape index: {}]
  %s1 = inlined_call_operand.vmem [shape: bf16[2,8,256], index: 1, kind: input, shape index: {}]
  %s2 = inlined_call_operand.vmem [shape: bf16[2,2,6,256], index: 2, kind: input, shape index: {}]
  %s3 = inlined_call_operand.vmem [shape: bf16[2,2,3,256], index: 3, kind: input, shape index: {}]
  %s4 = inlined_call_operand.vmem [shape: bf16[2,2,256], index: 4, kind: input, shape index: {}]
  %s5 = inlined_call_operand.vmem [shape: bf16[2,256,768], index: 5, kind: input, shape index: {}]
  %s6 = inlined_call_operand.vmem [shape: f32[2,1,768], index: 6, kind: input, shape index: {}]
  %s7 = inlined_call_operand.vmem [shape: bf16[2,2,128,256], index: 7, kind: input, shape index: {}]
  %s8 = inlined_call_operand.vmem [shape: f32[2,1,256], index: 8, kind: input, shape index: {}]
  %s9 = inlined_call_operand.vmem [shape: bf16[2,256,256], index: 9, kind: input, shape index: {}]
  %s10 = inlined_call_operand.vmem [shape: f32[2,1,256], index: 10, kind: input, shape index: {}]
  %s11 = inlined_call_operand.vmem [shape: bf16[2,256,512], index: 11, kind: input, shape index: {}]
  %s12 = inlined_call_operand.vmem [shape: f32[2,1,512], index: 12, kind: input, shape index: {}]
  %s13 = inlined_call_operand.vmem [shape: bf16[2,2,128,256], index: 13, kind: input, shape index: {}]
  %s14 = inlined_call_operand.vmem [shape: f32[2,1,256], index: 14, kind: input, shape index: {}]
  %s15 = inlined_call_operand.vmem [shape: bf16[2,256,1024], index: 15, kind: input, shape index: {}]
  %s16 = inlined_call_operand.vmem [shape: f32[2,1,1024], index: 16, kind: input, shape index: {}]
  %s17 = inlined_call_operand.vmem [shape: bf16[2,1024,256], index: 17, kind: input, shape index: {}]
  %s18 = inlined_call_operand.vmem [shape: f32[2,1,256], index: 18, kind: input, shape index: {}]
  %s19 = inlined_call_operand.vmem [shape: bf16[256,128], index: 19, kind: input, shape index: {}]
  %s20 = inlined_call_operand.vmem [shape: f32[1,128], index: 20, kind: input, shape index: {}]
  %s21 = inlined_call_operand.vmem [shape: f32[2,8,128], index: 21, kind: output, shape index: {}]
  %s22 = sld [smem:[#allocation0]]
  $region125: #{transformer_forward.1} parent=0
    _
  %s24 = ssub.s32 1, %s22
  %s25 = scalar_select 0, %s24, %s22
  loop: start=0, step=1, limit=6
  $region2: #{transformer_forward.1} parent=0 // loop_pre_header
    _
  $region3: #{transformer_forward.1} parent=0 // loop_header
    %s27 = sphi 0, %s31
    %p28 = scmp.ge.s32.totalorder %s27, 6
    %s34 = sphi 0, %s46
    %s35 = sphi 0, %s42
    %s36 = sphi 0, %s34
    %s37 = sphi 0, %s35
    %s38 = sphi 0, %s36
    %s39 = sphi 0, %s37
    %s49 = sphi 0, %s51
    %s52 = sphi 0, %s49
    %s53 = sphi 0, %s52
    %s69 = sphi 0, %s53
    %s75 = sphi 0, %s77
    %s78 = sphi 0, %s75
    %s79 = sphi 0, %s78
    %s95 = sphi 0, %s79
    %s103 = sphi 0, %s105
    %s106 = sphi 0, %s103
    %s107 = sphi 0, %s106
    %s123 = sphi 0, %s107
    %s131 = sphi 0, %s133
    %s134 = sphi 0, %s131
    %s135 = sphi 0, %s134
    %s151 = sphi 0, %s135
    %s157 = sphi 0, %s159
    %s160 = sphi 0, %s157
    %s161 = sphi 0, %s160
    %s177 = sphi 0, %s161
    %s183 = sphi 0, %s185
    %s186 = sphi 0, %s183
    %s187 = sphi 0, %s186
    %s203 = sphi 0, %s187
    %s209 = sphi 0, %s211
    %s212 = sphi 0, %s209
    %s213 = sphi 0, %s212
    %s229 = sphi 0, %s213
    %s235 = sphi 0, %s237
    %s238 = sphi 0, %s235
    %s239 = sphi 0, %s238
    %s255 = sphi 0, %s239
    %s261 = sphi 0, %s263
    %s264 = sphi 0, %s261
    %s265 = sphi 0, %s264
    %s281 = sphi 0, %s265
    %s287 = sphi 0, %s289
    %s290 = sphi 0, %s287
    %s291 = sphi 0, %s290
    %s307 = sphi 0, %s291
    %s313 = sphi 0, %s315
    %s316 = sphi 0, %s313
    %s317 = sphi 0, %s316
    %s333 = sphi 0, %s317
    %s339 = sphi 0, %s341
    %s342 = sphi 0, %s339
    %s343 = sphi 0, %s342
    %s359 = sphi 0, %s343
    %s365 = sphi 0, %s367
    %s368 = sphi 0, %s365
    %s369 = sphi 0, %s368
    %s385 = sphi 0, %s369
    %s391 = sphi 0, %s393
    %s394 = sphi 0, %s391
    %s395 = sphi 0, %s394
    %s411 = sphi 0, %s395
    %s417 = sphi 0, %s419
    %s420 = sphi 0, %s417
    %s421 = sphi 0, %s420
    %s437 = sphi 0, %s421
    %s443 = sphi 0, %s445
    %s446 = sphi 0, %s443
    %s447 = sphi 0, %s446
    %s463 = sphi 0, %s447
    %s469 = sphi 0, %s471
    %s472 = sphi 0, %s469
    %s473 = sphi 0, %s472
    %s489 = sphi 0, %s473
    %s495 = sphi 0, %s497
    %s498 = sphi 0, %s495
    %s499 = sphi 0, %s498
    %s515 = sphi 0, %s499
    %s521 = sphi 0, %s523
    %s524 = sphi 0, %s521
    %s525 = sphi 0, %s524
    %s541 = sphi 0, %s525
    %s545 = sphi 0, %s545
    %s547 = sphi 0, %s545
    %s548 = sphi 0, %s547
    %s562 = sphi 0, %s548
    %s566 = sphi 0, %s566
    %s568 = sphi 0, %s566
    %s569 = sphi 0, %s568
    %s583 = sphi 0, %s569
    %s589 = sphi 0, %s591
    %s592 = sphi 0, %s589
    %s593 = sphi 0, %s592
    %s609 = sphi 0, %s593
  $region4: #{transformer_forward.1} parent=0 // loop_header_branch
    %30 = sbr.rel (%p28) target = $region8
  $region5: #{transformer_forward.1} parent=0 // loop_body
    %s32 = ssub.s32 %s27, 1
    %s33 = ssub.s32 %s27, 2
    %s40 = sadd.s32 1, %s35
    %p41 = scmp.ge.s32.totalorder %s40, 2
    %s42 = scalar_select %p41, 0, %s40
    %s43 = sadd.s32 1, %s34
    %s44 = scalar_select %p41, %s43, %s34
    %p45 = scmp.ge.s32.totalorder %s44, 2
    %s46 = scalar_select %p45, 0, %s44
    %s47 = ssub.s32 %s34, %s46
    %p48 = scmp.eq.s32.totalorder %s47, 0
    %s50 = sadd.s32 %s49, 1
    %s51 = scalar_select %p48, %s49, %s50
    %p54 = pneg %p48
    %p55 = scmp.eq.s32.totalorder %s27, 3
    %p56 = por %p54, %p55
    %p57 = scmp.ne.s32.totalorder %s49, %s52
    %p58 = scmp.eq.s32.totalorder %s27, 0
    %p59 = por %p57, %p58
    %p60 = scmp.ne.s32.totalorder %s49, %s52
    %p61 = scmp.eq.s32.totalorder %s32, 3
    %p62 = por %p60, %p61
    %p63 = scmp.ne.s32.totalorder %s52, %s53
    %p64 = scmp.eq.s32.totalorder %s32, 0
    %p65 = por %p63, %p64
    %p66 = scmp.ne.s32.totalorder %s52, %s53
    %p67 = scmp.eq.s32.totalorder %s33, 3
    %p68 = por %p66, %p67
    %p70 = scmp.ne.s32.totalorder %s53, %s69
    %p71 = scmp.eq.s32.totalorder %s33, 0
    %p72 = por %p70, %p71
    %s73 = ssub.s32 %s34, %s46
    %p74 = scmp.eq.s32.totalorder %s73, 0
    %s76 = sadd.s32 %s75, 1
    %s77 = scalar_select %p74, %s75, %s76
    %p80 = pneg %p74
    %p81 = scmp.eq.s32.totalorder %s27, 3
    %p82 = por %p80, %p81
    %p83 = scmp.ne.s32.totalorder %s75, %s78
    %p84 = scmp.eq.s32.totalorder %s27, 0
    %p85 = por %p83, %p84
    %p86 = scmp.ne.s32.totalorder %s75, %s78
    %p87 = scmp.eq.s32.totalorder %s32, 3
    %p88 = por %p86, %p87
    %p89 = scmp.ne.s32.totalorder %s78, %s79
    %p90 = scmp.eq.s32.totalorder %s32, 0
    %p91 = por %p89, %p90
    %p92 = scmp.ne.s32.totalorder %s78, %s79
    %p93 = scmp.eq.s32.totalorder %s33, 3
    %p94 = por %p92, %p93
    %p96 = scmp.ne.s32.totalorder %s79, %s95
    %p97 = scmp.eq.s32.totalorder %s33, 0
    %p98 = por %p96, %p97
    %s99 = ssub.s32 %s35, %s42
    %s100 = ssub.s32 %s34, %s46
    %s101 = sor.u32 %s99, %s100
    %p102 = scmp.eq.s32.totalorder %s101, 0
    %s104 = sadd.s32 %s103, 1
    %s105 = scalar_select %p102, %s103, %s104
    %p108 = pneg %p102
    %p109 = scmp.eq.s32.totalorder %s27, 3
    %p110 = por %p108, %p109
    %p111 = scmp.ne.s32.totalorder %s103, %s106
    %p112 = scmp.eq.s32.totalorder %s27, 0
    %p113 = por %p111, %p112
    %p114 = scmp.ne.s32.totalorder %s103, %s106
    %p115 = scmp.eq.s32.totalorder %s32, 3
    %p116 = por %p114, %p115
    %p117 = scmp.ne.s32.totalorder %s106, %s107
    %p118 = scmp.eq.s32.totalorder %s32, 0
    %p119 = por %p117, %p118
    %p120 = scmp.ne.s32.totalorder %s106, %s107
    %p121 = scmp.eq.s32.totalorder %s33, 3
    %p122 = por %p120, %p121
    %p124 = scmp.ne.s32.totalorder %s107, %s123
    %p125 = scmp.eq.s32.totalorder %s33, 0
    %p126 = por %p124, %p125
    %s127 = ssub.s32 %s35, %s42
    %s128 = ssub.s32 %s34, %s46
    %s129 = sor.u32 %s127, %s128
    %p130 = scmp.eq.s32.totalorder %s129, 0
    %s132 = sadd.s32 %s131, 1
    %s133 = scalar_select %p130, %s131, %s132
    %p136 = pneg %p130
    %p137 = scmp.eq.s32.totalorder %s27, 3
    %p138 = por %p136, %p137
    %p139 = scmp.ne.s32.totalorder %s131, %s134
    %p140 = scmp.eq.s32.totalorder %s27, 0
    %p141 = por %p139, %p140
    %p142 = scmp.ne.s32.totalorder %s131, %s134
    %p143 = scmp.eq.s32.totalorder %s32, 3
    %p144 = por %p142, %p143
    %p145 = scmp.ne.s32.totalorder %s134, %s135
    %p146 = scmp.eq.s32.totalorder %s32, 0
    %p147 = por %p145, %p146
    %p148 = scmp.ne.s32.totalorder %s134, %s135
    %p149 = scmp.eq.s32.totalorder %s33, 3
    %p150 = por %p148, %p149
    %p152 = scmp.ne.s32.totalorder %s135, %s151
    %p153 = scmp.eq.s32.totalorder %s33, 0
    %p154 = por %p152, %p153
    %s155 = ssub.s32 %s34, %s46
    %p156 = scmp.eq.s32.totalorder %s155, 0
    %s158 = sadd.s32 %s157, 1
    %s159 = scalar_select %p156, %s157, %s158
    %p162 = pneg %p156
    %p163 = scmp.eq.s32.totalorder %s27, 3
    %p164 = por %p162, %p163
    %p165 = scmp.ne.s32.totalorder %s157, %s160
    %p166 = scmp.eq.s32.totalorder %s27, 0
    %p167 = por %p165, %p166
    %p168 = scmp.ne.s32.totalorder %s157, %s160
    %p169 = scmp.eq.s32.totalorder %s32, 3
    %p170 = por %p168, %p169
    %p171 = scmp.ne.s32.totalorder %s160, %s161
    %p172 = scmp.eq.s32.totalorder %s32, 0
    %p173 = por %p171, %p172
    %p174 = scmp.ne.s32.totalorder %s160, %s161
    %p175 = scmp.eq.s32.totalorder %s33, 3
    %p176 = por %p174, %p175
    %p178 = scmp.ne.s32.totalorder %s161, %s177
    %p179 = scmp.eq.s32.totalorder %s33, 0
    %p180 = por %p178, %p179
    %s181 = ssub.s32 %s35, %s42
    %p182 = scmp.eq.s32.totalorder %s181, 0
    %s184 = sadd.s32 %s183, 1
    %s185 = scalar_select %p182, %s183, %s184
    %p188 = pneg %p182
    %p189 = scmp.eq.s32.totalorder %s27, 3
    %p190 = por %p188, %p189
    %p191 = scmp.ne.s32.totalorder %s183, %s186
    %p192 = scmp.eq.s32.totalorder %s27, 0
    %p193 = por %p191, %p192
    %p194 = scmp.ne.s32.totalorder %s183, %s186
    %p195 = scmp.eq.s32.totalorder %s32, 3
    %p196 = por %p194, %p195
    %p197 = scmp.ne.s32.totalorder %s186, %s187
    %p198 = scmp.eq.s32.totalorder %s32, 0
    %p199 = por %p197, %p198
    %p200 = scmp.ne.s32.totalorder %s186, %s187
    %p201 = scmp.eq.s32.totalorder %s33, 3
    %p202 = por %p200, %p201
    %p204 = scmp.ne.s32.totalorder %s187, %s203
    %p205 = scmp.eq.s32.totalorder %s33, 0
    %p206 = por %p204, %p205
    %s207 = ssub.s32 %s35, %s42
    %p208 = scmp.eq.s32.totalorder %s207, 0
    %s210 = sadd.s32 %s209, 1
    %s211 = scalar_select %p208, %s209, %s210
    %p214 = pneg %p208
    %p215 = scmp.eq.s32.totalorder %s27, 3
    %p216 = por %p214, %p215
    %p217 = scmp.ne.s32.totalorder %s209, %s212
    %p218 = scmp.eq.s32.totalorder %s27, 0
    %p219 = por %p217, %p218
    %p220 = scmp.ne.s32.totalorder %s209, %s212
    %p221 = scmp.eq.s32.totalorder %s32, 3
    %p222 = por %p220, %p221
    %p223 = scmp.ne.s32.totalorder %s212, %s213
    %p224 = scmp.eq.s32.totalorder %s32, 0
    %p225 = por %p223, %p224
    %p226 = scmp.ne.s32.totalorder %s212, %s213
    %p227 = scmp.eq.s32.totalorder %s33, 3
    %p228 = por %p226, %p227
    %p230 = scmp.ne.s32.totalorder %s213, %s229
    %p231 = scmp.eq.s32.totalorder %s33, 0
    %p232 = por %p230, %p231
    %s233 = ssub.s32 %s35, %s42
    %p234 = scmp.eq.s32.totalorder %s233, 0
    %s236 = sadd.s32 %s235, 1
    %s237 = scalar_select %p234, %s235, %s236
    %p240 = pneg %p234
    %p241 = scmp.eq.s32.totalorder %s27, 3
    %p242 = por %p240, %p241
    %p243 = scmp.ne.s32.totalorder %s235, %s238
    %p244 = scmp.eq.s32.totalorder %s27, 0
    %p245 = por %p243, %p244
    %p246 = scmp.ne.s32.totalorder %s235, %s238
    %p247 = scmp.eq.s32.totalorder %s32, 3
    %p248 = por %p246, %p247
    %p249 = scmp.ne.s32.totalorder %s238, %s239
    %p250 = scmp.eq.s32.totalorder %s32, 0
    %p251 = por %p249, %p250
    %p252 = scmp.ne.s32.totalorder %s238, %s239
    %p253 = scmp.eq.s32.totalorder %s33, 3
    %p254 = por %p252, %p253
    %p256 = scmp.ne.s32.totalorder %s239, %s255
    %p257 = scmp.eq.s32.totalorder %s33, 0
    %p258 = por %p256, %p257
    %s259 = ssub.s32 %s35, %s42
    %p260 = scmp.eq.s32.totalorder %s259, 0
    %s262 = sadd.s32 %s261, 1
    %s263 = scalar_select %p260, %s261, %s262
    %p266 = pneg %p260
    %p267 = scmp.eq.s32.totalorder %s27, 3
    %p268 = por %p266, %p267
    %p269 = scmp.ne.s32.totalorder %s261, %s264
    %p270 = scmp.eq.s32.totalorder %s27, 0
    %p271 = por %p269, %p270
    %p272 = scmp.ne.s32.totalorder %s261, %s264
    %p273 = scmp.eq.s32.totalorder %s32, 3
    %p274 = por %p272, %p273
    %p275 = scmp.ne.s32.totalorder %s264, %s265
    %p276 = scmp.eq.s32.totalorder %s32, 0
    %p277 = por %p275, %p276
    %p278 = scmp.ne.s32.totalorder %s264, %s265
    %p279 = scmp.eq.s32.totalorder %s33, 3
    %p280 = por %p278, %p279
    %p282 = scmp.ne.s32.totalorder %s265, %s281
    %p283 = scmp.eq.s32.totalorder %s33, 0
    %p284 = por %p282, %p283
    %s285 = ssub.s32 %s35, %s42
    %p286 = scmp.eq.s32.totalorder %s285, 0
    %s288 = sadd.s32 %s287, 1
    %s289 = scalar_select %p286, %s287, %s288
    %p292 = pneg %p286
    %p293 = scmp.eq.s32.totalorder %s27, 3
    %p294 = por %p292, %p293
    %p295 = scmp.ne.s32.totalorder %s287, %s290
    %p296 = scmp.eq.s32.totalorder %s27, 0
    %p297 = por %p295, %p296
    %p298 = scmp.ne.s32.totalorder %s287, %s290
    %p299 = scmp.eq.s32.totalorder %s32, 3
    %p300 = por %p298, %p299
    %p301 = scmp.ne.s32.totalorder %s290, %s291
    %p302 = scmp.eq.s32.totalorder %s32, 0
    %p303 = por %p301, %p302
    %p304 = scmp.ne.s32.totalorder %s290, %s291
    %p305 = scmp.eq.s32.totalorder %s33, 3
    %p306 = por %p304, %p305
    %p308 = scmp.ne.s32.totalorder %s291, %s307
    %p309 = scmp.eq.s32.totalorder %s33, 0
    %p310 = por %p308, %p309
    %s311 = ssub.s32 %s35, %s42
    %p312 = scmp.eq.s32.totalorder %s311, 0
    %s314 = sadd.s32 %s313, 1
    %s315 = scalar_select %p312, %s313, %s314
    %p318 = pneg %p312
    %p319 = scmp.eq.s32.totalorder %s27, 3
    %p320 = por %p318, %p319
    %p321 = scmp.ne.s32.totalorder %s313, %s316
    %p322 = scmp.eq.s32.totalorder %s27, 0
    %p323 = por %p321, %p322
    %p324 = scmp.ne.s32.totalorder %s313, %s316
    %p325 = scmp.eq.s32.totalorder %s32, 3
    %p326 = por %p324, %p325
    %p327 = scmp.ne.s32.totalorder %s316, %s317
    %p328 = scmp.eq.s32.totalorder %s32, 0
    %p329 = por %p327, %p328
    %p330 = scmp.ne.s32.totalorder %s316, %s317
    %p331 = scmp.eq.s32.totalorder %s33, 3
    %p332 = por %p330, %p331
    %p334 = scmp.ne.s32.totalorder %s317, %s333
    %p335 = scmp.eq.s32.totalorder %s33, 0
    %p336 = por %p334, %p335
    %s337 = ssub.s32 %s35, %s42
    %p338 = scmp.eq.s32.totalorder %s337, 0
    %s340 = sadd.s32 %s339, 1
    %s341 = scalar_select %p338, %s339, %s340
    %p344 = pneg %p338
    %p345 = scmp.eq.s32.totalorder %s27, 3
    %p346 = por %p344, %p345
    %p347 = scmp.ne.s32.totalorder %s339, %s342
    %p348 = scmp.eq.s32.totalorder %s27, 0
    %p349 = por %p347, %p348
    %p350 = scmp.ne.s32.totalorder %s339, %s342
    %p351 = scmp.eq.s32.totalorder %s32, 3
    %p352 = por %p350, %p351
    %p353 = scmp.ne.s32.totalorder %s342, %s343
    %p354 = scmp.eq.s32.totalorder %s32, 0
    %p355 = por %p353, %p354
    %p356 = scmp.ne.s32.totalorder %s342, %s343
    %p357 = scmp.eq.s32.totalorder %s33, 3
    %p358 = por %p356, %p357
    %p360 = scmp.ne.s32.totalorder %s343, %s359
    %p361 = scmp.eq.s32.totalorder %s33, 0
    %p362 = por %p360, %p361
    %s363 = ssub.s32 %s35, %s42
    %p364 = scmp.eq.s32.totalorder %s363, 0
    %s366 = sadd.s32 %s365, 1
    %s367 = scalar_select %p364, %s365, %s366
    %p370 = pneg %p364
    %p371 = scmp.eq.s32.totalorder %s27, 3
    %p372 = por %p370, %p371
    %p373 = scmp.ne.s32.totalorder %s365, %s368
    %p374 = scmp.eq.s32.totalorder %s27, 0
    %p375 = por %p373, %p374
    %p376 = scmp.ne.s32.totalorder %s365, %s368
    %p377 = scmp.eq.s32.totalorder %s32, 3
    %p378 = por %p376, %p377
    %p379 = scmp.ne.s32.totalorder %s368, %s369
    %p380 = scmp.eq.s32.totalorder %s32, 0
    %p381 = por %p379, %p380
    %p382 = scmp.ne.s32.totalorder %s368, %s369
    %p383 = scmp.eq.s32.totalorder %s33, 3
    %p384 = por %p382, %p383
    %p386 = scmp.ne.s32.totalorder %s369, %s385
    %p387 = scmp.eq.s32.totalorder %s33, 0
    %p388 = por %p386, %p387
    %s389 = ssub.s32 %s35, %s42
    %p390 = scmp.eq.s32.totalorder %s389, 0
    %s392 = sadd.s32 %s391, 1
    %s393 = scalar_select %p390, %s391, %s392
    %p396 = pneg %p390
    %p397 = scmp.eq.s32.totalorder %s27, 3
    %p398 = por %p396, %p397
    %p399 = scmp.ne.s32.totalorder %s391, %s394
    %p400 = scmp.eq.s32.totalorder %s27, 0
    %p401 = por %p399, %p400
    %p402 = scmp.ne.s32.totalorder %s391, %s394
    %p403 = scmp.eq.s32.totalorder %s32, 3
    %p404 = por %p402, %p403
    %p405 = scmp.ne.s32.totalorder %s394, %s395
    %p406 = scmp.eq.s32.totalorder %s32, 0
    %p407 = por %p405, %p406
    %p408 = scmp.ne.s32.totalorder %s394, %s395
    %p409 = scmp.eq.s32.totalorder %s33, 3
    %p410 = por %p408, %p409
    %p412 = scmp.ne.s32.totalorder %s395, %s411
    %p413 = scmp.eq.s32.totalorder %s33, 0
    %p414 = por %p412, %p413
    %s415 = ssub.s32 %s35, %s42
    %p416 = scmp.eq.s32.totalorder %s415, 0
    %s418 = sadd.s32 %s417, 1
    %s419 = scalar_select %p416, %s417, %s418
    %p422 = pneg %p416
    %p423 = scmp.eq.s32.totalorder %s27, 3
    %p424 = por %p422, %p423
    %p425 = scmp.ne.s32.totalorder %s417, %s420
    %p426 = scmp.eq.s32.totalorder %s27, 0
    %p427 = por %p425, %p426
    %p428 = scmp.ne.s32.totalorder %s417, %s420
    %p429 = scmp.eq.s32.totalorder %s32, 3
    %p430 = por %p428, %p429
    %p431 = scmp.ne.s32.totalorder %s420, %s421
    %p432 = scmp.eq.s32.totalorder %s32, 0
    %p433 = por %p431, %p432
    %p434 = scmp.ne.s32.totalorder %s420, %s421
    %p435 = scmp.eq.s32.totalorder %s33, 3
    %p436 = por %p434, %p435
    %p438 = scmp.ne.s32.totalorder %s421, %s437
    %p439 = scmp.eq.s32.totalorder %s33, 0
    %p440 = por %p438, %p439
    %s441 = ssub.s32 %s35, %s42
    %p442 = scmp.eq.s32.totalorder %s441, 0
    %s444 = sadd.s32 %s443, 1
    %s445 = scalar_select %p442, %s443, %s444
    %p448 = pneg %p442
    %p449 = scmp.eq.s32.totalorder %s27, 3
    %p450 = por %p448, %p449
    %p451 = scmp.ne.s32.totalorder %s443, %s446
    %p452 = scmp.eq.s32.totalorder %s27, 0
    %p453 = por %p451, %p452
    %p454 = scmp.ne.s32.totalorder %s443, %s446
    %p455 = scmp.eq.s32.totalorder %s32, 3
    %p456 = por %p454, %p455
    %p457 = scmp.ne.s32.totalorder %s446, %s447
    %p458 = scmp.eq.s32.totalorder %s32, 0
    %p459 = por %p457, %p458
    %p460 = scmp.ne.s32.totalorder %s446, %s447
    %p461 = scmp.eq.s32.totalorder %s33, 3
    %p462 = por %p460, %p461
    %p464 = scmp.ne.s32.totalorder %s447, %s463
    %p465 = scmp.eq.s32.totalorder %s33, 0
    %p466 = por %p464, %p465
    %s467 = ssub.s32 %s35, %s42
    %p468 = scmp.eq.s32.totalorder %s467, 0
    %s470 = sadd.s32 %s469, 1
    %s471 = scalar_select %p468, %s469, %s470
    %p474 = pneg %p468
    %p475 = scmp.eq.s32.totalorder %s27, 3
    %p476 = por %p474, %p475
    %p477 = scmp.ne.s32.totalorder %s469, %s472
    %p478 = scmp.eq.s32.totalorder %s27, 0
    %p479 = por %p477, %p478
    %p480 = scmp.ne.s32.totalorder %s469, %s472
    %p481 = scmp.eq.s32.totalorder %s32, 3
    %p482 = por %p480, %p481
    %p483 = scmp.ne.s32.totalorder %s472, %s473
    %p484 = scmp.eq.s32.totalorder %s32, 0
    %p485 = por %p483, %p484
    %p486 = scmp.ne.s32.totalorder %s472, %s473
    %p487 = scmp.eq.s32.totalorder %s33, 3
    %p488 = por %p486, %p487
    %p490 = scmp.ne.s32.totalorder %s473, %s489
    %p491 = scmp.eq.s32.totalorder %s33, 0
    %p492 = por %p490, %p491
    %s493 = ssub.s32 %s35, %s42
    %p494 = scmp.eq.s32.totalorder %s493, 0
    %s496 = sadd.s32 %s495, 1
    %s497 = scalar_select %p494, %s495, %s496
    %p500 = pneg %p494
    %p501 = scmp.eq.s32.totalorder %s27, 3
    %p502 = por %p500, %p501
    %p503 = scmp.ne.s32.totalorder %s495, %s498
    %p504 = scmp.eq.s32.totalorder %s27, 0
    %p505 = por %p503, %p504
    %p506 = scmp.ne.s32.totalorder %s495, %s498
    %p507 = scmp.eq.s32.totalorder %s32, 3
    %p508 = por %p506, %p507
    %p509 = scmp.ne.s32.totalorder %s498, %s499
    %p510 = scmp.eq.s32.totalorder %s32, 0
    %p511 = por %p509, %p510
    %p512 = scmp.ne.s32.totalorder %s498, %s499
    %p513 = scmp.eq.s32.totalorder %s33, 3
    %p514 = por %p512, %p513
    %p516 = scmp.ne.s32.totalorder %s499, %s515
    %p517 = scmp.eq.s32.totalorder %s33, 0
    %p518 = por %p516, %p517
    %s519 = ssub.s32 %s35, %s42
    %p520 = scmp.eq.s32.totalorder %s519, 0
    %s522 = sadd.s32 %s521, 1
    %s523 = scalar_select %p520, %s521, %s522
    %p526 = pneg %p520
    %p527 = scmp.eq.s32.totalorder %s27, 3
    %p528 = por %p526, %p527
    %p529 = scmp.ne.s32.totalorder %s521, %s524
    %p530 = scmp.eq.s32.totalorder %s27, 0
    %p531 = por %p529, %p530
    %p532 = scmp.ne.s32.totalorder %s521, %s524
    %p533 = scmp.eq.s32.totalorder %s32, 3
    %p534 = por %p532, %p533
    %p535 = scmp.ne.s32.totalorder %s524, %s525
    %p536 = scmp.eq.s32.totalorder %s32, 0
    %p537 = por %p535, %p536
    %p538 = scmp.ne.s32.totalorder %s524, %s525
    %p539 = scmp.eq.s32.totalorder %s33, 3
    %p540 = por %p538, %p539
    %p542 = scmp.ne.s32.totalorder %s525, %s541
    %p543 = scmp.eq.s32.totalorder %s33, 0
    %p544 = por %p542, %p543
    %s546 = sadd.s32 %s545, 1
    %p549 = scmp.eq.s32.totalorder %s27, 3
    %p550 = scmp.ne.s32.totalorder %s545, %s547
    %p551 = scmp.eq.s32.totalorder %s27, 0
    %p552 = por %p550, %p551
    %p553 = scmp.ne.s32.totalorder %s545, %s547
    %p554 = scmp.eq.s32.totalorder %s32, 3
    %p555 = por %p553, %p554
    %p556 = scmp.ne.s32.totalorder %s547, %s548
    %p557 = scmp.eq.s32.totalorder %s32, 0
    %p558 = por %p556, %p557
    %p559 = scmp.ne.s32.totalorder %s547, %s548
    %p560 = scmp.eq.s32.totalorder %s33, 3
    %p561 = por %p559, %p560
    %p563 = scmp.ne.s32.totalorder %s548, %s562
    %p564 = scmp.eq.s32.totalorder %s33, 0
    %p565 = por %p563, %p564
    %s567 = sadd.s32 %s566, 1
    %p570 = scmp.eq.s32.totalorder %s27, 3
    %p571 = scmp.ne.s32.totalorder %s566, %s568
    %p572 = scmp.eq.s32.totalorder %s27, 0
    %p573 = por %p571, %p572
    %p574 = scmp.ne.s32.totalorder %s566, %s568
    %p575 = scmp.eq.s32.totalorder %s32, 3
    %p576 = por %p574, %p575
    %p577 = scmp.ne.s32.totalorder %s568, %s569
    %p578 = scmp.eq.s32.totalorder %s32, 0
    %p579 = por %p577, %p578
    %p580 = scmp.ne.s32.totalorder %s568, %s569
    %p581 = scmp.eq.s32.totalorder %s33, 3
    %p582 = por %p580, %p581
    %p584 = scmp.ne.s32.totalorder %s569, %s583
    %p585 = scmp.eq.s32.totalorder %s33, 0
    %p586 = por %p584, %p585
    %s587 = ssub.s32 %s34, %s46
    %p588 = scmp.eq.s32.totalorder %s587, 0
    %s590 = sadd.s32 %s589, 1
    %s591 = scalar_select %p588, %s589, %s590
    %p594 = pneg %p588
    %p595 = scmp.eq.s32.totalorder %s27, 3
    %p596 = por %p594, %p595
    %p597 = scmp.ne.s32.totalorder %s589, %s592
    %p598 = scmp.eq.s32.totalorder %s27, 0
    %p599 = por %p597, %p598
    %p600 = scmp.ne.s32.totalorder %s589, %s592
    %p601 = scmp.eq.s32.totalorder %s32, 3
    %p602 = por %p600, %p601
    %p603 = scmp.ne.s32.totalorder %s592, %s593
    %p604 = scmp.eq.s32.totalorder %s32, 0
    %p605 = por %p603, %p604
    %p606 = scmp.ne.s32.totalorder %s592, %s593
    %p607 = scmp.eq.s32.totalorder %s33, 3
    %p608 = por %p606, %p607
    %p610 = scmp.ne.s32.totalorder %s593, %s609
    %p611 = scmp.eq.s32.totalorder %s33, 0
    %p612 = por %p610, %p611
    %p613 = scmp.le.s32.totalorder 1, %s27
    %p614 = scmp.lt.s32.totalorder %s27, 5
    %p615 = pnand %p613, %p614
    %p616 = pneg %p615
    // Predicated region
    $region9: #{transformer_forward.1} parent=5 // pred_check
      _
    $region10: #{transformer_forward.1} parent=5 // pred_check_branch
      %618 = sbr.rel (%p615) target = $region12
    $region11: #{transformer_forward.1} parent=5 // pred_region
      %s619 = ssub.s32 %s27, 1
      // Predicated region
      $region13: #{transformer_forward.1} parent=11 // pred_check
        %p620 = pneg %p558
      $region14: #{transformer_forward.1} parent=11 // pred_check_branch
        %622 = sbr.rel (%p620) target = $region16
      $region15: #{transformer_forward.1} parent=11 // pred_region
        _
      $region16: #{transformer_forward.1} parent=11 // pred_fallthru
        _
      // Predicated region
      $region17: #{transformer_forward.1} parent=11 // pred_check
        %p623 = pneg %p579
      $region18: #{transformer_forward.1} parent=11 // pred_check_branch
        %625 = sbr.rel (%p623) target = $region20
      $region19: #{transformer_forward.1} parent=11 // pred_region
        _
      $region20: #{transformer_forward.1} parent=11 // pred_fallthru
        _
    $region12: #{transformer_forward.1} parent=5 // pred_fallthru
      _
    %p626 = scmp.lt.s32.totalorder %s27, 4
    // Predicated region
    $region21: #{transformer_forward.1} parent=5 // pred_check
      %p627 = pneg %p626
    $region22: #{transformer_forward.1} parent=5 // pred_check_branch
      %629 = sbr.rel (%p627) target = $region24
    $region23: #{transformer_forward.1} parent=5 // pred_region
      // Predicated region
      $region25: #{transformer_forward.1} parent=23 // pred_check
        %p630 = pneg %p59
      $region26: #{transformer_forward.1} parent=23 // pred_check_branch
        %632 = sbr.rel (%p630) target = $region28
      $region27: #{transformer_forward.1} parent=23 // pred_region
        %p633 = scmp.lt.s32.totalorder %s34, 1
        %s634 = scalar_select %p633, %s34, 1
        %s635 = smul.addr %s634, 2
        %s636 = smul.addr %s635, 8
        %s637 = scalar_lea.vmem %s0, %s636
      $region28: #{transformer_forward.1} parent=23 // pred_fallthru
        _
      // Predicated region
      $region29: #{transformer_forward.1} parent=23 // pred_check
        %p638 = pneg %p85
      $region30: #{transformer_forward.1} parent=23 // pred_check_branch
        %640 = sbr.rel (%p638) target = $region32
      $region31: #{transformer_forward.1} parent=23 // pred_region
        %p641 = scmp.lt.s32.totalorder %s34, 1
        %s642 = scalar_select %p641, %s34, 1
        %s643 = smul.addr %s642, 2
        %s644 = smul.addr %s643, 4
        %s645 = scalar_lea.vmem %s1, %s644
      $region32: #{transformer_forward.1} parent=23 // pred_fallthru
        _
      // Predicated region
      $region33: #{transformer_forward.1} parent=23 // pred_check
        %p646 = pneg %p113
      $region34: #{transformer_forward.1} parent=23 // pred_check_branch
        %648 = sbr.rel (%p646) target = $region36
      $region35: #{transformer_forward.1} parent=23 // pred_region
        %p649 = scmp.lt.s32.totalorder %s35, 1
        %s650 = scalar_select %p649, %s35, 1
        %p651 = scmp.lt.s32.totalorder %s34, 1
        %s652 = scalar_select %p651, %s34, 1
        %s653 = smul.addr %s652, 2
        %s654 = smul.addr %s650, 4
        %s655 = sadd.s32 %s653, %s654
        %s656 = smul.addr %s655, 4
        %s657 = scalar_lea.vmem %s2, %s656
      $region36: #{transformer_forward.1} parent=23 // pred_fallthru
        _
      // Predicated region
      $region37: #{transformer_forward.1} parent=23 // pred_check
        %p658 = pneg %p141
      $region38: #{transformer_forward.1} parent=23 // pred_check_branch
        %660 = sbr.rel (%p658) target = $region40
      $region39: #{transformer_forward.1} parent=23 // pred_region
        %p661 = scmp.lt.s32.totalorder %s35, 1
        %s662 = scalar_select %p661, %s35, 1
        %p663 = scmp.lt.s32.totalorder %s34, 1
        %s664 = scalar_select %p663, %s34, 1
        %s665 = smul.addr %s664, 2
        %s666 = smul.addr %s662, 4
        %s667 = sadd.s32 %s665, %s666
        %s668 = smul.addr %s667, 2
        %s669 = scalar_lea.vmem %s3, %s668
      $region40: #{transformer_forward.1} parent=23 // pred_fallthru
        _
      // Predicated region
      $region41: #{transformer_forward.1} parent=23 // pred_check
        %p670 = pneg %p167
      $region42: #{transformer_forward.1} parent=23 // pred_check_branch
        %672 = sbr.rel (%p670) target = $region44
      $region43: #{transformer_forward.1} parent=23 // pred_region
        %p673 = scmp.lt.s32.totalorder %s34, 1
        %s674 = scalar_select %p673, %s34, 1
        %s675 = smul.addr %s674, 2
        %s676 = scalar_lea.vmem %s4, %s675
      $region44: #{transformer_forward.1} parent=23 // pred_fallthru
        _
      // Predicated region
      $region45: #{transformer_forward.1} parent=23 // pred_check
        %p677 = pneg %p193
      $region46: #{transformer_forward.1} parent=23 // pred_check_branch
        %679 = sbr.rel (%p677) target = $region48
      $region47: #{transformer_forward.1} parent=23 // pred_region
        %p680 = scmp.lt.s32.totalorder %s35, 1
        %s681 = scalar_select %p680, %s35, 1
        %s682 = smul.addr %s681, 192
        %s683 = smul.addr %s682, 4
        %s684 = scalar_lea.vmem %s5, %s683
      $region48: #{transformer_forward.1} parent=23 // pred_fallthru
        _
      // Predicated region
      $region49: #{transformer_forward.1} parent=23 // pred_check
        %p685 = pneg %p219
      $region50: #{transformer_forward.1} parent=23 // pred_check_branch
        %687 = sbr.rel (%p685) target = $region52
      $region51: #{transformer_forward.1} parent=23 // pred_region
        %p688 = scmp.lt.s32.totalorder %s35, 1
        %s689 = scalar_select %p688, %s35, 1
        %s690 = smul.addr %s689, 6
        %s691 = scalar_lea.vmem %s6, %s690
      $region52: #{transformer_forward.1} parent=23 // pred_fallthru
        _
      // Predicated region
      $region53: #{transformer_forward.1} parent=23 // pred_check
        %p692 = pneg %p245
      $region54: #{transformer_forward.1} parent=23 // pred_check_branch
        %694 = sbr.rel (%p692) target = $region56
      $region55: #{transformer_forward.1} parent=23 // pred_region
        %p695 = scmp.lt.s32.totalorder %s35, 1
        %s696 = scalar_select %p695, %s35, 1
        %s697 = smul.addr %s696, 64
        %s698 = smul.addr %s697, 4
        %s699 = scalar_lea.vmem %s7, %s698
      $region56: #{transformer_forward.1} parent=23 // pred_fallthru
        _
      // Predicated region
      $region57: #{transformer_forward.1} parent=23 // pred_check
        %p700 = pneg %p271
      $region58: #{transformer_forward.1} parent=23 // pred_check_branch
        %702 = sbr.rel (%p700) target = $region60
      $region59: #{transformer_forward.1} parent=23 // pred_region
        %p703 = scmp.lt.s32.totalorder %s35, 1
        %s704 = scalar_select %p703, %s35, 1
        %s705 = smul.addr %s704, 2
        %s706 = scalar_lea.vmem %s8, %s705
      $region60: #{transformer_forward.1} parent=23 // pred_fallthru
        _
      // Predicated region
      $region61: #{transformer_forward.1} parent=23 // pred_check
        %p707 = pneg %p297
      $region62: #{transformer_forward.1} parent=23 // pred_check_branch
        %709 = sbr.rel (%p707) target = $region64
      $region63: #{transformer_forward.1} parent=23 // pred_region
        %p710 = scmp.lt.s32.totalorder %s35, 1
        %s711 = scalar_select %p710, %s35, 1
        %s712 = smul.addr %s711, 64
        %s713 = smul.addr %s712, 4
        %s714 = scalar_lea.vmem %s9, %s713
      $region64: #{transformer_forward.1} parent=23 // pred_fallthru
        _
      // Predicated region
      $region65: #{transformer_forward.1} parent=23 // pred_check
        %p715 = pneg %p323
      $region66: #{transformer_forward.1} parent=23 // pred_check_branch
        %717 = sbr.rel (%p715) target = $region68
      $region67: #{transformer_forward.1} parent=23 // pred_region
        %p718 = scmp.lt.s32.totalorder %s35, 1
        %s719 = scalar_select %p718, %s35, 1
        %s720 = smul.addr %s719, 2
        %s721 = scalar_lea.vmem %s10, %s720
      $region68: #{transformer_forward.1} parent=23 // pred_fallthru
        _
      // Predicated region
      $region69: #{transformer_forward.1} parent=23 // pred_check
        %p722 = pneg %p349
      $region70: #{transformer_forward.1} parent=23 // pred_check_branch
        %724 = sbr.rel (%p722) target = $region72
      $region71: #{transformer_forward.1} parent=23 // pred_region
        %p725 = scmp.lt.s32.totalorder %s35, 1
        %s726 = scalar_select %p725, %s35, 1
        %s727 = smul.addr %s726, 128
        %s728 = smul.addr %s727, 4
        %s729 = scalar_lea.vmem %s11, %s728
      $region72: #{transformer_forward.1} parent=23 // pred_fallthru
        _
      // Predicated region
      $region73: #{transformer_forward.1} parent=23 // pred_check
        %p730 = pneg %p375
      $region74: #{transformer_forward.1} parent=23 // pred_check_branch
        %732 = sbr.rel (%p730) target = $region76
      $region75: #{transformer_forward.1} parent=23 // pred_region
        %p733 = scmp.lt.s32.totalorder %s35, 1
        %s734 = scalar_select %p733, %s35, 1
        %s735 = smul.addr %s734, 4
        %s736 = scalar_lea.vmem %s12, %s735
      $region76: #{transformer_forward.1} parent=23 // pred_fallthru
        _
      // Predicated region
      $region77: #{transformer_forward.1} parent=23 // pred_check
        %p737 = pneg %p401
      $region78: #{transformer_forward.1} parent=23 // pred_check_branch
        %739 = sbr.rel (%p737) target = $region80
      $region79: #{transformer_forward.1} parent=23 // pred_region
        %p740 = scmp.lt.s32.totalorder %s35, 1
        %s741 = scalar_select %p740, %s35, 1
        %s742 = smul.addr %s741, 64
        %s743 = smul.addr %s742, 4
        %s744 = scalar_lea.vmem %s13, %s743
      $region80: #{transformer_forward.1} parent=23 // pred_fallthru
        _
      // Predicated region
      $region81: #{transformer_forward.1} parent=23 // pred_check
        %p745 = pneg %p427
      $region82: #{transformer_forward.1} parent=23 // pred_check_branch
        %747 = sbr.rel (%p745) target = $region84
      $region83: #{transformer_forward.1} parent=23 // pred_region
        %p748 = scmp.lt.s32.totalorder %s35, 1
        %s749 = scalar_select %p748, %s35, 1
        %s750 = smul.addr %s749, 2
        %s751 = scalar_lea.vmem %s14, %s750
      $region84: #{transformer_forward.1} parent=23 // pred_fallthru
        _
      // Predicated region
      $region85: #{transformer_forward.1} parent=23 // pred_check
        %p752 = pneg %p453
      $region86: #{transformer_forward.1} parent=23 // pred_check_branch
        %754 = sbr.rel (%p752) target = $region88
      $region87: #{transformer_forward.1} parent=23 // pred_region
        %p755 = scmp.lt.s32.totalorder %s35, 1
        %s756 = scalar_select %p755, %s35, 1
        %s757 = smul.addr %s756, 256
        %s758 = smul.addr %s757, 4
        %s759 = scalar_lea.vmem %s15, %s758
      $region88: #{transformer_forward.1} parent=23 // pred_fallthru
        _
      // Predicated region
      $region89: #{transformer_forward.1} parent=23 // pred_check
        %p760 = pneg %p479
      $region90: #{transformer_forward.1} parent=23 // pred_check_branch
        %762 = sbr.rel (%p760) target = $region92
      $region91: #{transformer_forward.1} parent=23 // pred_region
        %p763 = scmp.lt.s32.totalorder %s35, 1
        %s764 = scalar_select %p763, %s35, 1
        %s765 = smul.addr %s764, 8
        %s766 = scalar_lea.vmem %s16, %s765
      $region92: #{transformer_forward.1} parent=23 // pred_fallthru
        _
      // Predicated region
      $region93: #{transformer_forward.1} parent=23 // pred_check
        %p767 = pneg %p505
      $region94: #{transformer_forward.1} parent=23 // pred_check_branch
        %769 = sbr.rel (%p767) target = $region96
      $region95: #{transformer_forward.1} parent=23 // pred_region
        %p770 = scmp.lt.s32.totalorder %s35, 1
        %s771 = scalar_select %p770, %s35, 1
        %s772 = smul.addr %s771, 256
        %s773 = smul.addr %s772, 4
        %s774 = scalar_lea.vmem %s17, %s773
      $region96: #{transformer_forward.1} parent=23 // pred_fallthru
        _
      // Predicated region
      $region97: #{transformer_forward.1} parent=23 // pred_check
        %p775 = pneg %p531
      $region98: #{transformer_forward.1} parent=23 // pred_check_branch
        %777 = sbr.rel (%p775) target = $region100
      $region99: #{transformer_forward.1} parent=23 // pred_region
        %p778 = scmp.lt.s32.totalorder %s35, 1
        %s779 = scalar_select %p778, %s35, 1
        %s780 = smul.addr %s779, 2
        %s781 = scalar_lea.vmem %s18, %s780
      $region100: #{transformer_forward.1} parent=23 // pred_fallthru
        _
    $region24: #{transformer_forward.1} parent=5 // pred_fallthru
      _
    %p782 = scmp.le.s32.totalorder 1, %s27
    %p783 = scmp.lt.s32.totalorder %s27, 5
    %p784 = pnand %p782, %p783
    %p785 = pneg %p784
    // Predicated region
    $region101: #{transformer_forward.1} parent=5 // pred_check
      _
    $region102: #{transformer_forward.1} parent=5 // pred_check_branch
      %787 = sbr.rel (%p784) target = $region104
    $region103: #{transformer_forward.1} parent=5 // pred_region
      %s788 = ssub.s32 %s27, 1
      %p789 = scmp.lt.s32.totalorder %s36, 1
      %s790 = scalar_select %p789, %s36, 1
      %s791 = smul.addr %s790, 2
      %s792 = smul.addr %s791, 8
      %s793 = scalar_lea.vmem %s0, %s792
      %p794 = pneg %p65
      %p795 = pneg %p62
      %p796 = scmp.lt.s32.totalorder %s36, 1
      %s797 = scalar_select %p796, %s36, 1
      %s798 = smul.addr %s797, 2
      %s799 = smul.addr %s798, 4
      %s800 = scalar_lea.vmem %s1, %s799
      %p801 = pneg %p91
      %p802 = pneg %p88
      %p803 = scmp.lt.s32.totalorder %s37, 1
      %s804 = scalar_select %p803, %s37, 1
      %p805 = scmp.lt.s32.totalorder %s36, 1
      %s806 = scalar_select %p805, %s36, 1
      %s807 = smul.addr %s806, 2
      %s808 = smul.addr %s804, 4
      %s809 = sadd.s32 %s807, %s808
      %s810 = smul.addr %s809, 4
      %s811 = scalar_lea.vmem %s2, %s810
      %p812 = pneg %p119
      %p813 = pneg %p116
      %p814 = scmp.lt.s32.totalorder %s37, 1
      %s815 = scalar_select %p814, %s37, 1
      %p816 = scmp.lt.s32.totalorder %s36, 1
      %s817 = scalar_select %p816, %s36, 1
      %s818 = smul.addr %s817, 2
      %s819 = smul.addr %s815, 4
      %s820 = sadd.s32 %s818, %s819
      %s821 = smul.addr %s820, 2
      %s822 = scalar_lea.vmem %s3, %s821
      %p823 = pneg %p147
      %p824 = pneg %p144
      %p825 = scmp.lt.s32.totalorder %s36, 1
      %s826 = scalar_select %p825, %s36, 1
      %s827 = smul.addr %s826, 2
      %s828 = scalar_lea.vmem %s4, %s827
      %p829 = pneg %p173
      %p830 = pneg %p170
      %p831 = scmp.lt.s32.totalorder %s37, 1
      %s832 = scalar_select %p831, %s37, 1
      %s833 = smul.addr %s832, 192
      %s834 = smul.addr %s833, 4
      %s835 = scalar_lea.vmem %s5, %s834
      %p836 = pneg %p199
      %p837 = pneg %p196
      %p838 = scmp.lt.s32.totalorder %s37, 1
      %s839 = scalar_select %p838, %s37, 1
      %s840 = smul.addr %s839, 6
      %s841 = scalar_lea.vmem %s6, %s840
      %p842 = pneg %p225
      %p843 = pneg %p222
      %p844 = scmp.lt.s32.totalorder %s37, 1
      %s845 = scalar_select %p844, %s37, 1
      %s846 = smul.addr %s845, 64
      %s847 = smul.addr %s846, 4
      %s848 = scalar_lea.vmem %s7, %s847
      %p849 = pneg %p251
      %p850 = pneg %p248
      %p851 = scmp.lt.s32.totalorder %s37, 1
      %s852 = scalar_select %p851, %s37, 1
      %s853 = smul.addr %s852, 2
      %s854 = scalar_lea.vmem %s8, %s853
      %p855 = pneg %p277
      %p856 = pneg %p274
      %p857 = scmp.lt.s32.totalorder %s37, 1
      %s858 = scalar_select %p857, %s37, 1
      %s859 = smul.addr %s858, 64
      %s860 = smul.addr %s859, 4
      %s861 = scalar_lea.vmem %s9, %s860
      %p862 = pneg %p303
      %p863 = pneg %p300
      %p864 = scmp.lt.s32.totalorder %s37, 1
      %s865 = scalar_select %p864, %s37, 1
      %s866 = smul.addr %s865, 2
      %s867 = scalar_lea.vmem %s10, %s866
      %p868 = pneg %p329
      %p869 = pneg %p326
      %p870 = scmp.lt.s32.totalorder %s37, 1
      %s871 = scalar_select %p870, %s37, 1
      %s872 = smul.addr %s871, 128
      %s873 = smul.addr %s872, 4
      %s874 = scalar_lea.vmem %s11, %s873
      %p875 = pneg %p355
      %p876 = pneg %p352
      %p877 = scmp.lt.s32.totalorder %s37, 1
      %s878 = scalar_select %p877, %s37, 1
      %s879 = smul.addr %s878, 4
      %s880 = scalar_lea.vmem %s12, %s879
      %p881 = pneg %p381
      %p882 = pneg %p378
      %p883 = scmp.lt.s32.totalorder %s37, 1
      %s884 = scalar_select %p883, %s37, 1
      %s885 = smul.addr %s884, 64
      %s886 = smul.addr %s885, 4
      %s887 = scalar_lea.vmem %s13, %s886
      %p888 = pneg %p407
      %p889 = pneg %p404
      %p890 = scmp.lt.s32.totalorder %s37, 1
      %s891 = scalar_select %p890, %s37, 1
      %s892 = smul.addr %s891, 2
      %s893 = scalar_lea.vmem %s14, %s892
      %p894 = pneg %p433
      %p895 = pneg %p430
      %p896 = scmp.lt.s32.totalorder %s37, 1
      %s897 = scalar_select %p896, %s37, 1
      %s898 = smul.addr %s897, 256
      %s899 = smul.addr %s898, 4
      %s900 = scalar_lea.vmem %s15, %s899
      %p901 = pneg %p459
      %p902 = pneg %p456
      %p903 = scmp.lt.s32.totalorder %s37, 1
      %s904 = scalar_select %p903, %s37, 1
      %s905 = smul.addr %s904, 8
      %s906 = scalar_lea.vmem %s16, %s905
      %p907 = pneg %p485
      %p908 = pneg %p482
      %p909 = scmp.lt.s32.totalorder %s37, 1
      %s910 = scalar_select %p909, %s37, 1
      %s911 = smul.addr %s910, 256
      %s912 = smul.addr %s911, 4
      %s913 = scalar_lea.vmem %s17, %s912
      %p914 = pneg %p511
      %p915 = pneg %p508
      %p916 = scmp.lt.s32.totalorder %s37, 1
      %s917 = scalar_select %p916, %s37, 1
      %s918 = smul.addr %s917, 2
      %s919 = scalar_lea.vmem %s18, %s918
      %p920 = pneg %p537
      %p921 = pneg %p534
      %p922 = pneg %p558
      %p923 = pneg %p555
      %p924 = pneg %p579
      %p925 = pneg %p576
      %p926 = pneg %p605
      %p927 = pneg %p602
      %p928 = scmp.lt.s32.totalorder %s36, 1
      %s929 = scalar_select %p928, %s36, 1
      %s930 = smul.addr %s929, 8
      %s931 = scalar_lea.vmem %s21, %s930
      %p932 = scmp.lt.s32.totalorder %s36, 1
      %s933 = scalar_select %p932, %s36, 1
      %s934 = smul.addr %s933, 2
      %s935 = smul.addr %s934, 8
      %s936 = scalar_lea.vmem %s0, %s935
      %p937 = scmp.lt.s32.totalorder %s36, 1
      %s938 = scalar_select %p937, %s36, 1
      %s939 = smul.addr %s938, 2
      %s940 = smul.addr %s939, 4
      %s941 = scalar_lea.vmem %s1, %s940
      %p942 = scmp.lt.s32.totalorder %s37, 1
      %s943 = scalar_select %p942, %s37, 1
      %p944 = scmp.lt.s32.totalorder %s36, 1
      %s945 = scalar_select %p944, %s36, 1
      %s946 = smul.addr %s945, 2
      %s947 = smul.addr %s943, 4
      %s948 = sadd.s32 %s946, %s947
      %s949 = smul.addr %s948, 4
      %s950 = scalar_lea.vmem %s2, %s949
      %p951 = scmp.lt.s32.totalorder %s37, 1
      %s952 = scalar_select %p951, %s37, 1
      %p953 = scmp.lt.s32.totalorder %s36, 1
      %s954 = scalar_select %p953, %s36, 1
      %s955 = smul.addr %s954, 2
      %s956 = smul.addr %s952, 4
      %s957 = sadd.s32 %s955, %s956
      %s958 = smul.addr %s957, 2
      %s959 = scalar_lea.vmem %s3, %s958
      %p960 = scmp.lt.s32.totalorder %s36, 1
      %s961 = scalar_select %p960, %s36, 1
      %s962 = smul.addr %s961, 2
      %s963 = scalar_lea.vmem %s4, %s962
      %p964 = scmp.lt.s32.totalorder %s37, 1
      %s965 = scalar_select %p964, %s37, 1
      %s966 = smul.addr %s965, 192
      %s967 = smul.addr %s966, 4
      %s968 = scalar_lea.vmem %s5, %s967
      %p969 = scmp.lt.s32.totalorder %s37, 1
      %s970 = scalar_select %p969, %s37, 1
      %s971 = smul.addr %s970, 6
      %s972 = scalar_lea.vmem %s6, %s971
      %p973 = scmp.lt.s32.totalorder %s37, 1
      %s974 = scalar_select %p973, %s37, 1
      %s975 = smul.addr %s974, 64
      %s976 = smul.addr %s975, 4
      %s977 = scalar_lea.vmem %s7, %s976
      %p978 = scmp.lt.s32.totalorder %s37, 1
      %s979 = scalar_select %p978, %s37, 1
      %s980 = smul.addr %s979, 2
      %s981 = scalar_lea.vmem %s8, %s980
      %p982 = scmp.lt.s32.totalorder %s37, 1
      %s983 = scalar_select %p982, %s37, 1
      %s984 = smul.addr %s983, 64
      %s985 = smul.addr %s984, 4
      %s986 = scalar_lea.vmem %s9, %s985
      %p987 = scmp.lt.s32.totalorder %s37, 1
      %s988 = scalar_select %p987, %s37, 1
      %s989 = smul.addr %s988, 2
      %s990 = scalar_lea.vmem %s10, %s989
      %p991 = scmp.lt.s32.totalorder %s37, 1
      %s992 = scalar_select %p991, %s37, 1
      %s993 = smul.addr %s992, 128
      %s994 = smul.addr %s993, 4
      %s995 = scalar_lea.vmem %s11, %s994
      %p996 = scmp.lt.s32.totalorder %s37, 1
      %s997 = scalar_select %p996, %s37, 1
      %s998 = smul.addr %s997, 4
      %s999 = scalar_lea.vmem %s12, %s998
      %p1000 = scmp.lt.s32.totalorder %s37, 1
      %s1001 = scalar_select %p1000, %s37, 1
      %s1002 = smul.addr %s1001, 64
      %s1003 = smul.addr %s1002, 4
      %s1004 = scalar_lea.vmem %s13, %s1003
      %p1005 = scmp.lt.s32.totalorder %s37, 1
      %s1006 = scalar_select %p1005, %s37, 1
      %s1007 = smul.addr %s1006, 2
      %s1008 = scalar_lea.vmem %s14, %s1007
      %p1009 = scmp.lt.s32.totalorder %s37, 1
      %s1010 = scalar_select %p1009, %s37, 1
      %s1011 = smul.addr %s1010, 256
      %s1012 = smul.addr %s1011, 4
      %s1013 = scalar_lea.vmem %s15, %s1012
      %p1014 = scmp.lt.s32.totalorder %s37, 1
      %s1015 = scalar_select %p1014, %s37, 1
      %s1016 = smul.addr %s1015, 8
      %s1017 = scalar_lea.vmem %s16, %s1016
      %p1018 = scmp.lt.s32.totalorder %s37, 1
      %s1019 = scalar_select %p1018, %s37, 1
      %s1020 = smul.addr %s1019, 256
      %s1021 = smul.addr %s1020, 4
      %s1022 = scalar_lea.vmem %s17, %s1021
      %p1023 = scmp.lt.s32.totalorder %s37, 1
      %s1024 = scalar_select %p1023, %s37, 1
      %s1025 = smul.addr %s1024, 2
      %s1026 = scalar_lea.vmem %s18, %s1025
      %p1027 = scmp.lt.s32.totalorder %s36, 1
      %s1028 = scalar_select %p1027, %s36, 1
      %s1029 = smul.addr %s1028, 8
      %s1030 = scalar_lea.vmem %s21, %s1029
      %p1032 = scmp.eq.s32.totalorder %s37, 0
      // Predicated region
      $region105: #{transformer_forward.1} parent=103 // pred_check
        %p1033 = pneg %p1032
      $region106: #{transformer_forward.1} parent=103 // pred_check_branch
        %1035 = sbr.rel (%p1033) target = $region108
      $region107: #{transformer_forward.1} parent=103 // pred_region
        %v1036 = vld [vmem:[%s936] sm:$0xff]
        %v1037 = vld [vmem:[%s936 + $0x8] sm:$0xff]
        %1038 = vst [vmem:[#allocation2] sm:$0xff] %v1036
        %1039 = vst [vmem:[#allocation2 + $0x8] sm:$0xff] %v1037
      $region108: #{transformer_forward.1} parent=103 // pred_fallthru
        _
      %v1040 = vld [vmem:[#allocation2] sm:$0xff]
      %v1041 = vld [vmem:[#allocation2 + $0x8] sm:$0xff]
      %v1042 = vld [vmem:[%s941] sm:$0xff]
      %v1043 = vld [vmem:[%s950] sm:$0x77]
      %v1044 = vunpack.c.l.bf16 %v1043
      %v1045 = vunpack.c.h.bf16 %v1043
      %v1046 = vld [vmem:[%s959] sm:$0xf]
      %v1047 = vunpack.c.l.bf16 %v1046
      %v1048 = vld [vmem:[%s995] sm:$0xff]
      %v1049 = vld [vmem:[%s995 + $0x8] sm:$0xff]
      %v1050 = vld [vmem:[%s995 + $0x10] sm:$0xff]
      %v1051 = vld [vmem:[%s995 + $0x18] sm:$0xff]
      %v1052 = vld [vmem:[%s995 + $0x20] sm:$0xff]
      %v1053 = vld [vmem:[%s995 + $0x28] sm:$0xff]
      %v1054 = vld [vmem:[%s995 + $0x30] sm:$0xff]
      %v1055 = vld [vmem:[%s995 + $0x38] sm:$0xff]
      %v1056 = vld [vmem:[%s995 + $0x40] sm:$0xff]
      %v1057 = vld [vmem:[%s995 + $0x48] sm:$0xff]
      %v1058 = vld [vmem:[%s995 + $0x50] sm:$0xff]
      %v1059 = vld [vmem:[%s995 + $0x58] sm:$0xff]
      %v1060 = vld [vmem:[%s995 + $0x60] sm:$0xff]
      %v1061 = vld [vmem:[%s995 + $0x68] sm:$0xff]
      %v1062 = vld [vmem:[%s995 + $0x70] sm:$0xff]
      %v1063 = vld [vmem:[%s995 + $0x78] sm:$0xff]
      %v1064 = vld [vmem:[%s995 + $0x80] sm:$0xff]
      %v1065 = vld [vmem:[%s995 + $0x88] sm:$0xff]
      %v1066 = vld [vmem:[%s995 + $0x90] sm:$0xff]
      %v1067 = vld [vmem:[%s995 + $0x98] sm:$0xff]
      %v1068 = vld [vmem:[%s995 + $0xa0] sm:$0xff]
      %v1069 = vld [vmem:[%s995 + $0xa8] sm:$0xff]
      %v1070 = vld [vmem:[%s995 + $0xb0] sm:$0xff]
      %v1071 = vld [vmem:[%s995 + $0xb8] sm:$0xff]
      %v1072 = vld [vmem:[%s995 + $0xc0] sm:$0xff]
      %v1073 = vld [vmem:[%s995 + $0xc8] sm:$0xff]
      %v1074 = vld [vmem:[%s995 + $0xd0] sm:$0xff]
      %v1075 = vld [vmem:[%s995 + $0xd8] sm:$0xff]
      %v1076 = vld [vmem:[%s995 + $0xe0] sm:$0xff]
      %v1077 = vld [vmem:[%s995 + $0xe8] sm:$0xff]
      %v1078 = vld [vmem:[%s995 + $0xf0] sm:$0xff]
      %v1079 = vld [vmem:[%s995 + $0xf8] sm:$0xff]
      %v1080 = vld [vmem:[%s995 + $0x100] sm:$0xff]
      %v1081 = vld [vmem:[%s995 + $0x108] sm:$0xff]
      %v1082 = vld [vmem:[%s995 + $0x110] sm:$0xff]
      %v1083 = vld [vmem:[%s995 + $0x118] sm:$0xff]
      %v1084 = vld [vmem:[%s995 + $0x120] sm:$0xff]
      %v1085 = vld [vmem:[%s995 + $0x128] sm:$0xff]
      %v1086 = vld [vmem:[%s995 + $0x130] sm:$0xff]
      %v1087 = vld [vmem:[%s995 + $0x138] sm:$0xff]
      %v1088 = vld [vmem:[%s995 + $0x140] sm:$0xff]
      %v1089 = vld [vmem:[%s995 + $0x148] sm:$0xff]
      %v1090 = vld [vmem:[%s995 + $0x150] sm:$0xff]
      %v1091 = vld [vmem:[%s995 + $0x158] sm:$0xff]
      %v1092 = vld [vmem:[%s995 + $0x160] sm:$0xff]
      %v1093 = vld [vmem:[%s995 + $0x168] sm:$0xff]
      %v1094 = vld [vmem:[%s995 + $0x170] sm:$0xff]
      %v1095 = vld [vmem:[%s995 + $0x178] sm:$0xff]
      %v1096 = vld [vmem:[%s995 + $0x180] sm:$0xff]
      %v1097 = vld [vmem:[%s995 + $0x188] sm:$0xff]
      %v1098 = vld [vmem:[%s995 + $0x190] sm:$0xff]
      %v1099 = vld [vmem:[%s995 + $0x198] sm:$0xff]
      %v1100 = vld [vmem:[%s995 + $0x1a0] sm:$0xff]
      %v1101 = vld [vmem:[%s995 + $0x1a8] sm:$0xff]
      %v1102 = vld [vmem:[%s995 + $0x1b0] sm:$0xff]
      %v1103 = vld [vmem:[%s995 + $0x1b8] sm:$0xff]
      %v1104 = vld [vmem:[%s995 + $0x1c0] sm:$0xff]
      %v1105 = vld [vmem:[%s995 + $0x1c8] sm:$0xff]
      %v1106 = vld [vmem:[%s995 + $0x1d0] sm:$0xff]
      %v1107 = vld [vmem:[%s995 + $0x1d8] sm:$0xff]
      %v1108 = vld [vmem:[%s995 + $0x1e0] sm:$0xff]
      %v1109 = vld [vmem:[%s995 + $0x1e8] sm:$0xff]
      %v1110 = vld [vmem:[%s995 + $0x1f0] sm:$0xff]
      %v1111 = vld [vmem:[%s995 + $0x1f8] sm:$0xff]
      %v1112 = vld [vmem:[%s999] sm:$0xf]
      %v1114 = vlaneseq
      %v1115 = vshrl.u32 %v1114, 7
      %v1116 = vsub.s32 0, %v1115
      %v1117 = vrot.slane %v1112, %v1116
      %v1118 = vlaneseq
      %v1119 = vshrl.u32 %v1118, 7
      %v1120 = vsub.s32 1, %v1119
      %v1121 = vrot.slane %v1112, %v1120
      %v1122 = vlaneseq
      %v1123 = vshrl.u32 %v1122, 7
      %v1124 = vsub.s32 2, %v1123
      %v1125 = vrot.slane %v1112, %v1124
      %v1126 = vlaneseq
      %v1127 = vshrl.u32 %v1126, 7
      %v1128 = vsub.s32 3, %v1127
      %v1129 = vrot.slane %v1112, %v1128
      %v1135 = vunpack.c.l.b16 %v1042
      %v1136 = vunpack.c.h.b16 %v1042
      %v1137 = vpack.c.b16 %v1135, %v1135
      %v1138 = vpack.c.b16 %v1136, %v1136
      %v1205 = vunpack.c.l.b16 %v1048
      %v1206 = vunpack.c.h.b16 %v1048
      %v1207 = vunpack.c.l.b16 %v1049
      %v1208 = vunpack.c.h.b16 %v1049
      %v1209 = vunpack.c.l.b16 %v1050
      %v1210 = vunpack.c.h.b16 %v1050
      %v1211 = vunpack.c.l.b16 %v1051
      %v1212 = vunpack.c.h.b16 %v1051
      %v1213 = vunpack.c.l.b16 %v1052
      %v1214 = vunpack.c.h.b16 %v1052
      %v1215 = vunpack.c.l.b16 %v1053
      %v1216 = vunpack.c.h.b16 %v1053
      %v1217 = vunpack.c.l.b16 %v1054
      %v1218 = vunpack.c.h.b16 %v1054
      %v1219 = vunpack.c.l.b16 %v1055
      %v1220 = vunpack.c.h.b16 %v1055
      %v1221 = vunpack.c.l.b16 %v1056
      %v1222 = vunpack.c.h.b16 %v1056
      %v1223 = vunpack.c.l.b16 %v1057
      %v1224 = vunpack.c.h.b16 %v1057
      %v1225 = vunpack.c.l.b16 %v1058
      %v1226 = vunpack.c.h.b16 %v1058
      %v1227 = vunpack.c.l.b16 %v1059
      %v1228 = vunpack.c.h.b16 %v1059
      %v1229 = vunpack.c.l.b16 %v1060
      %v1230 = vunpack.c.h.b16 %v1060
      %v1231 = vunpack.c.l.b16 %v1061
      %v1232 = vunpack.c.h.b16 %v1061
      %v1233 = vunpack.c.l.b16 %v1062
      %v1234 = vunpack.c.h.b16 %v1062
      %v1235 = vunpack.c.l.b16 %v1063
      %v1236 = vunpack.c.h.b16 %v1063
      %v1237 = vunpack.c.l.b16 %v1064
      %v1238 = vunpack.c.h.b16 %v1064
      %v1239 = vunpack.c.l.b16 %v1065
      %v1240 = vunpack.c.h.b16 %v1065
      %v1241 = vunpack.c.l.b16 %v1066
      %v1242 = vunpack.c.h.b16 %v1066
      %v1243 = vunpack.c.l.b16 %v1067
      %v1244 = vunpack.c.h.b16 %v1067
      %v1245 = vunpack.c.l.b16 %v1068
      %v1246 = vunpack.c.h.b16 %v1068
      %v1247 = vunpack.c.l.b16 %v1069
      %v1248 = vunpack.c.h.b16 %v1069
      %v1249 = vunpack.c.l.b16 %v1070
      %v1250 = vunpack.c.h.b16 %v1070
      %v1251 = vunpack.c.l.b16 %v1071
      %v1252 = vunpack.c.h.b16 %v1071
      %v1253 = vunpack.c.l.b16 %v1072
      %v1254 = vunpack.c.h.b16 %v1072
      %v1255 = vunpack.c.l.b16 %v1073
      %v1256 = vunpack.c.h.b16 %v1073
      %v1257 = vunpack.c.l.b16 %v1074
      %v1258 = vunpack.c.h.b16 %v1074
      %v1259 = vunpack.c.l.b16 %v1075
      %v1260 = vunpack.c.h.b16 %v1075
      %v1261 = vunpack.c.l.b16 %v1076
      %v1262 = vunpack.c.h.b16 %v1076
      %v1263 = vunpack.c.l.b16 %v1077
      %v1264 = vunpack.c.h.b16 %v1077
      %v1265 = vunpack.c.l.b16 %v1078
      %v1266 = vunpack.c.h.b16 %v1078
      %v1267 = vunpack.c.l.b16 %v1079
      %v1268 = vunpack.c.h.b16 %v1079
      %v1269 = vunpack.c.l.b16 %v1080
      %v1270 = vunpack.c.h.b16 %v1080
      %v1271 = vunpack.c.l.b16 %v1081
      %v1272 = vunpack.c.h.b16 %v1081
      %v1273 = vunpack.c.l.b16 %v1082
      %v1274 = vunpack.c.h.b16 %v1082
      %v1275 = vunpack.c.l.b16 %v1083
      %v1276 = vunpack.c.h.b16 %v1083
      %v1277 = vunpack.c.l.b16 %v1084
      %v1278 = vunpack.c.h.b16 %v1084
      %v1279 = vunpack.c.l.b16 %v1085
      %v1280 = vunpack.c.h.b16 %v1085
      %v1281 = vunpack.c.l.b16 %v1086
      %v1282 = vunpack.c.h.b16 %v1086
      %v1283 = vunpack.c.l.b16 %v1087
      %v1284 = vunpack.c.h.b16 %v1087
      %v1285 = vunpack.c.l.b16 %v1088
      %v1286 = vunpack.c.h.b16 %v1088
      %v1287 = vunpack.c.l.b16 %v1089
      %v1288 = vunpack.c.h.b16 %v1089
      %v1289 = vunpack.c.l.b16 %v1090
      %v1290 = vunpack.c.h.b16 %v1090
      %v1291 = vunpack.c.l.b16 %v1091
      %v1292 = vunpack.c.h.b16 %v1091
      %v1293 = vunpack.c.l.b16 %v1092
      %v1294 = vunpack.c.h.b16 %v1092
      %v1295 = vunpack.c.l.b16 %v1093
      %v1296 = vunpack.c.h.b16 %v1093
      %v1297 = vunpack.c.l.b16 %v1094
      %v1298 = vunpack.c.h.b16 %v1094
      %v1299 = vunpack.c.l.b16 %v1095
      %v1300 = vunpack.c.h.b16 %v1095
      %v1301 = vunpack.c.l.b16 %v1096
      %v1302 = vunpack.c.h.b16 %v1096
      %v1303 = vunpack.c.l.b16 %v1097
      %v1304 = vunpack.c.h.b16 %v1097
      %v1305 = vunpack.c.l.b16 %v1098
      %v1306 = vunpack.c.h.b16 %v1098
      %v1307 = vunpack.c.l.b16 %v1099
      %v1308 = vunpack.c.h.b16 %v1099
      %v1309 = vunpack.c.l.b16 %v1100
      %v1310 = vunpack.c.h.b16 %v1100
      %v1311 = vunpack.c.l.b16 %v1101
      %v1312 = vunpack.c.h.b16 %v1101
      %v1313 = vunpack.c.l.b16 %v1102
      %v1314 = vunpack.c.h.b16 %v1102
      %v1315 = vunpack.c.l.b16 %v1103
      %v1316 = vunpack.c.h.b16 %v1103
      %v1317 = vunpack.c.l.b16 %v1104
      %v1318 = vunpack.c.h.b16 %v1104
      %v1319 = vunpack.c.l.b16 %v1105
      %v1320 = vunpack.c.h.b16 %v1105
      %v1321 = vunpack.c.l.b16 %v1106
      %v1322 = vunpack.c.h.b16 %v1106
      %v1323 = vunpack.c.l.b16 %v1107
      %v1324 = vunpack.c.h.b16 %v1107
      %v1325 = vunpack.c.l.b16 %v1108
      %v1326 = vunpack.c.h.b16 %v1108
      %v1327 = vunpack.c.l.b16 %v1109
      %v1328 = vunpack.c.h.b16 %v1109
      %v1329 = vunpack.c.l.b16 %v1110
      %v1330 = vunpack.c.h.b16 %v1110
      %v1331 = vunpack.c.l.b16 %v1111
      %v1332 = vunpack.c.h.b16 %v1111
      %v1333 = vpack.c.b16 %v1209, %v1205
      %v1334 = vpack.c.b16 %v1210, %v1206
      %v1335 = vpack.c.b16 %v1211, %v1207
      %v1336 = vpack.c.b16 %v1212, %v1208
      %v1337 = vpack.c.b16 %v1217, %v1213
      %v1338 = vpack.c.b16 %v1218, %v1214
      %v1339 = vpack.c.b16 %v1219, %v1215
      %v1340 = vpack.c.b16 %v1220, %v1216
      %v1341 = vpack.c.b16 %v1225, %v1221
      %v1342 = vpack.c.b16 %v1226, %v1222
      %v1343 = vpack.c.b16 %v1227, %v1223
      %v1344 = vpack.c.b16 %v1228, %v1224
      %v1345 = vpack.c.b16 %v1233, %v1229
      %v1346 = vpack.c.b16 %v1234, %v1230
      %v1347 = vpack.c.b16 %v1235, %v1231
      %v1348 = vpack.c.b16 %v1236, %v1232
      %v1349 = vpack.c.b16 %v1241, %v1237
      %v1350 = vpack.c.b16 %v1242, %v1238
      %v1351 = vpack.c.b16 %v1243, %v1239
      %v1352 = vpack.c.b16 %v1244, %v1240
      %v1353 = vpack.c.b16 %v1249, %v1245
      %v1354 = vpack.c.b16 %v1250, %v1246
      %v1355 = vpack.c.b16 %v1251, %v1247
      %v1356 = vpack.c.b16 %v1252, %v1248
      %v1357 = vpack.c.b16 %v1257, %v1253
      %v1358 = vpack.c.b16 %v1258, %v1254
      %v1359 = vpack.c.b16 %v1259, %v1255
      %v1360 = vpack.c.b16 %v1260, %v1256
      %v1361 = vpack.c.b16 %v1265, %v1261
      %v1362 = vpack.c.b16 %v1266, %v1262
      %v1363 = vpack.c.b16 %v1267, %v1263
      %v1364 = vpack.c.b16 %v1268, %v1264
      %v1365 = vpack.c.b16 %v1273, %v1269
      %v1366 = vpack.c.b16 %v1274, %v1270
      %v1367 = vpack.c.b16 %v1275, %v1271
      %v1368 = vpack.c.b16 %v1276, %v1272
      %v1369 = vpack.c.b16 %v1281, %v1277
      %v1370 = vpack.c.b16 %v1282, %v1278
      %v1371 = vpack.c.b16 %v1283, %v1279
      %v1372 = vpack.c.b16 %v1284, %v1280
      %v1373 = vpack.c.b16 %v1289, %v1285
      %v1374 = vpack.c.b16 %v1290, %v1286
      %v1375 = vpack.c.b16 %v1291, %v1287
      %v1376 = vpack.c.b16 %v1292, %v1288
      %v1377 = vpack.c.b16 %v1297, %v1293
      %v1378 = vpack.c.b16 %v1298, %v1294
      %v1379 = vpack.c.b16 %v1299, %v1295
      %v1380 = vpack.c.b16 %v1300, %v1296
      %v1381 = vpack.c.b16 %v1305, %v1301
      %v1382 = vpack.c.b16 %v1306, %v1302
      %v1383 = vpack.c.b16 %v1307, %v1303
      %v1384 = vpack.c.b16 %v1308, %v1304
      %v1385 = vpack.c.b16 %v1313, %v1309
      %v1386 = vpack.c.b16 %v1314, %v1310
      %v1387 = vpack.c.b16 %v1315, %v1311
      %v1388 = vpack.c.b16 %v1316, %v1312
      %v1389 = vpack.c.b16 %v1321, %v1317
      %v1390 = vpack.c.b16 %v1322, %v1318
      %v1391 = vpack.c.b16 %v1323, %v1319
      %v1392 = vpack.c.b16 %v1324, %v1320
      %v1393 = vpack.c.b16 %v1329, %v1325
      %v1394 = vpack.c.b16 %v1330, %v1326
      %v1395 = vpack.c.b16 %v1331, %v1327
      %v1396 = vpack.c.b16 %v1332, %v1328
      %1461 = vmatprep.subr.bf16.mxu0 %v1334
      %1462 = vmatpush1.bf16.msra.mxu0 %v1333
      %1463 = vmatprep.subr.bf16.mxu0 %v1338
      %1464 = vmatpush1.bf16.msra.mxu0 %v1337
      %1465 = vmatprep.subr.bf16.mxu0 %v1342
      %1466 = vmatpush1.bf16.msra.mxu0 %v1341
      %1467 = vmatprep.subr.bf16.mxu0 %v1346
      %1468 = vmatpush1.bf16.msra.mxu0 %v1345
      %1469 = vmatprep.subr.bf16.mxu0 %v1350
      %1470 = vmatpush1.bf16.msra.mxu0 %v1349
      %1471 = vmatprep.subr.bf16.mxu0 %v1354
      %1472 = vmatpush1.bf16.msra.mxu0 %v1353
      %1473 = vmatprep.subr.bf16.mxu0 %v1358
      %1474 = vmatpush1.bf16.msra.mxu0 %v1357
      %1475 = vmatprep.subr.bf16.mxu0 %v1362
      %1476 = vmatpush1.bf16.msra.mxu0 %v1361
      %1477 = vmatprep.subr.bf16.mxu0 %v1366
      %1478 = vmatpush1.bf16.msra.mxu0 %v1365
      %1479 = vmatprep.subr.bf16.mxu0 %v1370
      %1480 = vmatpush1.bf16.msra.mxu0 %v1369
      %1481 = vmatprep.subr.bf16.mxu0 %v1374
      %1482 = vmatpush1.bf16.msra.mxu0 %v1373
      %1483 = vmatprep.subr.bf16.mxu0 %v1378
      %1484 = vmatpush1.bf16.msra.mxu0 %v1377
      %1485 = vmatprep.subr.bf16.mxu0 %v1382
      %1486 = vmatpush1.bf16.msra.mxu0 %v1381
      %1487 = vmatprep.subr.bf16.mxu0 %v1386
      %1488 = vmatpush1.bf16.msra.mxu0 %v1385
      %1489 = vmatprep.subr.bf16.mxu0 %v1390
      %1490 = vmatpush1.bf16.msra.mxu0 %v1389
      %1491 = vmatprep.subr.bf16.mxu0 %v1394
      %1492 = vmatpush1.bf16.msra.mxu0 %v1393
      %1493 = vmatprep.mubr.bf16.mxu0 %v1138
      %1494 = vmatmul.mubr.bf16.gmra.mrb[0].mxu0 %v1137
      %v1495 = vpop.f32.mrb[0].mxu0
      %v1496 = vadd.f32 %v1117, %v1495
      %v1497 = vpop.f32.mrb[0].mxu0
      %v1498 = vadd.f32 %v1121, %v1497
      %v1499 = vpop.f32.mrb[0].mxu0
      %v1500 = vpop.f32.mrb[0].mxu0
      %1501 = vdwg.mxu0
      %1502 = vmatprep.subr.bf16.mxu0 %v1336
      %1503 = vmatpush1.bf16.msra.mxu0 %v1335
      %1504 = vmatprep.subr.bf16.mxu0 %v1340
      %1505 = vmatpush1.bf16.msra.mxu0 %v1339
      %1506 = vmatprep.subr.bf16.mxu0 %v1344
      %1507 = vmatpush1.bf16.msra.mxu0 %v1343
      %1508 = vmatprep.subr.bf16.mxu0 %v1348
      %1509 = vmatpush1.bf16.msra.mxu0 %v1347
      %1510 = vmatprep.subr.bf16.mxu0 %v1352
      %1511 = vmatpush1.bf16.msra.mxu0 %v1351
      %1512 = vmatprep.subr.bf16.mxu0 %v1356
      %1513 = vmatpush1.bf16.msra.mxu0 %v1355
      %1514 = vmatprep.subr.bf16.mxu0 %v1360
      %1515 = vmatpush1.bf16.msra.mxu0 %v1359
      %1516 = vmatprep.subr.bf16.mxu0 %v1364
      %1517 = vmatpush1.bf16.msra.mxu0 %v1363
      %1518 = vmatprep.subr.bf16.mxu0 %v1368
      %1519 = vmatpush1.bf16.msra.mxu0 %v1367
      %1520 = vmatprep.subr.bf16.mxu0 %v1372
      %1521 = vmatpush1.bf16.msra.mxu0 %v1371
      %1522 = vmatprep.subr.bf16.mxu0 %v1376
      %1523 = vmatpush1.bf16.msra.mxu0 %v1375
      %1524 = vmatprep.subr.bf16.mxu0 %v1380
      %1525 = vmatpush1.bf16.msra.mxu0 %v1379
      %1526 = vmatprep.subr.bf16.mxu0 %v1384
      %1527 = vmatpush1.bf16.msra.mxu0 %v1383
      %1528 = vmatprep.subr.bf16.mxu0 %v1388
      %1529 = vmatpush1.bf16.msra.mxu0 %v1387
      %1530 = vmatprep.subr.bf16.mxu0 %v1392
      %1531 = vmatpush1.bf16.msra.mxu0 %v1391
      %1532 = vmatprep.subr.bf16.mxu0 %v1396
      %1533 = vmatpush1.bf16.msra.mxu0 %v1395
      %1534 = vmatprep.mubr.bf16.mxu0 %v1138
      %1535 = vmatmul.mubr.bf16.gmra.mrb[0].mxu0 %v1137
      %v1536 = vpop.f32.mrb[0].mxu0
      %v1537 = vadd.f32 %v1125, %v1536
      %v1538 = vpop.f32.mrb[0].mxu0
      %v1539 = vadd.f32 %v1129, %v1538
      %v1540 = vpop.f32.mrb[0].mxu0
      %v1541 = vpop.f32.mrb[0].mxu0
      %1542 = vdwg.mxu0
      %v1543 = vpack.c.bf16 %v1496, %v1496
      %v1544 = vpack.c.bf16 %v1498, %v1498
      %v1545 = vpack.c.bf16 %v1537, %v1537
      %v1546 = vpack.c.bf16 %v1539, %v1539
      %v1547 = vadd.f32 %v1040, %v1041
      %1548 = vadd.xlane.f32.xlu0 %v1547
      %v1549 = vpop.xlane.xlu0 %1548
      %v1550 = vrcp.pop 256.0
      %v1551 = vmul.f32 %v1549, %v1550
      %v1552 = vsub.f32 %v1040, %v1551
      %v1553 = vsub.f32 %v1041, %v1551
      %v1554 = vmul.f32 %v1552, %v1552
      %v1555 = vmul.f32 %v1553, %v1553
      %v1556 = vadd.f32 %v1554, %v1555
      %1557 = vadd.xlane.f32.xlu0 %v1556
      %v1558 = vpop.xlane.xlu0 %1557
      %v1559 = vmul.f32 %v1558, %v1550
      %v1560 = vadd.f32 %v1559, 1e-06
      %v1561 = vrsqrt.pop %v1560
      %v1562 = vmul.f32 %v1552, %v1561
      %v1563 = vmul.f32 %v1553, %v1561
      %v1564 = vadd.f32 %v1044, 1.0
      %v1565 = vadd.f32 %v1045, 1.0
      %v1566 = vlaneseq
      %v1567 = vshrl.u32 %v1566, 7
      %v1568 = vsub.s32 1, %v1567
      %v1569 = vrot.slane %v1564, %v1568
      %v1570 = vlaneseq
      %v1571 = vshrl.u32 %v1570, 7
      %v1572 = vsub.s32 1, %v1571
      %v1573 = vrot.slane %v1565, %v1572
      %v1574 = vmul.f32 %v1562, %v1569
      %v1575 = vmul.f32 %v1563, %v1573
      %v1576 = vlaneseq
      %v1577 = vshrl.u32 %v1576, 7
      %v1578 = vsub.s32 0, %v1577
      %v1579 = vrot.slane %v1044, %v1578
      %v1580 = vlaneseq
      %v1581 = vshrl.u32 %v1580, 7
      %v1582 = vsub.s32 0, %v1581
      %v1583 = vrot.slane %v1045, %v1582
      %v1584 = vadd.f32 %v1574, %v1579
      %v1585 = vadd.f32 %v1575, %v1583
      %v1586 = vpack.c.bf16 %v1584, %v1584
      %v1587 = vpack.c.bf16 %v1585, %v1585
      %v1588 = vld [vmem:[%s968] sm:$0xff]
      %v1589 = vld [vmem:[%s968 + $0x8] sm:$0xff]
      %v1590 = vld [vmem:[%s968 + $0x10] sm:$0xff]
      %v1591 = vld [vmem:[%s968 + $0x18] sm:$0xff]
      %v1592 = vld [vmem:[%s968 + $0x20] sm:$0xff]
      %v1593 = vld [vmem:[%s968 + $0x28] sm:$0xff]
      %v1594 = vld [vmem:[%s968 + $0x30] sm:$0xff]
      %v1595 = vld [vmem:[%s968 + $0x38] sm:$0xff]
      %v1596 = vld [vmem:[%s968 + $0x40] sm:$0xff]
      %v1597 = vld [vmem:[%s968 + $0x48] sm:$0xff]
      %v1598 = vld [vmem:[%s968 + $0x50] sm:$0xff]
      %v1599 = vld [vmem:[%s968 + $0x58] sm:$0xff]
      %v1600 = vld [vmem:[%s968 + $0x60] sm:$0xff]
      %v1601 = vld [vmem:[%s968 + $0x68] sm:$0xff]
      %v1602 = vld [vmem:[%s968 + $0x70] sm:$0xff]
      %v1603 = vld [vmem:[%s968 + $0x78] sm:$0xff]
      %v1604 = vld [vmem:[%s968 + $0x80] sm:$0xff]
      %v1605 = vld [vmem:[%s968 + $0x88] sm:$0xff]
      %v1606 = vld [vmem:[%s968 + $0x90] sm:$0xff]
      %v1607 = vld [vmem:[%s968 + $0x98] sm:$0xff]
      %v1608 = vld [vmem:[%s968 + $0xa0] sm:$0xff]
      %v1609 = vld [vmem:[%s968 + $0xa8] sm:$0xff]
      %v1610 = vld [vmem:[%s968 + $0xb0] sm:$0xff]
      %v1611 = vld [vmem:[%s968 + $0xb8] sm:$0xff]
      %v1612 = vld [vmem:[%s968 + $0xc0] sm:$0xff]
      %v1613 = vld [vmem:[%s968 + $0xc8] sm:$0xff]
      %v1614 = vld [vmem:[%s968 + $0xd0] sm:$0xff]
      %v1615 = vld [vmem:[%s968 + $0xd8] sm:$0xff]
      %v1616 = vld [vmem:[%s968 + $0xe0] sm:$0xff]
      %v1617 = vld [vmem:[%s968 + $0xe8] sm:$0xff]
      %v1618 = vld [vmem:[%s968 + $0xf0] sm:$0xff]
      %v1619 = vld [vmem:[%s968 + $0xf8] sm:$0xff]
      %v1620 = vld [vmem:[%s968 + $0x100] sm:$0xff]
      %v1621 = vld [vmem:[%s968 + $0x108] sm:$0xff]
      %v1622 = vld [vmem:[%s968 + $0x110] sm:$0xff]
      %v1623 = vld [vmem:[%s968 + $0x118] sm:$0xff]
      %v1624 = vld [vmem:[%s968 + $0x120] sm:$0xff]
      %v1625 = vld [vmem:[%s968 + $0x128] sm:$0xff]
      %v1626 = vld [vmem:[%s968 + $0x130] sm:$0xff]
      %v1627 = vld [vmem:[%s968 + $0x138] sm:$0xff]
      %v1628 = vld [vmem:[%s968 + $0x140] sm:$0xff]
      %v1629 = vld [vmem:[%s968 + $0x148] sm:$0xff]
      %v1630 = vld [vmem:[%s968 + $0x150] sm:$0xff]
      %v1631 = vld [vmem:[%s968 + $0x158] sm:$0xff]
      %v1632 = vld [vmem:[%s968 + $0x160] sm:$0xff]
      %v1633 = vld [vmem:[%s968 + $0x168] sm:$0xff]
      %v1634 = vld [vmem:[%s968 + $0x170] sm:$0xff]
      %v1635 = vld [vmem:[%s968 + $0x178] sm:$0xff]
      %v1636 = vld [vmem:[%s968 + $0x180] sm:$0xff]
      %v1637 = vld [vmem:[%s968 + $0x188] sm:$0xff]
      %v1638 = vld [vmem:[%s968 + $0x190] sm:$0xff]
      %v1639 = vld [vmem:[%s968 + $0x198] sm:$0xff]
      %v1640 = vld [vmem:[%s968 + $0x1a0] sm:$0xff]
      %v1641 = vld [vmem:[%s968 + $0x1a8] sm:$0xff]
      %v1642 = vld [vmem:[%s968 + $0x1b0] sm:$0xff]
      %v1643 = vld [vmem:[%s968 + $0x1b8] sm:$0xff]
      %v1644 = vld [vmem:[%s968 + $0x1c0] sm:$0xff]
      %v1645 = vld [vmem:[%s968 + $0x1c8] sm:$0xff]
      %v1646 = vld [vmem:[%s968 + $0x1d0] sm:$0xff]
      %v1647 = vld [vmem:[%s968 + $0x1d8] sm:$0xff]
      %v1648 = vld [vmem:[%s968 + $0x1e0] sm:$0xff]
      %v1649 = vld [vmem:[%s968 + $0x1e8] sm:$0xff]
      %v1650 = vld [vmem:[%s968 + $0x1f0] sm:$0xff]
      %v1651 = vld [vmem:[%s968 + $0x1f8] sm:$0xff]
      %v1652 = vld [vmem:[%s968 + $0x200] sm:$0xff]
      %v1653 = vld [vmem:[%s968 + $0x208] sm:$0xff]
      %v1654 = vld [vmem:[%s968 + $0x210] sm:$0xff]
      %v1655 = vld [vmem:[%s968 + $0x218] sm:$0xff]
      %v1656 = vld [vmem:[%s968 + $0x220] sm:$0xff]
      %v1657 = vld [vmem:[%s968 + $0x228] sm:$0xff]
      %v1658 = vld [vmem:[%s968 + $0x230] sm:$0xff]
      %v1659 = vld [vmem:[%s968 + $0x238] sm:$0xff]
      %v1660 = vld [vmem:[%s968 + $0x240] sm:$0xff]
      %v1661 = vld [vmem:[%s968 + $0x248] sm:$0xff]
      %v1662 = vld [vmem:[%s968 + $0x250] sm:$0xff]
      %v1663 = vld [vmem:[%s968 + $0x258] sm:$0xff]
      %v1664 = vld [vmem:[%s968 + $0x260] sm:$0xff]
      %v1665 = vld [vmem:[%s968 + $0x268] sm:$0xff]
      %v1666 = vld [vmem:[%s968 + $0x270] sm:$0xff]
      %v1667 = vld [vmem:[%s968 + $0x278] sm:$0xff]
      %v1668 = vld [vmem:[%s968 + $0x280] sm:$0xff]
      %v1669 = vld [vmem:[%s968 + $0x288] sm:$0xff]
      %v1670 = vld [vmem:[%s968 + $0x290] sm:$0xff]
      %v1671 = vld [vmem:[%s968 + $0x298] sm:$0xff]
      %v1672 = vld [vmem:[%s968 + $0x2a0] sm:$0xff]
      %v1673 = vld [vmem:[%s968 + $0x2a8] sm:$0xff]
      %v1674 = vld [vmem:[%s968 + $0x2b0] sm:$0xff]
      %v1675 = vld [vmem:[%s968 + $0x2b8] sm:$0xff]
      %v1676 = vld [vmem:[%s968 + $0x2c0] sm:$0xff]
      %v1677 = vld [vmem:[%s968 + $0x2c8] sm:$0xff]
      %v1678 = vld [vmem:[%s968 + $0x2d0] sm:$0xff]
      %v1679 = vld [vmem:[%s968 + $0x2d8] sm:$0xff]
      %v1680 = vld [vmem:[%s968 + $0x2e0] sm:$0xff]
      %v1681 = vld [vmem:[%s968 + $0x2e8] sm:$0xff]
      %v1682 = vld [vmem:[%s968 + $0x2f0] sm:$0xff]
      %v1683 = vld [vmem:[%s968 + $0x2f8] sm:$0xff]
      %v1684 = vld [vmem:[%s972] sm:$0x3f]
      %v1686 = vlaneseq
      %v1687 = vshrl.u32 %v1686, 7
      %v1688 = vsub.s32 0, %v1687
      %v1689 = vrot.slane %v1684, %v1688
      %v1690 = vlaneseq
      %v1691 = vshrl.u32 %v1690, 7
      %v1692 = vsub.s32 1, %v1691
      %v1693 = vrot.slane %v1684, %v1692
      %v1694 = vlaneseq
      %v1695 = vshrl.u32 %v1694, 7
      %v1696 = vsub.s32 2, %v1695
      %v1697 = vrot.slane %v1684, %v1696
      %v1698 = vlaneseq
      %v1699 = vshrl.u32 %v1698, 7
      %v1700 = vsub.s32 3, %v1699
      %v1701 = vrot.slane %v1684, %v1700
      %v1702 = vlaneseq
      %v1703 = vshrl.u32 %v1702, 7
      %v1704 = vsub.s32 4, %v1703
      %v1705 = vrot.slane %v1684, %v1704
      %v1706 = vlaneseq
      %v1707 = vshrl.u32 %v1706, 7
      %v1708 = vsub.s32 5, %v1707
      %v1709 = vrot.slane %v1684, %v1708
      %v1812 = vunpack.c.l.b16 %v1588
      %v1813 = vunpack.c.h.b16 %v1588
      %v1814 = vunpack.c.l.b16 %v1589
      %v1815 = vunpack.c.h.b16 %v1589
      %v1816 = vunpack.c.l.b16 %v1590
      %v1817 = vunpack.c.h.b16 %v1590
      %v1818 = vunpack.c.l.b16 %v1591
      %v1819 = vunpack.c.h.b16 %v1591
      %v1820 = vunpack.c.l.b16 %v1592
      %v1821 = vunpack.c.h.b16 %v1592
      %v1822 = vunpack.c.l.b16 %v1593
      %v1823 = vunpack.c.h.b16 %v1593
      %v1824 = vunpack.c.l.b16 %v1594
      %v1825 = vunpack.c.h.b16 %v1594
      %v1826 = vunpack.c.l.b16 %v1595
      %v1827 = vunpack.c.h.b16 %v1595
      %v1828 = vunpack.c.l.b16 %v1596
      %v1829 = vunpack.c.h.b16 %v1596
      %v1830 = vunpack.c.l.b16 %v1597
      %v1831 = vunpack.c.h.b16 %v1597
      %v1832 = vunpack.c.l.b16 %v1598
      %v1833 = vunpack.c.h.b16 %v1598
      %v1834 = vunpack.c.l.b16 %v1599
      %v1835 = vunpack.c.h.b16 %v1599
      %v1836 = vunpack.c.l.b16 %v1600
      %v1837 = vunpack.c.h.b16 %v1600
      %v1838 = vunpack.c.l.b16 %v1601
      %v1839 = vunpack.c.h.b16 %v1601
      %v1840 = vunpack.c.l.b16 %v1602
      %v1841 = vunpack.c.h.b16 %v1602
      %v1842 = vunpack.c.l.b16 %v1603
      %v1843 = vunpack.c.h.b16 %v1603
      %v1844 = vunpack.c.l.b16 %v1604
      %v1845 = vunpack.c.h.b16 %v1604
      %v1846 = vunpack.c.l.b16 %v1605
      %v1847 = vunpack.c.h.b16 %v1605
      %v1848 = vunpack.c.l.b16 %v1606
      %v1849 = vunpack.c.h.b16 %v1606
      %v1850 = vunpack.c.l.b16 %v1607
      %v1851 = vunpack.c.h.b16 %v1607
      %v1852 = vunpack.c.l.b16 %v1608
      %v1853 = vunpack.c.h.b16 %v1608
      %v1854 = vunpack.c.l.b16 %v1609
      %v1855 = vunpack.c.h.b16 %v1609
      %v1856 = vunpack.c.l.b16 %v1610
      %v1857 = vunpack.c.h.b16 %v1610
      %v1858 = vunpack.c.l.b16 %v1611
      %v1859 = vunpack.c.h.b16 %v1611
      %v1860 = vunpack.c.l.b16 %v1612
      %v1861 = vunpack.c.h.b16 %v1612
      %v1862 = vunpack.c.l.b16 %v1613
      %v1863 = vunpack.c.h.b16 %v1613
      %v1864 = vunpack.c.l.b16 %v1614
      %v1865 = vunpack.c.h.b16 %v1614
      %v1866 = vunpack.c.l.b16 %v1615
      %v1867 = vunpack.c.h.b16 %v1615
      %v1868 = vunpack.c.l.b16 %v1616
      %v1869 = vunpack.c.h.b16 %v1616
      %v1870 = vunpack.c.l.b16 %v1617
      %v1871 = vunpack.c.h.b16 %v1617
      %v1872 = vunpack.c.l.b16 %v1618
      %v1873 = vunpack.c.h.b16 %v1618
      %v1874 = vunpack.c.l.b16 %v1619
      %v1875 = vunpack.c.h.b16 %v1619
      %v1876 = vunpack.c.l.b16 %v1620
      %v1877 = vunpack.c.h.b16 %v1620
      %v1878 = vunpack.c.l.b16 %v1621
      %v1879 = vunpack.c.h.b16 %v1621
      %v1880 = vunpack.c.l.b16 %v1622
      %v1881 = vunpack.c.h.b16 %v1622
      %v1882 = vunpack.c.l.b16 %v1623
      %v1883 = vunpack.c.h.b16 %v1623
      %v1884 = vunpack.c.l.b16 %v1624
      %v1885 = vunpack.c.h.b16 %v1624
      %v1886 = vunpack.c.l.b16 %v1625
      %v1887 = vunpack.c.h.b16 %v1625
      %v1888 = vunpack.c.l.b16 %v1626
      %v1889 = vunpack.c.h.b16 %v1626
      %v1890 = vunpack.c.l.b16 %v1627
      %v1891 = vunpack.c.h.b16 %v1627
      %v1892 = vunpack.c.l.b16 %v1628
      %v1893 = vunpack.c.h.b16 %v1628
      %v1894 = vunpack.c.l.b16 %v1629
      %v1895 = vunpack.c.h.b16 %v1629
      %v1896 = vunpack.c.l.b16 %v1630
      %v1897 = vunpack.c.h.b16 %v1630
      %v1898 = vunpack.c.l.b16 %v1631
      %v1899 = vunpack.c.h.b16 %v1631
      %v1900 = vunpack.c.l.b16 %v1632
      %v1901 = vunpack.c.h.b16 %v1632
      %v1902 = vunpack.c.l.b16 %v1633
      %v1903 = vunpack.c.h.b16 %v1633
      %v1904 = vunpack.c.l.b16 %v1634
      %v1905 = vunpack.c.h.b16 %v1634
      %v1906 = vunpack.c.l.b16 %v1635
      %v1907 = vunpack.c.h.b16 %v1635
      %v1908 = vunpack.c.l.b16 %v1636
      %v1909 = vunpack.c.h.b16 %v1636
      %v1910 = vunpack.c.l.b16 %v1637
      %v1911 = vunpack.c.h.b16 %v1637
      %v1912 = vunpack.c.l.b16 %v1638
      %v1913 = vunpack.c.h.b16 %v1638
      %v1914 = vunpack.c.l.b16 %v1639
      %v1915 = vunpack.c.h.b16 %v1639
      %v1916 = vunpack.c.l.b16 %v1640
      %v1917 = vunpack.c.h.b16 %v1640
      %v1918 = vunpack.c.l.b16 %v1641
      %v1919 = vunpack.c.h.b16 %v1641
      %v1920 = vunpack.c.l.b16 %v1642
      %v1921 = vunpack.c.h.b16 %v1642
      %v1922 = vunpack.c.l.b16 %v1643
      %v1923 = vunpack.c.h.b16 %v1643
      %v1924 = vunpack.c.l.b16 %v1644
      %v1925 = vunpack.c.h.b16 %v1644
      %v1926 = vunpack.c.l.b16 %v1645
      %v1927 = vunpack.c.h.b16 %v1645
      %v1928 = vunpack.c.l.b16 %v1646
      %v1929 = vunpack.c.h.b16 %v1646
      %v1930 = vunpack.c.l.b16 %v1647
      %v1931 = vunpack.c.h.b16 %v1647
      %v1932 = vunpack.c.l.b16 %v1648
      %v1933 = vunpack.c.h.b16 %v1648
      %v1934 = vunpack.c.l.b16 %v1649
      %v1935 = vunpack.c.h.b16 %v1649
      %v1936 = vunpack.c.l.b16 %v1650
      %v1937 = vunpack.c.h.b16 %v1650
      %v1938 = vunpack.c.l.b16 %v1651
      %v1939 = vunpack.c.h.b16 %v1651
      %v1940 = vunpack.c.l.b16 %v1652
      %v1941 = vunpack.c.h.b16 %v1652
      %v1942 = vunpack.c.l.b16 %v1653
      %v1943 = vunpack.c.h.b16 %v1653
      %v1944 = vunpack.c.l.b16 %v1654
      %v1945 = vunpack.c.h.b16 %v1654
      %v1946 = vunpack.c.l.b16 %v1655
      %v1947 = vunpack.c.h.b16 %v1655
      %v1948 = vunpack.c.l.b16 %v1656
      %v1949 = vunpack.c.h.b16 %v1656
      %v1950 = vunpack.c.l.b16 %v1657
      %v1951 = vunpack.c.h.b16 %v1657
      %v1952 = vunpack.c.l.b16 %v1658
      %v1953 = vunpack.c.h.b16 %v1658
      %v1954 = vunpack.c.l.b16 %v1659
      %v1955 = vunpack.c.h.b16 %v1659
      %v1956 = vunpack.c.l.b16 %v1660
      %v1957 = vunpack.c.h.b16 %v1660
      %v1958 = vunpack.c.l.b16 %v1661
      %v1959 = vunpack.c.h.b16 %v1661
      %v1960 = vunpack.c.l.b16 %v1662
      %v1961 = vunpack.c.h.b16 %v1662
      %v1962 = vunpack.c.l.b16 %v1663
      %v1963 = vunpack.c.h.b16 %v1663
      %v1964 = vunpack.c.l.b16 %v1664
      %v1965 = vunpack.c.h.b16 %v1664
      %v1966 = vunpack.c.l.b16 %v1665
      %v1967 = vunpack.c.h.b16 %v1665
      %v1968 = vunpack.c.l.b16 %v1666
      %v1969 = vunpack.c.h.b16 %v1666
      %v1970 = vunpack.c.l.b16 %v1667
      %v1971 = vunpack.c.h.b16 %v1667
      %v1972 = vunpack.c.l.b16 %v1668
      %v1973 = vunpack.c.h.b16 %v1668
      %v1974 = vunpack.c.l.b16 %v1669
      %v1975 = vunpack.c.h.b16 %v1669
      %v1976 = vunpack.c.l.b16 %v1670
      %v1977 = vunpack.c.h.b16 %v1670
      %v1978 = vunpack.c.l.b16 %v1671
      %v1979 = vunpack.c.h.b16 %v1671
      %v1980 = vunpack.c.l.b16 %v1672
      %v1981 = vunpack.c.h.b16 %v1672
      %v1982 = vunpack.c.l.b16 %v1673
      %v1983 = vunpack.c.h.b16 %v1673
      %v1984 = vunpack.c.l.b16 %v1674
      %v1985 = vunpack.c.h.b16 %v1674
      %v1986 = vunpack.c.l.b16 %v1675
      %v1987 = vunpack.c.h.b16 %v1675
      %v1988 = vunpack.c.l.b16 %v1676
      %v1989 = vunpack.c.h.b16 %v1676
      %v1990 = vunpack.c.l.b16 %v1677
      %v1991 = vunpack.c.h.b16 %v1677
      %v1992 = vunpack.c.l.b16 %v1678
      %v1993 = vunpack.c.h.b16 %v1678
      %v1994 = vunpack.c.l.b16 %v1679
      %v1995 = vunpack.c.h.b16 %v1679
      %v1996 = vunpack.c.l.b16 %v1680
      %v1997 = vunpack.c.h.b16 %v1680
      %v1998 = vunpack.c.l.b16 %v1681
      %v1999 = vunpack.c.h.b16 %v1681
      %v2000 = vunpack.c.l.b16 %v1682
      %v2001 = vunpack.c.h.b16 %v1682
      %v2002 = vunpack.c.l.b16 %v1683
      %v2003 = vunpack.c.h.b16 %v1683
      %v2004 = vpack.c.b16 %v1818, %v1812
      %v2005 = vpack.c.b16 %v1819, %v1813
      %v2006 = vpack.c.b16 %v1820, %v1814
      %v2007 = vpack.c.b16 %v1821, %v1815
      %v2008 = vpack.c.b16 %v1822, %v1816
      %v2009 = vpack.c.b16 %v1823, %v1817
      %v2010 = vpack.c.b16 %v1830, %v1824
      %v2011 = vpack.c.b16 %v1831, %v1825
      %v2012 = vpack.c.b16 %v1832, %v1826
      %v2013 = vpack.c.b16 %v1833, %v1827
      %v2014 = vpack.c.b16 %v1834, %v1828
      %v2015 = vpack.c.b16 %v1835, %v1829
      %v2016 = vpack.c.b16 %v1842, %v1836
      %v2017 = vpack.c.b16 %v1843, %v1837
      %v2018 = vpack.c.b16 %v1844, %v1838
      %v2019 = vpack.c.b16 %v1845, %v1839
      %v2020 = vpack.c.b16 %v1846, %v1840
      %v2021 = vpack.c.b16 %v1847, %v1841
      %v2022 = vpack.c.b16 %v1854, %v1848
      %v2023 = vpack.c.b16 %v1855, %v1849
      %v2024 = vpack.c.b16 %v1856, %v1850
      %v2025 = vpack.c.b16 %v1857, %v1851
      %v2026 = vpack.c.b16 %v1858, %v1852
      %v2027 = vpack.c.b16 %v1859, %v1853
      %v2028 = vpack.c.b16 %v1866, %v1860
      %v2029 = vpack.c.b16 %v1867, %v1861
      %v2030 = vpack.c.b16 %v1868, %v1862
      %v2031 = vpack.c.b16 %v1869, %v1863
      %v2032 = vpack.c.b16 %v1870, %v1864
      %v2033 = vpack.c.b16 %v1871, %v1865
      %v2034 = vpack.c.b16 %v1878, %v1872
      %v2035 = vpack.c.b16 %v1879, %v1873
      %v2036 = vpack.c.b16 %v1880, %v1874
      %v2037 = vpack.c.b16 %v1881, %v1875
      %v2038 = vpack.c.b16 %v1882, %v1876
      %v2039 = vpack.c.b16 %v1883, %v1877
      %v2040 = vpack.c.b16 %v1890, %v1884
      %v2041 = vpack.c.b16 %v1891, %v1885
      %v2042 = vpack.c.b16 %v1892, %v1886
      %v2043 = vpack.c.b16 %v1893, %v1887
      %v2044 = vpack.c.b16 %v1894, %v1888
      %v2045 = vpack.c.b16 %v1895, %v1889
      %v2046 = vpack.c.b16 %v1902, %v1896
      %v2047 = vpack.c.b16 %v1903, %v1897
      %v2048 = vpack.c.b16 %v1904, %v1898
      %v2049 = vpack.c.b16 %v1905, %v1899
      %v2050 = vpack.c.b16 %v1906, %v1900
      %v2051 = vpack.c.b16 %v1907, %v1901
      %v2052 = vpack.c.b16 %v1914, %v1908
      %v2053 = vpack.c.b16 %v1915, %v1909
      %v2054 = vpack.c.b16 %v1916, %v1910
      %v2055 = vpack.c.b16 %v1917, %v1911
      %v2056 = vpack.c.b16 %v1918, %v1912
      %v2057 = vpack.c.b16 %v1919, %v1913
      %v2058 = vpack.c.b16 %v1926, %v1920
      %v2059 = vpack.c.b16 %v1927, %v1921
      %v2060 = vpack.c.b16 %v1928, %v1922
      %v2061 = vpack.c.b16 %v1929, %v1923
      %v2062 = vpack.c.b16 %v1930, %v1924
      %v2063 = vpack.c.b16 %v1931, %v1925
      %v2064 = vpack.c.b16 %v1938, %v1932
      %v2065 = vpack.c.b16 %v1939, %v1933
      %v2066 = vpack.c.b16 %v1940, %v1934
      %v2067 = vpack.c.b16 %v1941, %v1935
      %v2068 = vpack.c.b16 %v1942, %v1936
      %v2069 = vpack.c.b16 %v1943, %v1937
      %v2070 = vpack.c.b16 %v1950, %v1944
      %v2071 = vpack.c.b16 %v1951, %v1945
      %v2072 = vpack.c.b16 %v1952, %v1946
      %v2073 = vpack.c.b16 %v1953, %v1947
      %v2074 = vpack.c.b16 %v1954, %v1948
      %v2075 = vpack.c.b16 %v1955, %v1949
      %v2076 = vpack.c.b16 %v1962, %v1956
      %v2077 = vpack.c.b16 %v1963, %v1957
      %v2078 = vpack.c.b16 %v1964, %v1958
      %v2079 = vpack.c.b16 %v1965, %v1959
      %v2080 = vpack.c.b16 %v1966, %v1960
      %v2081 = vpack.c.b16 %v1967, %v1961
      %v2082 = vpack.c.b16 %v1974, %v1968
      %v2083 = vpack.c.b16 %v1975, %v1969
      %v2084 = vpack.c.b16 %v1976, %v1970
      %v2085 = vpack.c.b16 %v1977, %v1971
      %v2086 = vpack.c.b16 %v1978, %v1972
      %v2087 = vpack.c.b16 %v1979, %v1973
      %v2088 = vpack.c.b16 %v1986, %v1980
      %v2089 = vpack.c.b16 %v1987, %v1981
      %v2090 = vpack.c.b16 %v1988, %v1982
      %v2091 = vpack.c.b16 %v1989, %v1983
      %v2092 = vpack.c.b16 %v1990, %v1984
      %v2093 = vpack.c.b16 %v1991, %v1985
      %v2094 = vpack.c.b16 %v1998, %v1992
      %v2095 = vpack.c.b16 %v1999, %v1993
      %v2096 = vpack.c.b16 %v2000, %v1994
      %v2097 = vpack.c.b16 %v2001, %v1995
      %v2098 = vpack.c.b16 %v2002, %v1996
      %v2099 = vpack.c.b16 %v2003, %v1997
      %2196 = vmatprep.subr.bf16.mxu0 %v2005
      %2197 = vmatpush1.bf16.msra.mxu0 %v2004
      %2198 = vmatprep.subr.bf16.mxu0 %v2011
      %2199 = vmatpush1.bf16.msra.mxu0 %v2010
      %2200 = vmatprep.subr.bf16.mxu0 %v2017
      %2201 = vmatpush1.bf16.msra.mxu0 %v2016
      %2202 = vmatprep.subr.bf16.mxu0 %v2023
      %2203 = vmatpush1.bf16.msra.mxu0 %v2022
      %2204 = vmatprep.subr.bf16.mxu0 %v2029
      %2205 = vmatpush1.bf16.msra.mxu0 %v2028
      %2206 = vmatprep.subr.bf16.mxu0 %v2035
      %2207 = vmatpush1.bf16.msra.mxu0 %v2034
      %2208 = vmatprep.subr.bf16.mxu0 %v2041
      %2209 = vmatpush1.bf16.msra.mxu0 %v2040
      %2210 = vmatprep.subr.bf16.mxu0 %v2047
      %2211 = vmatpush1.bf16.msra.mxu0 %v2046
      %2212 = vmatprep.subr.bf16.mxu0 %v2053
      %2213 = vmatpush1.bf16.msra.mxu0 %v2052
      %2214 = vmatprep.subr.bf16.mxu0 %v2059
      %2215 = vmatpush1.bf16.msra.mxu0 %v2058
      %2216 = vmatprep.subr.bf16.mxu0 %v2065
      %2217 = vmatpush1.bf16.msra.mxu0 %v2064
      %2218 = vmatprep.subr.bf16.mxu0 %v2071
      %2219 = vmatpush1.bf16.msra.mxu0 %v2070
      %2220 = vmatprep.subr.bf16.mxu0 %v2077
      %2221 = vmatpush1.bf16.msra.mxu0 %v2076
      %2222 = vmatprep.subr.bf16.mxu0 %v2083
      %2223 = vmatpush1.bf16.msra.mxu0 %v2082
      %2224 = vmatprep.subr.bf16.mxu0 %v2089
      %2225 = vmatpush1.bf16.msra.mxu0 %v2088
      %2226 = vmatprep.subr.bf16.mxu0 %v2095
      %2227 = vmatpush1.bf16.msra.mxu0 %v2094
      %2228 = vmatprep.mubr.bf16.mxu0 %v1587
      %2229 = vmatmul.mubr.bf16.gmra.mrb[0].mxu0 %v1586
      %v2230 = vpop.f32.mrb[0].mxu0
      %v2231 = vadd.f32 %v1689, %v2230
      %v2232 = vpop.f32.mrb[0].mxu0
      %v2233 = vadd.f32 %v1693, %v2232
      %v2234 = vpop.f32.mrb[0].mxu0
      %v2235 = vpop.f32.mrb[0].mxu0
      %2236 = vdwg.mxu0
      %2237 = vmatprep.subr.bf16.mxu0 %v2007
      %2238 = vmatpush1.bf16.msra.mxu0 %v2006
      %2239 = vmatprep.subr.bf16.mxu0 %v2013
      %2240 = vmatpush1.bf16.msra.mxu0 %v2012
      %2241 = vmatprep.subr.bf16.mxu0 %v2019
      %2242 = vmatpush1.bf16.msra.mxu0 %v2018
      %2243 = vmatprep.subr.bf16.mxu0 %v2025
      %2244 = vmatpush1.bf16.msra.mxu0 %v2024
      %2245 = vmatprep.subr.bf16.mxu0 %v2031
      %2246 = vmatpush1.bf16.msra.mxu0 %v2030
      %2247 = vmatprep.subr.bf16.mxu0 %v2037
      %2248 = vmatpush1.bf16.msra.mxu0 %v2036
      %2249 = vmatprep.subr.bf16.mxu0 %v2043
      %2250 = vmatpush1.bf16.msra.mxu0 %v2042
      %2251 = vmatprep.subr.bf16.mxu0 %v2049
      %2252 = vmatpush1.bf16.msra.mxu0 %v2048
      %2253 = vmatprep.subr.bf16.mxu0 %v2055
      %2254 = vmatpush1.bf16.msra.mxu0 %v2054
      %2255 = vmatprep.subr.bf16.mxu0 %v2061
      %2256 = vmatpush1.bf16.msra.mxu0 %v2060
      %2257 = vmatprep.subr.bf16.mxu0 %v2067
      %2258 = vmatpush1.bf16.msra.mxu0 %v2066
      %2259 = vmatprep.subr.bf16.mxu0 %v2073
      %2260 = vmatpush1.bf16.msra.mxu0 %v2072
      %2261 = vmatprep.subr.bf16.mxu0 %v2079
      %2262 = vmatpush1.bf16.msra.mxu0 %v2078
      %2263 = vmatprep.subr.bf16.mxu0 %v2085
      %2264 = vmatpush1.bf16.msra.mxu0 %v2084
      %2265 = vmatprep.subr.bf16.mxu0 %v2091
      %2266 = vmatpush1.bf16.msra.mxu0 %v2090
      %2267 = vmatprep.subr.bf16.mxu0 %v2097
      %2268 = vmatpush1.bf16.msra.mxu0 %v2096
      %2269 = vmatprep.mubr.bf16.mxu0 %v1587
      %2270 = vmatmul.mubr.bf16.gmra.mrb[0].mxu0 %v1586
      %v2271 = vpop.f32.mrb[0].mxu0
      %v2272 = vadd.f32 %v1697, %v2271
      %v2273 = vpop.f32.mrb[0].mxu0
      %v2274 = vadd.f32 %v1701, %v2273
      %v2275 = vpop.f32.mrb[0].mxu0
      %v2276 = vpop.f32.mrb[0].mxu0
      %2277 = vdwg.mxu0
      %2278 = vmatprep.subr.bf16.mxu0 %v2009
      %2279 = vmatpush1.bf16.msra.mxu0 %v2008
      %2280 = vmatprep.subr.bf16.mxu0 %v2015
      %2281 = vmatpush1.bf16.msra.mxu0 %v2014
      %2282 = vmatprep.subr.bf16.mxu0 %v2021
      %2283 = vmatpush1.bf16.msra.mxu0 %v2020
      %2284 = vmatprep.subr.bf16.mxu0 %v2027
      %2285 = vmatpush1.bf16.msra.mxu0 %v2026
      %2286 = vmatprep.subr.bf16.mxu0 %v2033
      %2287 = vmatpush1.bf16.msra.mxu0 %v2032
      %2288 = vmatprep.subr.bf16.mxu0 %v2039
      %2289 = vmatpush1.bf16.msra.mxu0 %v2038
      %2290 = vmatprep.subr.bf16.mxu0 %v2045
      %2291 = vmatpush1.bf16.msra.mxu0 %v2044
      %2292 = vmatprep.subr.bf16.mxu0 %v2051
      %2293 = vmatpush1.bf16.msra.mxu0 %v2050
      %2294 = vmatprep.subr.bf16.mxu0 %v2057
      %2295 = vmatpush1.bf16.msra.mxu0 %v2056
      %2296 = vmatprep.subr.bf16.mxu0 %v2063
      %2297 = vmatpush1.bf16.msra.mxu0 %v2062
      %2298 = vmatprep.subr.bf16.mxu0 %v2069
      %2299 = vmatpush1.bf16.msra.mxu0 %v2068
      %2300 = vmatprep.subr.bf16.mxu0 %v2075
      %2301 = vmatpush1.bf16.msra.mxu0 %v2074
      %2302 = vmatprep.subr.bf16.mxu0 %v2081
      %2303 = vmatpush1.bf16.msra.mxu0 %v2080
      %2304 = vmatprep.subr.bf16.mxu0 %v2087
      %2305 = vmatpush1.bf16.msra.mxu0 %v2086
      %2306 = vmatprep.subr.bf16.mxu0 %v2093
      %2307 = vmatpush1.bf16.msra.mxu0 %v2092
      %2308 = vmatprep.subr.bf16.mxu0 %v2099
      %2309 = vmatpush1.bf16.msra.mxu0 %v2098
      %2310 = vmatprep.mubr.bf16.mxu0 %v1587
      %2311 = vmatmul.mubr.bf16.gmra.mrb[0].mxu0 %v1586
      %v2312 = vpop.f32.mrb[0].mxu0
      %v2313 = vadd.f32 %v1705, %v2312
      %v2314 = vpop.f32.mrb[0].mxu0
      %v2315 = vadd.f32 %v1709, %v2314
      %v2316 = vpop.f32.mrb[0].mxu0
      %v2317 = vpop.f32.mrb[0].mxu0
      %2318 = vdwg.mxu0
      %v2319 = vpack.c.bf16 %v2231, %v2231
      %v2320 = vpack.c.bf16 %v2233, %v2233
      %v2321 = vpack.c.bf16 %v2272, %v2272
      %v2322 = vpack.c.bf16 %v2274, %v2274
      %v2323 = vpack.c.bf16 %v2313, %v2313
      %v2324 = vpack.c.bf16 %v2315, %v2315
      %2325 = vmatprep.subr.bf16.mxu0 0
      %2326 = vmatpush1.bf16.xpose.msra.mxu0 %v2321
      %2327 = vmatprep.subr.bf16.mxu0 0
      %2328 = vmatpush1.bf16.xpose.msra.mxu0 0
      %2329 = vmatprep.subr.bf16.mxu0 0
      %2330 = vmatpush1.bf16.xpose.msra.mxu0 0
      %2331 = vmatprep.subr.bf16.mxu0 0
      %2332 = vmatpush1.bf16.xpose.msra.mxu0 0
      %2333 = vmatprep.subr.bf16.mxu0 0
      %2334 = vmatpush1.bf16.xpose.msra.mxu0 0
      %2335 = vmatprep.subr.bf16.mxu0 0
      %2336 = vmatpush1.bf16.xpose.msra.mxu0 0
      %2337 = vmatprep.subr.bf16.mxu0 0
      %2338 = vmatpush1.bf16.xpose.msra.mxu0 0
      %2339 = vmatprep.subr.bf16.mxu0 0
      %2340 = vmatpush1.bf16.xpose.msra.mxu0 0
      %2341 = vmatprep.subr.bf16.mxu0 0
      %2342 = vmatpush1.bf16.xpose.msra.mxu0 0
      %2343 = vmatprep.subr.bf16.mxu0 0
      %2344 = vmatpush1.bf16.xpose.msra.mxu0 0
      %2345 = vmatprep.subr.bf16.mxu0 0
      %2346 = vmatpush1.bf16.xpose.msra.mxu0 0
      %2347 = vmatprep.subr.bf16.mxu0 0
      %2348 = vmatpush1.bf16.xpose.msra.mxu0 0
      %2349 = vmatprep.subr.bf16.mxu0 0
      %2350 = vmatpush1.bf16.xpose.msra.mxu0 0
      %2351 = vmatprep.subr.bf16.mxu0 0
      %2352 = vmatpush1.bf16.xpose.msra.mxu0 0
      %2353 = vmatprep.subr.bf16.mxu0 0
      %2354 = vmatpush1.bf16.xpose.msra.mxu0 0
      %2355 = vmatprep.subr.bf16.mxu0 0
      %2356 = vmatpush1.bf16.xpose.msra.mxu0 0
      %2357 = vmatprep.mubr.bf16.mxu0 0
      %2358 = vmatmul.mubr.bf16.gmra.mrb[0].mxu0 %v2319
      %v2359 = vpop.f32.mrb[0].mxu0
      %v2360 = vadd.f32 0.0, %v2359
      %v2361 = vpop.f32.mrb[0].mxu0
      %v2362 = vpop.f32.mrb[0].mxu0
      %v2363 = vpop.f32.mrb[0].mxu0
      %2364 = vdwg.mxu0
      %vm2365 = vcmask 64512
      %v2366 = vsel %vm2365, %v2360, -inf
      %2367 = vmax.xlane.f32.xlu0 %v2366
      %v2368 = vpop.xlane.xlu0 %2367
      %v2369 = vsub.f32 %v2360, %v2368
      %v2370 = vmul.f32 %v2369, 1.442695
      %v2371 = vpow.pop %v2370
      %v2372 = vsel %vm2365, %v2371, 0.0
      %2373 = vadd.xlane.f32.xlu0 %v2372
      %v2374 = vpop.xlane.xlu0 %2373
      %v2375 = vrcp.pop %v2374
      %v2376 = vmul.f32 %v2371, %v2375
      %v2377 = vpack.c.bf16 %v2376, %v2376
      %v2379 = vsel %vm2365, %v2377, 0
      %vm2381 = vcmask 1043456
      %v2383 = vsel %vm2381, %v2323, 0
      %2385 = vmatprep.subr.bf16.mxu0 0
      %2386 = vmatpush1.bf16.msra.mxu0 %v2383
      %2387 = vmatprep.subr.bf16.mxu0 0
      %2388 = vmatpush1.bf16.msra.mxu0 0
      %2389 = vmatprep.subr.bf16.mxu0 0
      %2390 = vmatpush1.bf16.msra.mxu0 0
      %2391 = vmatprep.subr.bf16.mxu0 0
      %2392 = vmatpush1.bf16.msra.mxu0 0
      %2393 = vmatprep.subr.bf16.mxu0 0
      %2394 = vmatpush1.bf16.msra.mxu0 0
      %2395 = vmatprep.subr.bf16.mxu0 0
      %2396 = vmatpush1.bf16.msra.mxu0 0
      %2397 = vmatprep.subr.bf16.mxu0 0
      %2398 = vmatpush1.bf16.msra.mxu0 0
      %2399 = vmatprep.subr.bf16.mxu0 0
      %2400 = vmatpush1.bf16.msra.mxu0 0
      %2401 = vmatprep.subr.bf16.mxu0 0
      %2402 = vmatpush1.bf16.msra.mxu0 0
      %2403 = vmatprep.subr.bf16.mxu0 0
      %2404 = vmatpush1.bf16.msra.mxu0 0
      %2405 = vmatprep.subr.bf16.mxu0 0
      %2406 = vmatpush1.bf16.msra.mxu0 0
      %2407 = vmatprep.subr.bf16.mxu0 0
      %2408 = vmatpush1.bf16.msra.mxu0 0
      %2409 = vmatprep.subr.bf16.mxu0 0
      %2410 = vmatpush1.bf16.msra.mxu0 0
      %2411 = vmatprep.subr.bf16.mxu0 0
      %2412 = vmatpush1.bf16.msra.mxu0 0
      %2413 = vmatprep.subr.bf16.mxu0 0
      %2414 = vmatpush1.bf16.msra.mxu0 0
      %2415 = vmatprep.subr.bf16.mxu0 0
      %2416 = vmatpush1.bf16.msra.mxu0 0
      %2417 = vmatprep.mubr.bf16.mxu0 0
      %2418 = vmatmul.mubr.bf16.gmra.mrb[0].mxu0 %v2379
      %v2419 = vpop.f32.mrb[0].mxu0
      %v2420 = vadd.f32 0.0, %v2419
      %v2421 = vpop.f32.mrb[0].mxu0
      %v2422 = vpop.f32.mrb[0].mxu0
      %v2423 = vpop.f32.mrb[0].mxu0
      %2424 = vdwg.mxu0
      %v2425 = vpack.c.bf16 %v2420, %v2420
      %v2426 = vld [vmem:[%s977] sm:$0xff]
      %v2427 = vld [vmem:[%s977 + $0x8] sm:$0xff]
      %v2428 = vld [vmem:[%s977 + $0x10] sm:$0xff]
      %v2429 = vld [vmem:[%s977 + $0x18] sm:$0xff]
      %v2430 = vld [vmem:[%s977 + $0x20] sm:$0xff]
      %v2431 = vld [vmem:[%s977 + $0x28] sm:$0xff]
      %v2432 = vld [vmem:[%s977 + $0x30] sm:$0xff]
      %v2433 = vld [vmem:[%s977 + $0x38] sm:$0xff]
      %v2434 = vld [vmem:[%s977 + $0x40] sm:$0xff]
      %v2435 = vld [vmem:[%s977 + $0x48] sm:$0xff]
      %v2436 = vld [vmem:[%s977 + $0x50] sm:$0xff]
      %v2437 = vld [vmem:[%s977 + $0x58] sm:$0xff]
      %v2438 = vld [vmem:[%s977 + $0x60] sm:$0xff]
      %v2439 = vld [vmem:[%s977 + $0x68] sm:$0xff]
      %v2440 = vld [vmem:[%s977 + $0x70] sm:$0xff]
      %v2441 = vld [vmem:[%s977 + $0x78] sm:$0xff]
      %2442 = vmatprep.subr.bf16.mxu0 0
      %2443 = vmatpush1.bf16.xpose.msra.mxu0 %v2322
      %2444 = vmatprep.subr.bf16.mxu0 0
      %2445 = vmatpush1.bf16.xpose.msra.mxu0 0
      %2446 = vmatprep.subr.bf16.mxu0 0
      %2447 = vmatpush1.bf16.xpose.msra.mxu0 0
      %2448 = vmatprep.subr.bf16.mxu0 0
      %2449 = vmatpush1.bf16.xpose.msra.mxu0 0
      %2450 = vmatprep.subr.bf16.mxu0 0
      %2451 = vmatpush1.bf16.xpose.msra.mxu0 0
      %2452 = vmatprep.subr.bf16.mxu0 0
      %2453 = vmatpush1.bf16.xpose.msra.mxu0 0
      %2454 = vmatprep.subr.bf16.mxu0 0
      %2455 = vmatpush1.bf16.xpose.msra.mxu0 0
      %2456 = vmatprep.subr.bf16.mxu0 0
      %2457 = vmatpush1.bf16.xpose.msra.mxu0 0
      %2458 = vmatprep.subr.bf16.mxu0 0
      %2459 = vmatpush1.bf16.xpose.msra.mxu0 0
      %2460 = vmatprep.subr.bf16.mxu0 0
      %2461 = vmatpush1.bf16.xpose.msra.mxu0 0
      %2462 = vmatprep.subr.bf16.mxu0 0
      %2463 = vmatpush1.bf16.xpose.msra.mxu0 0
      %2464 = vmatprep.subr.bf16.mxu0 0
      %2465 = vmatpush1.bf16.xpose.msra.mxu0 0
      %2466 = vmatprep.subr.bf16.mxu0 0
      %2467 = vmatpush1.bf16.xpose.msra.mxu0 0
      %2468 = vmatprep.subr.bf16.mxu0 0
      %2469 = vmatpush1.bf16.xpose.msra.mxu0 0
      %2470 = vmatprep.subr.bf16.mxu0 0
      %2471 = vmatpush1.bf16.xpose.msra.mxu0 0
      %2472 = vmatprep.subr.bf16.mxu0 0
      %2473 = vmatpush1.bf16.xpose.msra.mxu0 0
      %2474 = vmatprep.mubr.bf16.mxu0 0
      %2475 = vmatmul.mubr.bf16.gmra.mrb[0].mxu0 %v2320
      %v2476 = vpop.f32.mrb[0].mxu0
      %v2477 = vadd.f32 0.0, %v2476
      %v2478 = vpop.f32.mrb[0].mxu0
      %v2479 = vpop.f32.mrb[0].mxu0
      %v2480 = vpop.f32.mrb[0].mxu0
      %2481 = vdwg.mxu0
      %v2482 = vsel %vm2365, %v2477, -inf
      %2483 = vmax.xlane.f32.xlu0 %v2482
      %v2484 = vpop.xlane.xlu0 %2483
      %v2485 = vsub.f32 %v2477, %v2484
      %v2486 = vmul.f32 %v2485, 1.442695
      %v2487 = vpow.pop %v2486
      %v2488 = vsel %vm2365, %v2487, 0.0
      %2489 = vadd.xlane.f32.xlu0 %v2488
      %v2490 = vpop.xlane.xlu0 %2489
      %v2491 = vrcp.pop %v2490
      %v2492 = vmul.f32 %v2487, %v2491
      %v2493 = vpack.c.bf16 %v2492, %v2492
      %v2495 = vsel %vm2365, %v2493, 0
      %v2498 = vsel %vm2381, %v2324, 0
      %2500 = vmatprep.subr.bf16.mxu0 0
      %2501 = vmatpush1.bf16.msra.mxu0 %v2498
      %2502 = vmatprep.subr.bf16.mxu0 0
      %2503 = vmatpush1.bf16.msra.mxu0 0
      %2504 = vmatprep.subr.bf16.mxu0 0
      %2505 = vmatpush1.bf16.msra.mxu0 0
      %2506 = vmatprep.subr.bf16.mxu0 0
      %2507 = vmatpush1.bf16.msra.mxu0 0
      %2508 = vmatprep.subr.bf16.mxu0 0
      %2509 = vmatpush1.bf16.msra.mxu0 0
      %2510 = vmatprep.subr.bf16.mxu0 0
      %2511 = vmatpush1.bf16.msra.mxu0 0
      %2512 = vmatprep.subr.bf16.mxu0 0
      %2513 = vmatpush1.bf16.msra.mxu0 0
      %2514 = vmatprep.subr.bf16.mxu0 0
      %2515 = vmatpush1.bf16.msra.mxu0 0
      %2516 = vmatprep.subr.bf16.mxu0 0
      %2517 = vmatpush1.bf16.msra.mxu0 0
      %2518 = vmatprep.subr.bf16.mxu0 0
      %2519 = vmatpush1.bf16.msra.mxu0 0
      %2520 = vmatprep.subr.bf16.mxu0 0
      %2521 = vmatpush1.bf16.msra.mxu0 0
      %2522 = vmatprep.subr.bf16.mxu0 0
      %2523 = vmatpush1.bf16.msra.mxu0 0
      %2524 = vmatprep.subr.bf16.mxu0 0
      %2525 = vmatpush1.bf16.msra.mxu0 0
      %2526 = vmatprep.subr.bf16.mxu0 0
      %2527 = vmatpush1.bf16.msra.mxu0 0
      %2528 = vmatprep.subr.bf16.mxu0 0
      %2529 = vmatpush1.bf16.msra.mxu0 0
      %2530 = vmatprep.subr.bf16.mxu0 0
      %2531 = vmatpush1.bf16.msra.mxu0 0
      %2532 = vmatprep.mubr.bf16.mxu0 0
      %2533 = vmatmul.mubr.bf16.gmra.mrb[0].mxu0 %v2495
      %v2534 = vpop.f32.mrb[0].mxu0
      %v2535 = vadd.f32 0.0, %v2534
      %v2536 = vpop.f32.mrb[0].mxu0
      %v2537 = vpop.f32.mrb[0].mxu0
      %v2538 = vpop.f32.mrb[0].mxu0
      %2539 = vdwg.mxu0
      %v2540 = vpack.c.bf16 %v2535, %v2535
      %s2541 = scalar_lea.vmem %s977, 128
      %v2542 = vld [vmem:[%s2541] sm:$0xff]
      %v2543 = vld [vmem:[%s2541 + $0x8] sm:$0xff]
      %v2544 = vld [vmem:[%s2541 + $0x10] sm:$0xff]
      %v2545 = vld [vmem:[%s2541 + $0x18] sm:$0xff]
      %v2546 = vld [vmem:[%s2541 + $0x20] sm:$0xff]
      %v2547 = vld [vmem:[%s2541 + $0x28] sm:$0xff]
      %v2548 = vld [vmem:[%s2541 + $0x30] sm:$0xff]
      %v2549 = vld [vmem:[%s2541 + $0x38] sm:$0xff]
      %v2550 = vld [vmem:[%s2541 + $0x40] sm:$0xff]
      %v2551 = vld [vmem:[%s2541 + $0x48] sm:$0xff]
      %v2552 = vld [vmem:[%s2541 + $0x50] sm:$0xff]
      %v2553 = vld [vmem:[%s2541 + $0x58] sm:$0xff]
      %v2554 = vld [vmem:[%s2541 + $0x60] sm:$0xff]
      %v2555 = vld [vmem:[%s2541 + $0x68] sm:$0xff]
      %v2556 = vld [vmem:[%s2541 + $0x70] sm:$0xff]
      %v2557 = vld [vmem:[%s2541 + $0x78] sm:$0xff]
      %v2574 = vunpack.c.l.b16 %v2542
      %v2575 = vunpack.c.h.b16 %v2542
      %v2576 = vunpack.c.l.b16 %v2543
      %v2577 = vunpack.c.h.b16 %v2543
      %v2578 = vunpack.c.l.b16 %v2544
      %v2579 = vunpack.c.h.b16 %v2544
      %v2580 = vunpack.c.l.b16 %v2545
      %v2581 = vunpack.c.h.b16 %v2545
      %v2582 = vunpack.c.l.b16 %v2546
      %v2583 = vunpack.c.h.b16 %v2546
      %v2584 = vunpack.c.l.b16 %v2547
      %v2585 = vunpack.c.h.b16 %v2547
      %v2586 = vunpack.c.l.b16 %v2548
      %v2587 = vunpack.c.h.b16 %v2548
      %v2588 = vunpack.c.l.b16 %v2549
      %v2589 = vunpack.c.h.b16 %v2549
      %v2590 = vunpack.c.l.b16 %v2550
      %v2591 = vunpack.c.h.b16 %v2550
      %v2592 = vunpack.c.l.b16 %v2551
      %v2593 = vunpack.c.h.b16 %v2551
      %v2594 = vunpack.c.l.b16 %v2552
      %v2595 = vunpack.c.h.b16 %v2552
      %v2596 = vunpack.c.l.b16 %v2553
      %v2597 = vunpack.c.h.b16 %v2553
      %v2598 = vunpack.c.l.b16 %v2554
      %v2599 = vunpack.c.h.b16 %v2554
      %v2600 = vunpack.c.l.b16 %v2555
      %v2601 = vunpack.c.h.b16 %v2555
      %v2602 = vunpack.c.l.b16 %v2556
      %v2603 = vunpack.c.h.b16 %v2556
      %v2604 = vunpack.c.l.b16 %v2557
      %v2605 = vunpack.c.h.b16 %v2557
      %v2606 = vpack.c.b16 %v2576, %v2574
      %v2607 = vpack.c.b16 %v2577, %v2575
      %v2608 = vpack.c.b16 %v2580, %v2578
      %v2609 = vpack.c.b16 %v2581, %v2579
      %v2610 = vpack.c.b16 %v2584, %v2582
      %v2611 = vpack.c.b16 %v2585, %v2583
      %v2612 = vpack.c.b16 %v2588, %v2586
      %v2613 = vpack.c.b16 %v2589, %v2587
      %v2614 = vpack.c.b16 %v2592, %v2590
      %v2615 = vpack.c.b16 %v2593, %v2591
      %v2616 = vpack.c.b16 %v2596, %v2594
      %v2617 = vpack.c.b16 %v2597, %v2595
      %v2618 = vpack.c.b16 %v2600, %v2598
      %v2619 = vpack.c.b16 %v2601, %v2599
      %v2620 = vpack.c.b16 %v2604, %v2602
      %v2621 = vpack.c.b16 %v2605, %v2603
      %2638 = vmatprep.subr.bf16.mxu0 %v2607
      %2639 = vmatpush1.bf16.msra.mxu0 %v2606
      %2640 = vmatprep.subr.bf16.mxu0 %v2609
      %2641 = vmatpush1.bf16.msra.mxu0 %v2608
      %2642 = vmatprep.subr.bf16.mxu0 %v2611
      %2643 = vmatpush1.bf16.msra.mxu0 %v2610
      %2644 = vmatprep.subr.bf16.mxu0 %v2613
      %2645 = vmatpush1.bf16.msra.mxu0 %v2612
      %2646 = vmatprep.subr.bf16.mxu0 %v2615
      %2647 = vmatpush1.bf16.msra.mxu0 %v2614
      %2648 = vmatprep.subr.bf16.mxu0 %v2617
      %2649 = vmatpush1.bf16.msra.mxu0 %v2616
      %2650 = vmatprep.subr.bf16.mxu0 %v2619
      %2651 = vmatpush1.bf16.msra.mxu0 %v2618
      %2652 = vmatprep.subr.bf16.mxu0 %v2621
      %2653 = vmatpush1.bf16.msra.mxu0 %v2620
      %2654 = vmatprep.subr.bf16.mxu0 0
      %2655 = vmatpush1.bf16.msra.mxu0 0
      %2656 = vmatprep.subr.bf16.mxu0 0
      %2657 = vmatpush1.bf16.msra.mxu0 0
      %2658 = vmatprep.subr.bf16.mxu0 0
      %2659 = vmatpush1.bf16.msra.mxu0 0
      %2660 = vmatprep.subr.bf16.mxu0 0
      %2661 = vmatpush1.bf16.msra.mxu0 0
      %2662 = vmatprep.subr.bf16.mxu0 0
      %2663 = vmatpush1.bf16.msra.mxu0 0
      %2664 = vmatprep.subr.bf16.mxu0 0
      %2665 = vmatpush1.bf16.msra.mxu0 0
      %2666 = vmatprep.subr.bf16.mxu0 0
      %2667 = vmatpush1.bf16.msra.mxu0 0
      %2668 = vmatprep.subr.bf16.mxu0 0
      %2669 = vmatpush1.bf16.msra.mxu0 0
      %2670 = vmatprep.mubr.bf16.mxu0 0
      %2671 = vmatmul.mubr.bf16.gmra.mrb[0].mxu0 %v2540
      %v2672 = vpop.f32.mrb[0].mxu0
      %v2673 = vadd.f32 0.0, %v2672
      %v2674 = vpop.f32.mrb[0].mxu0
      %v2675 = vadd.f32 0.0, %v2674
      %v2676 = vpop.f32.mrb[0].mxu0
      %v2677 = vpop.f32.mrb[0].mxu0
      %2678 = vdwg.mxu0
      %v2695 = vunpack.c.l.b16 %v2426
      %v2696 = vunpack.c.h.b16 %v2426
      %v2697 = vunpack.c.l.b16 %v2427
      %v2698 = vunpack.c.h.b16 %v2427
      %v2699 = vunpack.c.l.b16 %v2428
      %v2700 = vunpack.c.h.b16 %v2428
      %v2701 = vunpack.c.l.b16 %v2429
      %v2702 = vunpack.c.h.b16 %v2429
      %v2703 = vunpack.c.l.b16 %v2430
      %v2704 = vunpack.c.h.b16 %v2430
      %v2705 = vunpack.c.l.b16 %v2431
      %v2706 = vunpack.c.h.b16 %v2431
      %v2707 = vunpack.c.l.b16 %v2432
      %v2708 = vunpack.c.h.b16 %v2432
      %v2709 = vunpack.c.l.b16 %v2433
      %v2710 = vunpack.c.h.b16 %v2433
      %v2711 = vunpack.c.l.b16 %v2434
      %v2712 = vunpack.c.h.b16 %v2434
      %v2713 = vunpack.c.l.b16 %v2435
      %v2714 = vunpack.c.h.b16 %v2435
      %v2715 = vunpack.c.l.b16 %v2436
      %v2716 = vunpack.c.h.b16 %v2436
      %v2717 = vunpack.c.l.b16 %v2437
      %v2718 = vunpack.c.h.b16 %v2437
      %v2719 = vunpack.c.l.b16 %v2438
      %v2720 = vunpack.c.h.b16 %v2438
      %v2721 = vunpack.c.l.b16 %v2439
      %v2722 = vunpack.c.h.b16 %v2439
      %v2723 = vunpack.c.l.b16 %v2440
      %v2724 = vunpack.c.h.b16 %v2440
      %v2725 = vunpack.c.l.b16 %v2441
      %v2726 = vunpack.c.h.b16 %v2441
      %v2727 = vpack.c.b16 %v2697, %v2695
      %v2728 = vpack.c.b16 %v2698, %v2696
      %v2729 = vpack.c.b16 %v2701, %v2699
      %v2730 = vpack.c.b16 %v2702, %v2700
      %v2731 = vpack.c.b16 %v2705, %v2703
      %v2732 = vpack.c.b16 %v2706, %v2704
      %v2733 = vpack.c.b16 %v2709, %v2707
      %v2734 = vpack.c.b16 %v2710, %v2708
      %v2735 = vpack.c.b16 %v2713, %v2711
      %v2736 = vpack.c.b16 %v2714, %v2712
      %v2737 = vpack.c.b16 %v2717, %v2715
      %v2738 = vpack.c.b16 %v2718, %v2716
      %v2739 = vpack.c.b16 %v2721, %v2719
      %v2740 = vpack.c.b16 %v2722, %v2720
      %v2741 = vpack.c.b16 %v2725, %v2723
      %v2742 = vpack.c.b16 %v2726, %v2724
      %2759 = vmatprep.subr.bf16.mxu0 %v2728
      %2760 = vmatpush1.bf16.msra.mxu0 %v2727
      %2761 = vmatprep.subr.bf16.mxu0 %v2730
      %2762 = vmatpush1.bf16.msra.mxu0 %v2729
      %2763 = vmatprep.subr.bf16.mxu0 %v2732
      %2764 = vmatpush1.bf16.msra.mxu0 %v2731
      %2765 = vmatprep.subr.bf16.mxu0 %v2734
      %2766 = vmatpush1.bf16.msra.mxu0 %v2733
      %2767 = vmatprep.subr.bf16.mxu0 %v2736
      %2768 = vmatpush1.bf16.msra.mxu0 %v2735
      %2769 = vmatprep.subr.bf16.mxu0 %v2738
      %2770 = vmatpush1.bf16.msra.mxu0 %v2737
      %2771 = vmatprep.subr.bf16.mxu0 %v2740
      %2772 = vmatpush1.bf16.msra.mxu0 %v2739
      %2773 = vmatprep.subr.bf16.mxu0 %v2742
      %2774 = vmatpush1.bf16.msra.mxu0 %v2741
      %2775 = vmatprep.subr.bf16.mxu0 0
      %2776 = vmatpush1.bf16.msra.mxu0 0
      %2777 = vmatprep.subr.bf16.mxu0 0
      %2778 = vmatpush1.bf16.msra.mxu0 0
      %2779 = vmatprep.subr.bf16.mxu0 0
      %2780 = vmatpush1.bf16.msra.mxu0 0
      %2781 = vmatprep.subr.bf16.mxu0 0
      %2782 = vmatpush1.bf16.msra.mxu0 0
      %2783 = vmatprep.subr.bf16.mxu0 0
      %2784 = vmatpush1.bf16.msra.mxu0 0
      %2785 = vmatprep.subr.bf16.mxu0 0
      %2786 = vmatpush1.bf16.msra.mxu0 0
      %2787 = vmatprep.subr.bf16.mxu0 0
      %2788 = vmatpush1.bf16.msra.mxu0 0
      %2789 = vmatprep.subr.bf16.mxu0 0
      %2790 = vmatpush1.bf16.msra.mxu0 0
      %2791 = vmatprep.mubr.bf16.mxu0 0
      %2792 = vmatmul.mubr.bf16.gmra.mrb[0].mxu0 %v2425
      %v2793 = vpop.f32.mrb[0].mxu0
      %v2794 = vadd.f32 %v2673, %v2793
      %v2795 = vpop.f32.mrb[0].mxu0
      %v2796 = vadd.f32 %v2675, %v2795
      %v2797 = vpop.f32.mrb[0].mxu0
      %v2798 = vpop.f32.mrb[0].mxu0
      %2799 = vdwg.mxu0
      %v2800 = vld [vmem:[%s981] sm:$0x3]
      %v2802 = vlaneseq
      %v2803 = vshrl.u32 %v2802, 7
      %v2804 = vsub.s32 0, %v2803
      %v2805 = vrot.slane %v2800, %v2804
      %v2806 = vlaneseq
      %v2807 = vshrl.u32 %v2806, 7
      %v2808 = vsub.s32 1, %v2807
      %v2809 = vrot.slane %v2800, %v2808
      %v2812 = vadd.f32 %v2794, %v2805
      %v2813 = vadd.f32 %v2796, %v2809
      %v2814 = vlaneseq
      %v2815 = vshrl.u32 %v2814, 7
      %v2816 = vsub.s32 2, %v2815
      %v2817 = vrot.slane %v1044, %v2816
      %v2818 = vlaneseq
      %v2819 = vshrl.u32 %v2818, 7
      %v2820 = vsub.s32 2, %v2819
      %v2821 = vrot.slane %v1045, %v2820
      %v2822 = vmul.f32 %v2817, %v2812
      %v2823 = vmul.f32 %v2821, %v2813
      %v2824 = vadd.f32 %v1040, %v2822
      %v2825 = vadd.f32 %v1041, %v2823
      %v2826 = vadd.f32 %v2824, %v2825
      %2827 = vadd.xlane.f32.xlu0 %v2826
      %v2828 = vpop.xlane.xlu0 %2827
      %v2829 = vmul.f32 %v2828, %v1550
      %v2830 = vsub.f32 %v2824, %v2829
      %v2831 = vsub.f32 %v2825, %v2829
      %v2832 = vmul.f32 %v2830, %v2830
      %v2833 = vmul.f32 %v2831, %v2831
      %v2834 = vadd.f32 %v2832, %v2833
      %2835 = vadd.xlane.f32.xlu0 %v2834
      %v2836 = vpop.xlane.xlu0 %2835
      %v2837 = vmul.f32 %v2836, %v1550
      %v2838 = vadd.f32 %v2837, 1e-06
      %v2839 = vrsqrt.pop %v2838
      %v2840 = vmul.f32 %v2830, %v2839
      %v2841 = vmul.f32 %v2831, %v2839
      %v2842 = vadd.f32 %v1047, 1.0
      %v2844 = vlaneseq
      %v2845 = vshrl.u32 %v2844, 7
      %v2846 = vsub.s32 1, %v2845
      %v2847 = vrot.slane %v2842, %v2846
      %v2848 = vlaneseq
      %v2849 = vshrl.u32 %v2848, 7
      %v2850 = vsub.s32 5, %v2849
      %v2851 = vrot.slane %v2842, %v2850
      %v2854 = vlaneseq
      %v2855 = vshrl.u32 %v2854, 7
      %v2856 = vsub.s32 1, %v2855
      %v2857 = vrot.slane %v2847, %v2856
      %v2858 = vlaneseq
      %v2859 = vshrl.u32 %v2858, 7
      %v2860 = vsub.s32 1, %v2859
      %v2861 = vrot.slane %v2851, %v2860
      %v2862 = vmul.f32 %v2840, %v2857
      %v2863 = vmul.f32 %v2841, %v2861
      %v2865 = vlaneseq
      %v2866 = vshrl.u32 %v2865, 7
      %v2867 = vsub.s32 0, %v2866
      %v2868 = vrot.slane %v1047, %v2867
      %v2869 = vlaneseq
      %v2870 = vshrl.u32 %v2869, 7
      %v2871 = vsub.s32 4, %v2870
      %v2872 = vrot.slane %v1047, %v2871
      %v2875 = vlaneseq
      %v2876 = vshrl.u32 %v2875, 7
      %v2877 = vsub.s32 0, %v2876
      %v2878 = vrot.slane %v2868, %v2877
      %v2879 = vlaneseq
      %v2880 = vshrl.u32 %v2879, 7
      %v2881 = vsub.s32 0, %v2880
      %v2882 = vrot.slane %v2872, %v2881
      %v2883 = vadd.f32 %v2862, %v2878
      %v2884 = vadd.f32 %v2863, %v2882
      %v2885 = vpack.c.bf16 %v2883, %v2883
      %v2886 = vpack.c.bf16 %v2884, %v2884
      %v2887 = vld [vmem:[%s986] sm:$0xff]
      %v2888 = vld [vmem:[%s986 + $0x8] sm:$0xff]
      %v2889 = vld [vmem:[%s986 + $0x10] sm:$0xff]
      %v2890 = vld [vmem:[%s986 + $0x18] sm:$0xff]
      %v2891 = vld [vmem:[%s986 + $0x20] sm:$0xff]
      %v2892 = vld [vmem:[%s986 + $0x28] sm:$0xff]
      %v2893 = vld [vmem:[%s986 + $0x30] sm:$0xff]
      %v2894 = vld [vmem:[%s986 + $0x38] sm:$0xff]
      %v2895 = vld [vmem:[%s986 + $0x40] sm:$0xff]
      %v2896 = vld [vmem:[%s986 + $0x48] sm:$0xff]
      %v2897 = vld [vmem:[%s986 + $0x50] sm:$0xff]
      %v2898 = vld [vmem:[%s986 + $0x58] sm:$0xff]
      %v2899 = vld [vmem:[%s986 + $0x60] sm:$0xff]
      %v2900 = vld [vmem:[%s986 + $0x68] sm:$0xff]
      %v2901 = vld [vmem:[%s986 + $0x70] sm:$0xff]
      %v2902 = vld [vmem:[%s986 + $0x78] sm:$0xff]
      %v2903 = vld [vmem:[%s986 + $0x80] sm:$0xff]
      %v2904 = vld [vmem:[%s986 + $0x88] sm:$0xff]
      %v2905 = vld [vmem:[%s986 + $0x90] sm:$0xff]
      %v2906 = vld [vmem:[%s986 + $0x98] sm:$0xff]
      %v2907 = vld [vmem:[%s986 + $0xa0] sm:$0xff]
      %v2908 = vld [vmem:[%s986 + $0xa8] sm:$0xff]
      %v2909 = vld [vmem:[%s986 + $0xb0] sm:$0xff]
      %v2910 = vld [vmem:[%s986 + $0xb8] sm:$0xff]
      %v2911 = vld [vmem:[%s986 + $0xc0] sm:$0xff]
      %v2912 = vld [vmem:[%s986 + $0xc8] sm:$0xff]
      %v2913 = vld [vmem:[%s986 + $0xd0] sm:$0xff]
      %v2914 = vld [vmem:[%s986 + $0xd8] sm:$0xff]
      %v2915 = vld [vmem:[%s986 + $0xe0] sm:$0xff]
      %v2916 = vld [vmem:[%s986 + $0xe8] sm:$0xff]
      %v2917 = vld [vmem:[%s986 + $0xf0] sm:$0xff]
      %v2918 = vld [vmem:[%s986 + $0xf8] sm:$0xff]
      %v2919 = vld [vmem:[%s990] sm:$0x3]
      %v2921 = vlaneseq
      %v2922 = vshrl.u32 %v2921, 7
      %v2923 = vsub.s32 0, %v2922
      %v2924 = vrot.slane %v2919, %v2923
      %v2925 = vlaneseq
      %v2926 = vshrl.u32 %v2925, 7
      %v2927 = vsub.s32 1, %v2926
      %v2928 = vrot.slane %v2919, %v2927
      %v2963 = vunpack.c.l.b16 %v2887
      %v2964 = vunpack.c.h.b16 %v2887
      %v2965 = vunpack.c.l.b16 %v2888
      %v2966 = vunpack.c.h.b16 %v2888
      %v2967 = vunpack.c.l.b16 %v2889
      %v2968 = vunpack.c.h.b16 %v2889
      %v2969 = vunpack.c.l.b16 %v2890
      %v2970 = vunpack.c.h.b16 %v2890
      %v2971 = vunpack.c.l.b16 %v2891
      %v2972 = vunpack.c.h.b16 %v2891
      %v2973 = vunpack.c.l.b16 %v2892
      %v2974 = vunpack.c.h.b16 %v2892
      %v2975 = vunpack.c.l.b16 %v2893
      %v2976 = vunpack.c.h.b16 %v2893
      %v2977 = vunpack.c.l.b16 %v2894
      %v2978 = vunpack.c.h.b16 %v2894
      %v2979 = vunpack.c.l.b16 %v2895
      %v2980 = vunpack.c.h.b16 %v2895
      %v2981 = vunpack.c.l.b16 %v2896
      %v2982 = vunpack.c.h.b16 %v2896
      %v2983 = vunpack.c.l.b16 %v2897
      %v2984 = vunpack.c.h.b16 %v2897
      %v2985 = vunpack.c.l.b16 %v2898
      %v2986 = vunpack.c.h.b16 %v2898
      %v2987 = vunpack.c.l.b16 %v2899
      %v2988 = vunpack.c.h.b16 %v2899
      %v2989 = vunpack.c.l.b16 %v2900
      %v2990 = vunpack.c.h.b16 %v2900
      %v2991 = vunpack.c.l.b16 %v2901
      %v2992 = vunpack.c.h.b16 %v2901
      %v2993 = vunpack.c.l.b16 %v2902
      %v2994 = vunpack.c.h.b16 %v2902
      %v2995 = vunpack.c.l.b16 %v2903
      %v2996 = vunpack.c.h.b16 %v2903
      %v2997 = vunpack.c.l.b16 %v2904
      %v2998 = vunpack.c.h.b16 %v2904
      %v2999 = vunpack.c.l.b16 %v2905
      %v3000 = vunpack.c.h.b16 %v2905
      %v3001 = vunpack.c.l.b16 %v2906
      %v3002 = vunpack.c.h.b16 %v2906
      %v3003 = vunpack.c.l.b16 %v2907
      %v3004 = vunpack.c.h.b16 %v2907
      %v3005 = vunpack.c.l.b16 %v2908
      %v3006 = vunpack.c.h.b16 %v2908
      %v3007 = vunpack.c.l.b16 %v2909
      %v3008 = vunpack.c.h.b16 %v2909
      %v3009 = vunpack.c.l.b16 %v2910
      %v3010 = vunpack.c.h.b16 %v2910
      %v3011 = vunpack.c.l.b16 %v2911
      %v3012 = vunpack.c.h.b16 %v2911
      %v3013 = vunpack.c.l.b16 %v2912
      %v3014 = vunpack.c.h.b16 %v2912
      %v3015 = vunpack.c.l.b16 %v2913
      %v3016 = vunpack.c.h.b16 %v2913
      %v3017 = vunpack.c.l.b16 %v2914
      %v3018 = vunpack.c.h.b16 %v2914
      %v3019 = vunpack.c.l.b16 %v2915
      %v3020 = vunpack.c.h.b16 %v2915
      %v3021 = vunpack.c.l.b16 %v2916
      %v3022 = vunpack.c.h.b16 %v2916
      %v3023 = vunpack.c.l.b16 %v2917
      %v3024 = vunpack.c.h.b16 %v2917
      %v3025 = vunpack.c.l.b16 %v2918
      %v3026 = vunpack.c.h.b16 %v2918
      %v3027 = vpack.c.b16 %v2965, %v2963
      %v3028 = vpack.c.b16 %v2966, %v2964
      %v3029 = vpack.c.b16 %v2969, %v2967
      %v3030 = vpack.c.b16 %v2970, %v2968
      %v3031 = vpack.c.b16 %v2973, %v2971
      %v3032 = vpack.c.b16 %v2974, %v2972
      %v3033 = vpack.c.b16 %v2977, %v2975
      %v3034 = vpack.c.b16 %v2978, %v2976
      %v3035 = vpack.c.b16 %v2981, %v2979
      %v3036 = vpack.c.b16 %v2982, %v2980
      %v3037 = vpack.c.b16 %v2985, %v2983
      %v3038 = vpack.c.b16 %v2986, %v2984
      %v3039 = vpack.c.b16 %v2989, %v2987
      %v3040 = vpack.c.b16 %v2990, %v2988
      %v3041 = vpack.c.b16 %v2993, %v2991
      %v3042 = vpack.c.b16 %v2994, %v2992
      %v3043 = vpack.c.b16 %v2997, %v2995
      %v3044 = vpack.c.b16 %v2998, %v2996
      %v3045 = vpack.c.b16 %v3001, %v2999
      %v3046 = vpack.c.b16 %v3002, %v3000
      %v3047 = vpack.c.b16 %v3005, %v3003
      %v3048 = vpack.c.b16 %v3006, %v3004
      %v3049 = vpack.c.b16 %v3009, %v3007
      %v3050 = vpack.c.b16 %v3010, %v3008
      %v3051 = vpack.c.b16 %v3013, %v3011
      %v3052 = vpack.c.b16 %v3014, %v3012
      %v3053 = vpack.c.b16 %v3017, %v3015
      %v3054 = vpack.c.b16 %v3018, %v3016
      %v3055 = vpack.c.b16 %v3021, %v3019
      %v3056 = vpack.c.b16 %v3022, %v3020
      %v3057 = vpack.c.b16 %v3025, %v3023
      %v3058 = vpack.c.b16 %v3026, %v3024
      %3091 = vmatprep.subr.bf16.mxu0 %v3028
      %3092 = vmatpush1.bf16.msra.mxu0 %v3027
      %3093 = vmatprep.subr.bf16.mxu0 %v3030
      %3094 = vmatpush1.bf16.msra.mxu0 %v3029
      %3095 = vmatprep.subr.bf16.mxu0 %v3032
      %3096 = vmatpush1.bf16.msra.mxu0 %v3031
      %3097 = vmatprep.subr.bf16.mxu0 %v3034
      %3098 = vmatpush1.bf16.msra.mxu0 %v3033
      %3099 = vmatprep.subr.bf16.mxu0 %v3036
      %3100 = vmatpush1.bf16.msra.mxu0 %v3035
      %3101 = vmatprep.subr.bf16.mxu0 %v3038
      %3102 = vmatpush1.bf16.msra.mxu0 %v3037
      %3103 = vmatprep.subr.bf16.mxu0 %v3040
      %3104 = vmatpush1.bf16.msra.mxu0 %v3039
      %3105 = vmatprep.subr.bf16.mxu0 %v3042
      %3106 = vmatpush1.bf16.msra.mxu0 %v3041
      %3107 = vmatprep.subr.bf16.mxu0 %v3044
      %3108 = vmatpush1.bf16.msra.mxu0 %v3043
      %3109 = vmatprep.subr.bf16.mxu0 %v3046
      %3110 = vmatpush1.bf16.msra.mxu0 %v3045
      %3111 = vmatprep.subr.bf16.mxu0 %v3048
      %3112 = vmatpush1.bf16.msra.mxu0 %v3047
      %3113 = vmatprep.subr.bf16.mxu0 %v3050
      %3114 = vmatpush1.bf16.msra.mxu0 %v3049
      %3115 = vmatprep.subr.bf16.mxu0 %v3052
      %3116 = vmatpush1.bf16.msra.mxu0 %v3051
      %3117 = vmatprep.subr.bf16.mxu0 %v3054
      %3118 = vmatpush1.bf16.msra.mxu0 %v3053
      %3119 = vmatprep.subr.bf16.mxu0 %v3056
      %3120 = vmatpush1.bf16.msra.mxu0 %v3055
      %3121 = vmatprep.subr.bf16.mxu0 %v3058
      %3122 = vmatpush1.bf16.msra.mxu0 %v3057
      %3123 = vmatprep.mubr.bf16.mxu0 %v2886
      %3124 = vmatmul.mubr.bf16.gmra.mrb[0].mxu0 %v2885
      %v3125 = vpop.f32.mrb[0].mxu0
      %v3126 = vadd.f32 %v2924, %v3125
      %v3127 = vpop.f32.mrb[0].mxu0
      %v3128 = vadd.f32 %v2928, %v3127
      %v3129 = vpop.f32.mrb[0].mxu0
      %v3130 = vpop.f32.mrb[0].mxu0
      %3131 = vdwg.mxu0
      %v3132 = vpack.c.bf16 %v3126, %v3126
      %v3133 = vpack.c.bf16 %v3128, %v3128
      %3134 = vmatprep.subr.bf16.mxu0 0
      %3135 = vmatpush1.bf16.xpose.msra.mxu0 %v1543
      %3136 = vmatprep.subr.bf16.mxu0 0
      %3137 = vmatpush1.bf16.xpose.msra.mxu0 0
      %3138 = vmatprep.subr.bf16.mxu0 0
      %3139 = vmatpush1.bf16.xpose.msra.mxu0 0
      %3140 = vmatprep.subr.bf16.mxu0 0
      %3141 = vmatpush1.bf16.xpose.msra.mxu0 0
      %3142 = vmatprep.subr.bf16.mxu0 0
      %3143 = vmatpush1.bf16.xpose.msra.mxu0 0
      %3144 = vmatprep.subr.bf16.mxu0 0
      %3145 = vmatpush1.bf16.xpose.msra.mxu0 0
      %3146 = vmatprep.subr.bf16.mxu0 0
      %3147 = vmatpush1.bf16.xpose.msra.mxu0 0
      %3148 = vmatprep.subr.bf16.mxu0 0
      %3149 = vmatpush1.bf16.xpose.msra.mxu0 0
      %3150 = vmatprep.subr.bf16.mxu0 0
      %3151 = vmatpush1.bf16.xpose.msra.mxu0 0
      %3152 = vmatprep.subr.bf16.mxu0 0
      %3153 = vmatpush1.bf16.xpose.msra.mxu0 0
      %3154 = vmatprep.subr.bf16.mxu0 0
      %3155 = vmatpush1.bf16.xpose.msra.mxu0 0
      %3156 = vmatprep.subr.bf16.mxu0 0
      %3157 = vmatpush1.bf16.xpose.msra.mxu0 0
      %3158 = vmatprep.subr.bf16.mxu0 0
      %3159 = vmatpush1.bf16.xpose.msra.mxu0 0
      %3160 = vmatprep.subr.bf16.mxu0 0
      %3161 = vmatpush1.bf16.xpose.msra.mxu0 0
      %3162 = vmatprep.subr.bf16.mxu0 0
      %3163 = vmatpush1.bf16.xpose.msra.mxu0 0
      %3164 = vmatprep.subr.bf16.mxu0 0
      %3165 = vmatpush1.bf16.xpose.msra.mxu0 0
      %3166 = vmatprep.mubr.bf16.mxu0 0
      %3167 = vmatmul.mubr.bf16.gmra.mrb[0].mxu0 %v3132
      %v3168 = vpop.f32.mrb[0].mxu0
      %v3169 = vadd.f32 0.0, %v3168
      %v3170 = vpop.f32.mrb[0].mxu0
      %v3171 = vpop.f32.mrb[0].mxu0
      %v3172 = vpop.f32.mrb[0].mxu0
      %3173 = vdwg.mxu0
      %v3174 = vsel %vm2365, %v3169, -inf
      %3175 = vmax.xlane.f32.xlu0 %v3174
      %v3176 = vpop.xlane.xlu0 %3175
      %v3177 = vsub.f32 %v3169, %v3176
      %v3178 = vmul.f32 %v3177, 1.442695
      %v3179 = vpow.pop %v3178
      %v3180 = vsel %vm2365, %v3179, 0.0
      %3181 = vadd.xlane.f32.xlu0 %v3180
      %v3182 = vpop.xlane.xlu0 %3181
      %v3183 = vrcp.pop %v3182
      %v3184 = vmul.f32 %v3179, %v3183
      %v3185 = vpack.c.bf16 %v3184, %v3184
      %v3187 = vsel %vm2365, %v3185, 0
      %v3190 = vsel %vm2381, %v1545, 0
      %3192 = vmatprep.subr.bf16.mxu0 0
      %3193 = vmatpush1.bf16.msra.mxu0 %v3190
      %3194 = vmatprep.subr.bf16.mxu0 0
      %3195 = vmatpush1.bf16.msra.mxu0 0
      %3196 = vmatprep.subr.bf16.mxu0 0
      %3197 = vmatpush1.bf16.msra.mxu0 0
      %3198 = vmatprep.subr.bf16.mxu0 0
      %3199 = vmatpush1.bf16.msra.mxu0 0
      %3200 = vmatprep.subr.bf16.mxu0 0
      %3201 = vmatpush1.bf16.msra.mxu0 0
      %3202 = vmatprep.subr.bf16.mxu0 0
      %3203 = vmatpush1.bf16.msra.mxu0 0
      %3204 = vmatprep.subr.bf16.mxu0 0
      %3205 = vmatpush1.bf16.msra.mxu0 0
      %3206 = vmatprep.subr.bf16.mxu0 0
      %3207 = vmatpush1.bf16.msra.mxu0 0
      %3208 = vmatprep.subr.bf16.mxu0 0
      %3209 = vmatpush1.bf16.msra.mxu0 0
      %3210 = vmatprep.subr.bf16.mxu0 0
      %3211 = vmatpush1.bf16.msra.mxu0 0
      %3212 = vmatprep.subr.bf16.mxu0 0
      %3213 = vmatpush1.bf16.msra.mxu0 0
      %3214 = vmatprep.subr.bf16.mxu0 0
      %3215 = vmatpush1.bf16.msra.mxu0 0
      %3216 = vmatprep.subr.bf16.mxu0 0
      %3217 = vmatpush1.bf16.msra.mxu0 0
      %3218 = vmatprep.subr.bf16.mxu0 0
      %3219 = vmatpush1.bf16.msra.mxu0 0
      %3220 = vmatprep.subr.bf16.mxu0 0
      %3221 = vmatpush1.bf16.msra.mxu0 0
      %3222 = vmatprep.subr.bf16.mxu0 0
      %3223 = vmatpush1.bf16.msra.mxu0 0
      %3224 = vmatprep.mubr.bf16.mxu0 0
      %3225 = vmatmul.mubr.bf16.gmra.mrb[0].mxu0 %v3187
      %v3226 = vpop.f32.mrb[0].mxu0
      %v3227 = vadd.f32 0.0, %v3226
      %v3228 = vpop.f32.mrb[0].mxu0
      %v3229 = vpop.f32.mrb[0].mxu0
      %v3230 = vpop.f32.mrb[0].mxu0
      %3231 = vdwg.mxu0
      %v3232 = vpack.c.bf16 %v3227, %v3227
      %v3233 = vld [vmem:[%s1004] sm:$0xff]
      %v3234 = vld [vmem:[%s1004 + $0x8] sm:$0xff]
      %v3235 = vld [vmem:[%s1004 + $0x10] sm:$0xff]
      %v3236 = vld [vmem:[%s1004 + $0x18] sm:$0xff]
      %v3237 = vld [vmem:[%s1004 + $0x20] sm:$0xff]
      %v3238 = vld [vmem:[%s1004 + $0x28] sm:$0xff]
      %v3239 = vld [vmem:[%s1004 + $0x30] sm:$0xff]
      %v3240 = vld [vmem:[%s1004 + $0x38] sm:$0xff]
      %v3241 = vld [vmem:[%s1004 + $0x40] sm:$0xff]
      %v3242 = vld [vmem:[%s1004 + $0x48] sm:$0xff]
      %v3243 = vld [vmem:[%s1004 + $0x50] sm:$0xff]
      %v3244 = vld [vmem:[%s1004 + $0x58] sm:$0xff]
      %v3245 = vld [vmem:[%s1004 + $0x60] sm:$0xff]
      %v3246 = vld [vmem:[%s1004 + $0x68] sm:$0xff]
      %v3247 = vld [vmem:[%s1004 + $0x70] sm:$0xff]
      %v3248 = vld [vmem:[%s1004 + $0x78] sm:$0xff]
      %3249 = vmatprep.subr.bf16.mxu0 0
      %3250 = vmatpush1.bf16.xpose.msra.mxu0 %v1544
      %3251 = vmatprep.subr.bf16.mxu0 0
      %3252 = vmatpush1.bf16.xpose.msra.mxu0 0
      %3253 = vmatprep.subr.bf16.mxu0 0
      %3254 = vmatpush1.bf16.xpose.msra.mxu0 0
      %3255 = vmatprep.subr.bf16.mxu0 0
      %3256 = vmatpush1.bf16.xpose.msra.mxu0 0
      %3257 = vmatprep.subr.bf16.mxu0 0
      %3258 = vmatpush1.bf16.xpose.msra.mxu0 0
      %3259 = vmatprep.subr.bf16.mxu0 0
      %3260 = vmatpush1.bf16.xpose.msra.mxu0 0
      %3261 = vmatprep.subr.bf16.mxu0 0
      %3262 = vmatpush1.bf16.xpose.msra.mxu0 0
      %3263 = vmatprep.subr.bf16.mxu0 0
      %3264 = vmatpush1.bf16.xpose.msra.mxu0 0
      %3265 = vmatprep.subr.bf16.mxu0 0
      %3266 = vmatpush1.bf16.xpose.msra.mxu0 0
      %3267 = vmatprep.subr.bf16.mxu0 0
      %3268 = vmatpush1.bf16.xpose.msra.mxu0 0
      %3269 = vmatprep.subr.bf16.mxu0 0
      %3270 = vmatpush1.bf16.xpose.msra.mxu0 0
      %3271 = vmatprep.subr.bf16.mxu0 0
      %3272 = vmatpush1.bf16.xpose.msra.mxu0 0
      %3273 = vmatprep.subr.bf16.mxu0 0
      %3274 = vmatpush1.bf16.xpose.msra.mxu0 0
      %3275 = vmatprep.subr.bf16.mxu0 0
      %3276 = vmatpush1.bf16.xpose.msra.mxu0 0
      %3277 = vmatprep.subr.bf16.mxu0 0
      %3278 = vmatpush1.bf16.xpose.msra.mxu0 0
      %3279 = vmatprep.subr.bf16.mxu0 0
      %3280 = vmatpush1.bf16.xpose.msra.mxu0 0
      %3281 = vmatprep.mubr.bf16.mxu0 0
      %3282 = vmatmul.mubr.bf16.gmra.mrb[0].mxu0 %v3133
      %v3283 = vpop.f32.mrb[0].mxu0
      %v3284 = vadd.f32 0.0, %v3283
      %v3285 = vpop.f32.mrb[0].mxu0
      %v3286 = vpop.f32.mrb[0].mxu0
      %v3287 = vpop.f32.mrb[0].mxu0
      %3288 = vdwg.mxu0
      %v3289 = vsel %vm2365, %v3284, -inf
      %3290 = vmax.xlane.f32.xlu0 %v3289
      %v3291 = vpop.xlane.xlu0 %3290
      %v3292 = vsub.f32 %v3284, %v3291
      %v3293 = vmul.f32 %v3292, 1.442695
      %v3294 = vpow.pop %v3293
      %v3295 = vsel %vm2365, %v3294, 0.0
      %3296 = vadd.xlane.f32.xlu0 %v3295
      %v3297 = vpop.xlane.xlu0 %3296
      %v3298 = vrcp.pop %v3297
      %v3299 = vmul.f32 %v3294, %v3298
      %v3300 = vpack.c.bf16 %v3299, %v3299
      %v3302 = vsel %vm2365, %v3300, 0
      %v3305 = vsel %vm2381, %v1546, 0
      %3307 = vmatprep.subr.bf16.mxu0 0
      %3308 = vmatpush1.bf16.msra.mxu0 %v3305
      %3309 = vmatprep.subr.bf16.mxu0 0
      %3310 = vmatpush1.bf16.msra.mxu0 0
      %3311 = vmatprep.subr.bf16.mxu0 0
      %3312 = vmatpush1.bf16.msra.mxu0 0
      %3313 = vmatprep.subr.bf16.mxu0 0
      %3314 = vmatpush1.bf16.msra.mxu0 0
      %3315 = vmatprep.subr.bf16.mxu0 0
      %3316 = vmatpush1.bf16.msra.mxu0 0
      %3317 = vmatprep.subr.bf16.mxu0 0
      %3318 = vmatpush1.bf16.msra.mxu0 0
      %3319 = vmatprep.subr.bf16.mxu0 0
      %3320 = vmatpush1.bf16.msra.mxu0 0
      %3321 = vmatprep.subr.bf16.mxu0 0
      %3322 = vmatpush1.bf16.msra.mxu0 0
      %3323 = vmatprep.subr.bf16.mxu0 0
      %3324 = vmatpush1.bf16.msra.mxu0 0
      %3325 = vmatprep.subr.bf16.mxu0 0
      %3326 = vmatpush1.bf16.msra.mxu0 0
      %3327 = vmatprep.subr.bf16.mxu0 0
      %3328 = vmatpush1.bf16.msra.mxu0 0
      %3329 = vmatprep.subr.bf16.mxu0 0
      %3330 = vmatpush1.bf16.msra.mxu0 0
      %3331 = vmatprep.subr.bf16.mxu0 0
      %3332 = vmatpush1.bf16.msra.mxu0 0
      %3333 = vmatprep.subr.bf16.mxu0 0
      %3334 = vmatpush1.bf16.msra.mxu0 0
      %3335 = vmatprep.subr.bf16.mxu0 0
      %3336 = vmatpush1.bf16.msra.mxu0 0
      %3337 = vmatprep.subr.bf16.mxu0 0
      %3338 = vmatpush1.bf16.msra.mxu0 0
      %3339 = vmatprep.mubr.bf16.mxu0 0
      %3340 = vmatmul.mubr.bf16.gmra.mrb[0].mxu0 %v3302
      %v3341 = vpop.f32.mrb[0].mxu0
      %v3342 = vadd.f32 0.0, %v3341
      %v3343 = vpop.f32.mrb[0].mxu0
      %v3344 = vpop.f32.mrb[0].mxu0
      %v3345 = vpop.f32.mrb[0].mxu0
      %3346 = vdwg.mxu0
      %v3347 = vpack.c.bf16 %v3342, %v3342
      %s3348 = scalar_lea.vmem %s1004, 128
      %v3349 = vld [vmem:[%s3348] sm:$0xff]
      %v3350 = vld [vmem:[%s3348 + $0x8] sm:$0xff]
      %v3351 = vld [vmem:[%s3348 + $0x10] sm:$0xff]
      %v3352 = vld [vmem:[%s3348 + $0x18] sm:$0xff]
      %v3353 = vld [vmem:[%s3348 + $0x20] sm:$0xff]
      %v3354 = vld [vmem:[%s3348 + $0x28] sm:$0xff]
      %v3355 = vld [vmem:[%s3348 + $0x30] sm:$0xff]
      %v3356 = vld [vmem:[%s3348 + $0x38] sm:$0xff]
      %v3357 = vld [vmem:[%s3348 + $0x40] sm:$0xff]
      %v3358 = vld [vmem:[%s3348 + $0x48] sm:$0xff]
      %v3359 = vld [vmem:[%s3348 + $0x50] sm:$0xff]
      %v3360 = vld [vmem:[%s3348 + $0x58] sm:$0xff]
      %v3361 = vld [vmem:[%s3348 + $0x60] sm:$0xff]
      %v3362 = vld [vmem:[%s3348 + $0x68] sm:$0xff]
      %v3363 = vld [vmem:[%s3348 + $0x70] sm:$0xff]
      %v3364 = vld [vmem:[%s3348 + $0x78] sm:$0xff]
      %v3381 = vunpack.c.l.b16 %v3349
      %v3382 = vunpack.c.h.b16 %v3349
      %v3383 = vunpack.c.l.b16 %v3350
      %v3384 = vunpack.c.h.b16 %v3350
      %v3385 = vunpack.c.l.b16 %v3351
      %v3386 = vunpack.c.h.b16 %v3351
      %v3387 = vunpack.c.l.b16 %v3352
      %v3388 = vunpack.c.h.b16 %v3352
      %v3389 = vunpack.c.l.b16 %v3353
      %v3390 = vunpack.c.h.b16 %v3353
      %v3391 = vunpack.c.l.b16 %v3354
      %v3392 = vunpack.c.h.b16 %v3354
      %v3393 = vunpack.c.l.b16 %v3355
      %v3394 = vunpack.c.h.b16 %v3355
      %v3395 = vunpack.c.l.b16 %v3356
      %v3396 = vunpack.c.h.b16 %v3356
      %v3397 = vunpack.c.l.b16 %v3357
      %v3398 = vunpack.c.h.b16 %v3357
      %v3399 = vunpack.c.l.b16 %v3358
      %v3400 = vunpack.c.h.b16 %v3358
      %v3401 = vunpack.c.l.b16 %v3359
      %v3402 = vunpack.c.h.b16 %v3359
      %v3403 = vunpack.c.l.b16 %v3360
      %v3404 = vunpack.c.h.b16 %v3360
      %v3405 = vunpack.c.l.b16 %v3361
      %v3406 = vunpack.c.h.b16 %v3361
      %v3407 = vunpack.c.l.b16 %v3362
      %v3408 = vunpack.c.h.b16 %v3362
      %v3409 = vunpack.c.l.b16 %v3363
      %v3410 = vunpack.c.h.b16 %v3363
      %v3411 = vunpack.c.l.b16 %v3364
      %v3412 = vunpack.c.h.b16 %v3364
      %v3413 = vpack.c.b16 %v3383, %v3381
      %v3414 = vpack.c.b16 %v3384, %v3382
      %v3415 = vpack.c.b16 %v3387, %v3385
      %v3416 = vpack.c.b16 %v3388, %v3386
      %v3417 = vpack.c.b16 %v3391, %v3389
      %v3418 = vpack.c.b16 %v3392, %v3390
      %v3419 = vpack.c.b16 %v3395, %v3393
      %v3420 = vpack.c.b16 %v3396, %v3394
      %v3421 = vpack.c.b16 %v3399, %v3397
      %v3422 = vpack.c.b16 %v3400, %v3398
      %v3423 = vpack.c.b16 %v3403, %v3401
      %v3424 = vpack.c.b16 %v3404, %v3402
      %v3425 = vpack.c.b16 %v3407, %v3405
      %v3426 = vpack.c.b16 %v3408, %v3406
      %v3427 = vpack.c.b16 %v3411, %v3409
      %v3428 = vpack.c.b16 %v3412, %v3410
      %3445 = vmatprep.subr.bf16.mxu0 %v3414
      %3446 = vmatpush1.bf16.msra.mxu0 %v3413
      %3447 = vmatprep.subr.bf16.mxu0 %v3416
      %3448 = vmatpush1.bf16.msra.mxu0 %v3415
      %3449 = vmatprep.subr.bf16.mxu0 %v3418
      %3450 = vmatpush1.bf16.msra.mxu0 %v3417
      %3451 = vmatprep.subr.bf16.mxu0 %v3420
      %3452 = vmatpush1.bf16.msra.mxu0 %v3419
      %3453 = vmatprep.subr.bf16.mxu0 %v3422
      %3454 = vmatpush1.bf16.msra.mxu0 %v3421
      %3455 = vmatprep.subr.bf16.mxu0 %v3424
      %3456 = vmatpush1.bf16.msra.mxu0 %v3423
      %3457 = vmatprep.subr.bf16.mxu0 %v3426
      %3458 = vmatpush1.bf16.msra.mxu0 %v3425
      %3459 = vmatprep.subr.bf16.mxu0 %v3428
      %3460 = vmatpush1.bf16.msra.mxu0 %v3427
      %3461 = vmatprep.subr.bf16.mxu0 0
      %3462 = vmatpush1.bf16.msra.mxu0 0
      %3463 = vmatprep.subr.bf16.mxu0 0
      %3464 = vmatpush1.bf16.msra.mxu0 0
      %3465 = vmatprep.subr.bf16.mxu0 0
      %3466 = vmatpush1.bf16.msra.mxu0 0
      %3467 = vmatprep.subr.bf16.mxu0 0
      %3468 = vmatpush1.bf16.msra.mxu0 0
      %3469 = vmatprep.subr.bf16.mxu0 0
      %3470 = vmatpush1.bf16.msra.mxu0 0
      %3471 = vmatprep.subr.bf16.mxu0 0
      %3472 = vmatpush1.bf16.msra.mxu0 0
      %3473 = vmatprep.subr.bf16.mxu0 0
      %3474 = vmatpush1.bf16.msra.mxu0 0
      %3475 = vmatprep.subr.bf16.mxu0 0
      %3476 = vmatpush1.bf16.msra.mxu0 0
      %3477 = vmatprep.mubr.bf16.mxu0 0
      %3478 = vmatmul.mubr.bf16.gmra.mrb[0].mxu0 %v3347
      %v3479 = vpop.f32.mrb[0].mxu0
      %v3480 = vadd.f32 0.0, %v3479
      %v3481 = vpop.f32.mrb[0].mxu0
      %v3482 = vadd.f32 0.0, %v3481
      %v3483 = vpop.f32.mrb[0].mxu0
      %v3484 = vpop.f32.mrb[0].mxu0
      %3485 = vdwg.mxu0
      %v3502 = vunpack.c.l.b16 %v3233
      %v3503 = vunpack.c.h.b16 %v3233
      %v3504 = vunpack.c.l.b16 %v3234
      %v3505 = vunpack.c.h.b16 %v3234
      %v3506 = vunpack.c.l.b16 %v3235
      %v3507 = vunpack.c.h.b16 %v3235
      %v3508 = vunpack.c.l.b16 %v3236
      %v3509 = vunpack.c.h.b16 %v3236
      %v3510 = vunpack.c.l.b16 %v3237
      %v3511 = vunpack.c.h.b16 %v3237
      %v3512 = vunpack.c.l.b16 %v3238
      %v3513 = vunpack.c.h.b16 %v3238
      %v3514 = vunpack.c.l.b16 %v3239
      %v3515 = vunpack.c.h.b16 %v3239
      %v3516 = vunpack.c.l.b16 %v3240
      %v3517 = vunpack.c.h.b16 %v3240
      %v3518 = vunpack.c.l.b16 %v3241
      %v3519 = vunpack.c.h.b16 %v3241
      %v3520 = vunpack.c.l.b16 %v3242
      %v3521 = vunpack.c.h.b16 %v3242
      %v3522 = vunpack.c.l.b16 %v3243
      %v3523 = vunpack.c.h.b16 %v3243
      %v3524 = vunpack.c.l.b16 %v3244
      %v3525 = vunpack.c.h.b16 %v3244
      %v3526 = vunpack.c.l.b16 %v3245
      %v3527 = vunpack.c.h.b16 %v3245
      %v3528 = vunpack.c.l.b16 %v3246
      %v3529 = vunpack.c.h.b16 %v3246
      %v3530 = vunpack.c.l.b16 %v3247
      %v3531 = vunpack.c.h.b16 %v3247
      %v3532 = vunpack.c.l.b16 %v3248
      %v3533 = vunpack.c.h.b16 %v3248
      %v3534 = vpack.c.b16 %v3504, %v3502
      %v3535 = vpack.c.b16 %v3505, %v3503
      %v3536 = vpack.c.b16 %v3508, %v3506
      %v3537 = vpack.c.b16 %v3509, %v3507
      %v3538 = vpack.c.b16 %v3512, %v3510
      %v3539 = vpack.c.b16 %v3513, %v3511
      %v3540 = vpack.c.b16 %v3516, %v3514
      %v3541 = vpack.c.b16 %v3517, %v3515
      %v3542 = vpack.c.b16 %v3520, %v3518
      %v3543 = vpack.c.b16 %v3521, %v3519
      %v3544 = vpack.c.b16 %v3524, %v3522
      %v3545 = vpack.c.b16 %v3525, %v3523
      %v3546 = vpack.c.b16 %v3528, %v3526
      %v3547 = vpack.c.b16 %v3529, %v3527
      %v3548 = vpack.c.b16 %v3532, %v3530
      %v3549 = vpack.c.b16 %v3533, %v3531
      %3566 = vmatprep.subr.bf16.mxu0 %v3535
      %3567 = vmatpush1.bf16.msra.mxu0 %v3534
      %3568 = vmatprep.subr.bf16.mxu0 %v3537
      %3569 = vmatpush1.bf16.msra.mxu0 %v3536
      %3570 = vmatprep.subr.bf16.mxu0 %v3539
      %3571 = vmatpush1.bf16.msra.mxu0 %v3538
      %3572 = vmatprep.subr.bf16.mxu0 %v3541
      %3573 = vmatpush1.bf16.msra.mxu0 %v3540
      %3574 = vmatprep.subr.bf16.mxu0 %v3543
      %3575 = vmatpush1.bf16.msra.mxu0 %v3542
      %3576 = vmatprep.subr.bf16.mxu0 %v3545
      %3577 = vmatpush1.bf16.msra.mxu0 %v3544
      %3578 = vmatprep.subr.bf16.mxu0 %v3547
      %3579 = vmatpush1.bf16.msra.mxu0 %v3546
      %3580 = vmatprep.subr.bf16.mxu0 %v3549
      %3581 = vmatpush1.bf16.msra.mxu0 %v3548
      %3582 = vmatprep.subr.bf16.mxu0 0
      %3583 = vmatpush1.bf16.msra.mxu0 0
      %3584 = vmatprep.subr.bf16.mxu0 0
      %3585 = vmatpush1.bf16.msra.mxu0 0
      %3586 = vmatprep.subr.bf16.mxu0 0
      %3587 = vmatpush1.bf16.msra.mxu0 0
      %3588 = vmatprep.subr.bf16.mxu0 0
      %3589 = vmatpush1.bf16.msra.mxu0 0
      %3590 = vmatprep.subr.bf16.mxu0 0
      %3591 = vmatpush1.bf16.msra.mxu0 0
      %3592 = vmatprep.subr.bf16.mxu0 0
      %3593 = vmatpush1.bf16.msra.mxu0 0
      %3594 = vmatprep.subr.bf16.mxu0 0
      %3595 = vmatpush1.bf16.msra.mxu0 0
      %3596 = vmatprep.subr.bf16.mxu0 0
      %3597 = vmatpush1.bf16.msra.mxu0 0
      %3598 = vmatprep.mubr.bf16.mxu0 0
      %3599 = vmatmul.mubr.bf16.gmra.mrb[0].mxu0 %v3232
      %v3600 = vpop.f32.mrb[0].mxu0
      %v3601 = vadd.f32 %v3480, %v3600
      %v3602 = vpop.f32.mrb[0].mxu0
      %v3603 = vadd.f32 %v3482, %v3602
      %v3604 = vpop.f32.mrb[0].mxu0
      %v3605 = vpop.f32.mrb[0].mxu0
      %3606 = vdwg.mxu0
      %v3607 = vld [vmem:[%s1008] sm:$0x3]
      %v3609 = vlaneseq
      %v3610 = vshrl.u32 %v3609, 7
      %v3611 = vsub.s32 0, %v3610
      %v3612 = vrot.slane %v3607, %v3611
      %v3613 = vlaneseq
      %v3614 = vshrl.u32 %v3613, 7
      %v3615 = vsub.s32 1, %v3614
      %v3616 = vrot.slane %v3607, %v3615
      %v3619 = vadd.f32 %v3601, %v3612
      %v3620 = vadd.f32 %v3603, %v3616
      %v3621 = vlaneseq
      %v3622 = vshrl.u32 %v3621, 7
      %v3623 = vsub.s32 2, %v3622
      %v3624 = vrot.slane %v1047, %v3623
      %v3625 = vlaneseq
      %v3626 = vshrl.u32 %v3625, 7
      %v3627 = vsub.s32 6, %v3626
      %v3628 = vrot.slane %v1047, %v3627
      %v3631 = vlaneseq
      %v3632 = vshrl.u32 %v3631, 7
      %v3633 = vsub.s32 2, %v3632
      %v3634 = vrot.slane %v3624, %v3633
      %v3635 = vlaneseq
      %v3636 = vshrl.u32 %v3635, 7
      %v3637 = vsub.s32 2, %v3636
      %v3638 = vrot.slane %v3628, %v3637
      %v3639 = vmul.f32 %v3634, %v3619
      %v3640 = vmul.f32 %v3638, %v3620
      %v3641 = vadd.f32 %v2824, %v3639
      %v3642 = vadd.f32 %v2825, %v3640
      %v3643 = vadd.f32 %v3641, %v3642
      %3644 = vadd.xlane.f32.xlu0 %v3643
      %v3645 = vpop.xlane.xlu0 %3644
      %v3646 = vmul.f32 %v3645, %v1550
      %v3647 = vsub.f32 %v3641, %v3646
      %v3648 = vsub.f32 %v3642, %v3646
      %v3649 = vmul.f32 %v3647, %v3647
      %v3650 = vmul.f32 %v3648, %v3648
      %v3651 = vadd.f32 %v3649, %v3650
      %3652 = vadd.xlane.f32.xlu0 %v3651
      %v3653 = vpop.xlane.xlu0 %3652
      %v3654 = vmul.f32 %v3653, %v1550
      %v3655 = vadd.f32 %v3654, 1e-06
      %v3656 = vrsqrt.pop %v3655
      %v3657 = vmul.f32 %v3647, %v3656
      %v3658 = vmul.f32 %v3648, %v3656
      %v3659 = vlaneseq
      %v3660 = vshrl.u32 %v3659, 7
      %v3661 = vsub.s32 4, %v3660
      %v3662 = vrot.slane %v1564, %v3661
      %v3663 = vlaneseq
      %v3664 = vshrl.u32 %v3663, 7
      %v3665 = vsub.s32 4, %v3664
      %v3666 = vrot.slane %v1565, %v3665
      %v3667 = vmul.f32 %v3657, %v3662
      %v3668 = vmul.f32 %v3658, %v3666
      %v3669 = vlaneseq
      %v3670 = vshrl.u32 %v3669, 7
      %v3671 = vsub.s32 3, %v3670
      %v3672 = vrot.slane %v1044, %v3671
      %v3673 = vlaneseq
      %v3674 = vshrl.u32 %v3673, 7
      %v3675 = vsub.s32 3, %v3674
      %v3676 = vrot.slane %v1045, %v3675
      %v3677 = vadd.f32 %v3667, %v3672
      %v3678 = vadd.f32 %v3668, %v3676
      %v3679 = vpack.c.bf16 %v3677, %v3677
      %v3680 = vpack.c.bf16 %v3678, %v3678
      %v3681 = vld [vmem:[%s1013] sm:$0xff]
      %v3682 = vld [vmem:[%s1013 + $0x8] sm:$0xff]
      %v3683 = vld [vmem:[%s1013 + $0x10] sm:$0xff]
      %v3684 = vld [vmem:[%s1013 + $0x18] sm:$0xff]
      %v3685 = vld [vmem:[%s1013 + $0x20] sm:$0xff]
      %v3686 = vld [vmem:[%s1013 + $0x28] sm:$0xff]
      %v3687 = vld [vmem:[%s1013 + $0x30] sm:$0xff]
      %v3688 = vld [vmem:[%s1013 + $0x38] sm:$0xff]
      %v3689 = vld [vmem:[%s1013 + $0x40] sm:$0xff]
      %v3690 = vld [vmem:[%s1013 + $0x48] sm:$0xff]
      %v3691 = vld [vmem:[%s1013 + $0x50] sm:$0xff]
      %v3692 = vld [vmem:[%s1013 + $0x58] sm:$0xff]
      %v3693 = vld [vmem:[%s1013 + $0x60] sm:$0xff]
      %v3694 = vld [vmem:[%s1013 + $0x68] sm:$0xff]
      %v3695 = vld [vmem:[%s1013 + $0x70] sm:$0xff]
      %v3696 = vld [vmem:[%s1013 + $0x78] sm:$0xff]
      %v3697 = vld [vmem:[%s1013 + $0x80] sm:$0xff]
      %v3698 = vld [vmem:[%s1013 + $0x88] sm:$0xff]
      %v3699 = vld [vmem:[%s1013 + $0x90] sm:$0xff]
      %v3700 = vld [vmem:[%s1013 + $0x98] sm:$0xff]
      %v3701 = vld [vmem:[%s1013 + $0xa0] sm:$0xff]
      %v3702 = vld [vmem:[%s1013 + $0xa8] sm:$0xff]
      %v3703 = vld [vmem:[%s1013 + $0xb0] sm:$0xff]
      %v3704 = vld [vmem:[%s1013 + $0xb8] sm:$0xff]
      %v3705 = vld [vmem:[%s1013 + $0xc0] sm:$0xff]
      %v3706 = vld [vmem:[%s1013 + $0xc8] sm:$0xff]
      %v3707 = vld [vmem:[%s1013 + $0xd0] sm:$0xff]
      %v3708 = vld [vmem:[%s1013 + $0xd8] sm:$0xff]
      %v3709 = vld [vmem:[%s1013 + $0xe0] sm:$0xff]
      %v3710 = vld [vmem:[%s1013 + $0xe8] sm:$0xff]
      %v3711 = vld [vmem:[%s1013 + $0xf0] sm:$0xff]
      %v3712 = vld [vmem:[%s1013 + $0xf8] sm:$0xff]
      %v3713 = vld [vmem:[%s1013 + $0x100] sm:$0xff]
      %v3714 = vld [vmem:[%s1013 + $0x108] sm:$0xff]
      %v3715 = vld [vmem:[%s1013 + $0x110] sm:$0xff]
      %v3716 = vld [vmem:[%s1013 + $0x118] sm:$0xff]
      %v3717 = vld [vmem:[%s1013 + $0x120] sm:$0xff]
      %v3718 = vld [vmem:[%s1013 + $0x128] sm:$0xff]
      %v3719 = vld [vmem:[%s1013 + $0x130] sm:$0xff]
      %v3720 = vld [vmem:[%s1013 + $0x138] sm:$0xff]
      %v3721 = vld [vmem:[%s1013 + $0x140] sm:$0xff]
      %v3722 = vld [vmem:[%s1013 + $0x148] sm:$0xff]
      %v3723 = vld [vmem:[%s1013 + $0x150] sm:$0xff]
      %v3724 = vld [vmem:[%s1013 + $0x158] sm:$0xff]
      %v3725 = vld [vmem:[%s1013 + $0x160] sm:$0xff]
      %v3726 = vld [vmem:[%s1013 + $0x168] sm:$0xff]
      %v3727 = vld [vmem:[%s1013 + $0x170] sm:$0xff]
      %v3728 = vld [vmem:[%s1013 + $0x178] sm:$0xff]
      %v3729 = vld [vmem:[%s1013 + $0x180] sm:$0xff]
      %v3730 = vld [vmem:[%s1013 + $0x188] sm:$0xff]
      %v3731 = vld [vmem:[%s1013 + $0x190] sm:$0xff]
      %v3732 = vld [vmem:[%s1013 + $0x198] sm:$0xff]
      %v3733 = vld [vmem:[%s1013 + $0x1a0] sm:$0xff]
      %v3734 = vld [vmem:[%s1013 + $0x1a8] sm:$0xff]
      %v3735 = vld [vmem:[%s1013 + $0x1b0] sm:$0xff]
      %v3736 = vld [vmem:[%s1013 + $0x1b8] sm:$0xff]
      %v3737 = vld [vmem:[%s1013 + $0x1c0] sm:$0xff]
      %v3738 = vld [vmem:[%s1013 + $0x1c8] sm:$0xff]
      %v3739 = vld [vmem:[%s1013 + $0x1d0] sm:$0xff]
      %v3740 = vld [vmem:[%s1013 + $0x1d8] sm:$0xff]
      %v3741 = vld [vmem:[%s1013 + $0x1e0] sm:$0xff]
      %v3742 = vld [vmem:[%s1013 + $0x1e8] sm:$0xff]
      %v3743 = vld [vmem:[%s1013 + $0x1f0] sm:$0xff]
      %v3744 = vld [vmem:[%s1013 + $0x1f8] sm:$0xff]
      %v3745 = vld [vmem:[%s1013 + $0x200] sm:$0xff]
      %v3746 = vld [vmem:[%s1013 + $0x208] sm:$0xff]
      %v3747 = vld [vmem:[%s1013 + $0x210] sm:$0xff]
      %v3748 = vld [vmem:[%s1013 + $0x218] sm:$0xff]
      %v3749 = vld [vmem:[%s1013 + $0x220] sm:$0xff]
      %v3750 = vld [vmem:[%s1013 + $0x228] sm:$0xff]
      %v3751 = vld [vmem:[%s1013 + $0x230] sm:$0xff]
      %v3752 = vld [vmem:[%s1013 + $0x238] sm:$0xff]
      %v3753 = vld [vmem:[%s1013 + $0x240] sm:$0xff]
      %v3754 = vld [vmem:[%s1013 + $0x248] sm:$0xff]
      %v3755 = vld [vmem:[%s1013 + $0x250] sm:$0xff]
      %v3756 = vld [vmem:[%s1013 + $0x258] sm:$0xff]
      %v3757 = vld [vmem:[%s1013 + $0x260] sm:$0xff]
      %v3758 = vld [vmem:[%s1013 + $0x268] sm:$0xff]
      %v3759 = vld [vmem:[%s1013 + $0x270] sm:$0xff]
      %v3760 = vld [vmem:[%s1013 + $0x278] sm:$0xff]
      %v3761 = vld [vmem:[%s1013 + $0x280] sm:$0xff]
      %v3762 = vld [vmem:[%s1013 + $0x288] sm:$0xff]
      %v3763 = vld [vmem:[%s1013 + $0x290] sm:$0xff]
      %v3764 = vld [vmem:[%s1013 + $0x298] sm:$0xff]
      %v3765 = vld [vmem:[%s1013 + $0x2a0] sm:$0xff]
      %v3766 = vld [vmem:[%s1013 + $0x2a8] sm:$0xff]
      %v3767 = vld [vmem:[%s1013 + $0x2b0] sm:$0xff]
      %v3768 = vld [vmem:[%s1013 + $0x2b8] sm:$0xff]
      %v3769 = vld [vmem:[%s1013 + $0x2c0] sm:$0xff]
      %v3770 = vld [vmem:[%s1013 + $0x2c8] sm:$0xff]
      %v3771 = vld [vmem:[%s1013 + $0x2d0] sm:$0xff]
      %v3772 = vld [vmem:[%s1013 + $0x2d8] sm:$0xff]
      %v3773 = vld [vmem:[%s1013 + $0x2e0] sm:$0xff]
      %v3774 = vld [vmem:[%s1013 + $0x2e8] sm:$0xff]
      %v3775 = vld [vmem:[%s1013 + $0x2f0] sm:$0xff]
      %v3776 = vld [vmem:[%s1013 + $0x2f8] sm:$0xff]
      %v3777 = vld [vmem:[%s1013 + $0x300] sm:$0xff]
      %v3778 = vld [vmem:[%s1013 + $0x308] sm:$0xff]
      %v3779 = vld [vmem:[%s1013 + $0x310] sm:$0xff]
      %v3780 = vld [vmem:[%s1013 + $0x318] sm:$0xff]
      %v3781 = vld [vmem:[%s1013 + $0x320] sm:$0xff]
      %v3782 = vld [vmem:[%s1013 + $0x328] sm:$0xff]
      %v3783 = vld [vmem:[%s1013 + $0x330] sm:$0xff]
      %v3784 = vld [vmem:[%s1013 + $0x338] sm:$0xff]
      %v3785 = vld [vmem:[%s1013 + $0x340] sm:$0xff]
      %v3786 = vld [vmem:[%s1013 + $0x348] sm:$0xff]
      %v3787 = vld [vmem:[%s1013 + $0x350] sm:$0xff]
      %v3788 = vld [vmem:[%s1013 + $0x358] sm:$0xff]
      %v3789 = vld [vmem:[%s1013 + $0x360] sm:$0xff]
      %v3790 = vld [vmem:[%s1013 + $0x368] sm:$0xff]
      %v3791 = vld [vmem:[%s1013 + $0x370] sm:$0xff]
      %v3792 = vld [vmem:[%s1013 + $0x378] sm:$0xff]
      %v3793 = vld [vmem:[%s1013 + $0x380] sm:$0xff]
      %v3794 = vld [vmem:[%s1013 + $0x388] sm:$0xff]
      %v3795 = vld [vmem:[%s1013 + $0x390] sm:$0xff]
      %v3796 = vld [vmem:[%s1013 + $0x398] sm:$0xff]
      %v3797 = vld [vmem:[%s1013 + $0x3a0] sm:$0xff]
      %v3798 = vld [vmem:[%s1013 + $0x3a8] sm:$0xff]
      %v3799 = vld [vmem:[%s1013 + $0x3b0] sm:$0xff]
      %v3800 = vld [vmem:[%s1013 + $0x3b8] sm:$0xff]
      %v3801 = vld [vmem:[%s1013 + $0x3c0] sm:$0xff]
      %v3802 = vld [vmem:[%s1013 + $0x3c8] sm:$0xff]
      %v3803 = vld [vmem:[%s1013 + $0x3d0] sm:$0xff]
      %v3804 = vld [vmem:[%s1013 + $0x3d8] sm:$0xff]
      %v3805 = vld [vmem:[%s1013 + $0x3e0] sm:$0xff]
      %v3806 = vld [vmem:[%s1013 + $0x3e8] sm:$0xff]
      %v3807 = vld [vmem:[%s1013 + $0x3f0] sm:$0xff]
      %v3808 = vld [vmem:[%s1013 + $0x3f8] sm:$0xff]
      %v3809 = vld [vmem:[%s1017] sm:$0xff]
      %v3811 = vlaneseq
      %v3812 = vshrl.u32 %v3811, 7
      %v3813 = vsub.s32 0, %v3812
      %v3814 = vrot.slane %v3809, %v3813
      %v3815 = vlaneseq
      %v3816 = vshrl.u32 %v3815, 7
      %v3817 = vsub.s32 1, %v3816
      %v3818 = vrot.slane %v3809, %v3817
      %v3819 = vlaneseq
      %v3820 = vshrl.u32 %v3819, 7
      %v3821 = vsub.s32 2, %v3820
      %v3822 = vrot.slane %v3809, %v3821
      %v3823 = vlaneseq
      %v3824 = vshrl.u32 %v3823, 7
      %v3825 = vsub.s32 3, %v3824
      %v3826 = vrot.slane %v3809, %v3825
      %v3827 = vlaneseq
      %v3828 = vshrl.u32 %v3827, 7
      %v3829 = vsub.s32 4, %v3828
      %v3830 = vrot.slane %v3809, %v3829
      %v3831 = vlaneseq
      %v3832 = vshrl.u32 %v3831, 7
      %v3833 = vsub.s32 5, %v3832
      %v3834 = vrot.slane %v3809, %v3833
      %v3835 = vlaneseq
      %v3836 = vshrl.u32 %v3835, 7
      %v3837 = vsub.s32 6, %v3836
      %v3838 = vrot.slane %v3809, %v3837
      %v3839 = vlaneseq
      %v3840 = vshrl.u32 %v3839, 7
      %v3841 = vsub.s32 7, %v3840
      %v3842 = vrot.slane %v3809, %v3841
      %v3979 = vunpack.c.l.b16 %v3681
      %v3980 = vunpack.c.h.b16 %v3681
      %v3981 = vunpack.c.l.b16 %v3682
      %v3982 = vunpack.c.h.b16 %v3682
      %v3983 = vunpack.c.l.b16 %v3683
      %v3984 = vunpack.c.h.b16 %v3683
      %v3985 = vunpack.c.l.b16 %v3684
      %v3986 = vunpack.c.h.b16 %v3684
      %v3987 = vunpack.c.l.b16 %v3685
      %v3988 = vunpack.c.h.b16 %v3685
      %v3989 = vunpack.c.l.b16 %v3686
      %v3990 = vunpack.c.h.b16 %v3686
      %v3991 = vunpack.c.l.b16 %v3687
      %v3992 = vunpack.c.h.b16 %v3687
      %v3993 = vunpack.c.l.b16 %v3688
      %v3994 = vunpack.c.h.b16 %v3688
      %v3995 = vunpack.c.l.b16 %v3689
      %v3996 = vunpack.c.h.b16 %v3689
      %v3997 = vunpack.c.l.b16 %v3690
      %v3998 = vunpack.c.h.b16 %v3690
      %v3999 = vunpack.c.l.b16 %v3691
      %v4000 = vunpack.c.h.b16 %v3691
      %v4001 = vunpack.c.l.b16 %v3692
      %v4002 = vunpack.c.h.b16 %v3692
      %v4003 = vunpack.c.l.b16 %v3693
      %v4004 = vunpack.c.h.b16 %v3693
      %v4005 = vunpack.c.l.b16 %v3694
      %v4006 = vunpack.c.h.b16 %v3694
      %v4007 = vunpack.c.l.b16 %v3695
      %v4008 = vunpack.c.h.b16 %v3695
      %v4009 = vunpack.c.l.b16 %v3696
      %v4010 = vunpack.c.h.b16 %v3696
      %v4011 = vunpack.c.l.b16 %v3697
      %v4012 = vunpack.c.h.b16 %v3697
      %v4013 = vunpack.c.l.b16 %v3698
      %v4014 = vunpack.c.h.b16 %v3698
      %v4015 = vunpack.c.l.b16 %v3699
      %v4016 = vunpack.c.h.b16 %v3699
      %v4017 = vunpack.c.l.b16 %v3700
      %v4018 = vunpack.c.h.b16 %v3700
      %v4019 = vunpack.c.l.b16 %v3701
      %v4020 = vunpack.c.h.b16 %v3701
      %v4021 = vunpack.c.l.b16 %v3702
      %v4022 = vunpack.c.h.b16 %v3702
      %v4023 = vunpack.c.l.b16 %v3703
      %v4024 = vunpack.c.h.b16 %v3703
      %v4025 = vunpack.c.l.b16 %v3704
      %v4026 = vunpack.c.h.b16 %v3704
      %v4027 = vunpack.c.l.b16 %v3705
      %v4028 = vunpack.c.h.b16 %v3705
      %v4029 = vunpack.c.l.b16 %v3706
      %v4030 = vunpack.c.h.b16 %v3706
      %v4031 = vunpack.c.l.b16 %v3707
      %v4032 = vunpack.c.h.b16 %v3707
      %v4033 = vunpack.c.l.b16 %v3708
      %v4034 = vunpack.c.h.b16 %v3708
      %v4035 = vunpack.c.l.b16 %v3709
      %v4036 = vunpack.c.h.b16 %v3709
      %v4037 = vunpack.c.l.b16 %v3710
      %v4038 = vunpack.c.h.b16 %v3710
      %v4039 = vunpack.c.l.b16 %v3711
      %v4040 = vunpack.c.h.b16 %v3711
      %v4041 = vunpack.c.l.b16 %v3712
      %v4042 = vunpack.c.h.b16 %v3712
      %v4043 = vunpack.c.l.b16 %v3713
      %v4044 = vunpack.c.h.b16 %v3713
      %v4045 = vunpack.c.l.b16 %v3714
      %v4046 = vunpack.c.h.b16 %v3714
      %v4047 = vunpack.c.l.b16 %v3715
      %v4048 = vunpack.c.h.b16 %v3715
      %v4049 = vunpack.c.l.b16 %v3716
      %v4050 = vunpack.c.h.b16 %v3716
      %v4051 = vunpack.c.l.b16 %v3717
      %v4052 = vunpack.c.h.b16 %v3717
      %v4053 = vunpack.c.l.b16 %v3718
      %v4054 = vunpack.c.h.b16 %v3718
      %v4055 = vunpack.c.l.b16 %v3719
      %v4056 = vunpack.c.h.b16 %v3719
      %v4057 = vunpack.c.l.b16 %v3720
      %v4058 = vunpack.c.h.b16 %v3720
      %v4059 = vunpack.c.l.b16 %v3721
      %v4060 = vunpack.c.h.b16 %v3721
      %v4061 = vunpack.c.l.b16 %v3722
      %v4062 = vunpack.c.h.b16 %v3722
      %v4063 = vunpack.c.l.b16 %v3723
      %v4064 = vunpack.c.h.b16 %v3723
      %v4065 = vunpack.c.l.b16 %v3724
      %v4066 = vunpack.c.h.b16 %v3724
      %v4067 = vunpack.c.l.b16 %v3725
      %v4068 = vunpack.c.h.b16 %v3725
      %v4069 = vunpack.c.l.b16 %v3726
      %v4070 = vunpack.c.h.b16 %v3726
      %v4071 = vunpack.c.l.b16 %v3727
      %v4072 = vunpack.c.h.b16 %v3727
      %v4073 = vunpack.c.l.b16 %v3728
      %v4074 = vunpack.c.h.b16 %v3728
      %v4075 = vunpack.c.l.b16 %v3729
      %v4076 = vunpack.c.h.b16 %v3729
      %v4077 = vunpack.c.l.b16 %v3730
      %v4078 = vunpack.c.h.b16 %v3730
      %v4079 = vunpack.c.l.b16 %v3731
      %v4080 = vunpack.c.h.b16 %v3731
      %v4081 = vunpack.c.l.b16 %v3732
      %v4082 = vunpack.c.h.b16 %v3732
      %v4083 = vunpack.c.l.b16 %v3733
      %v4084 = vunpack.c.h.b16 %v3733
      %v4085 = vunpack.c.l.b16 %v3734
      %v4086 = vunpack.c.h.b16 %v3734
      %v4087 = vunpack.c.l.b16 %v3735
      %v4088 = vunpack.c.h.b16 %v3735
      %v4089 = vunpack.c.l.b16 %v3736
      %v4090 = vunpack.c.h.b16 %v3736
      %v4091 = vunpack.c.l.b16 %v3737
      %v4092 = vunpack.c.h.b16 %v3737
      %v4093 = vunpack.c.l.b16 %v3738
      %v4094 = vunpack.c.h.b16 %v3738
      %v4095 = vunpack.c.l.b16 %v3739
      %v4096 = vunpack.c.h.b16 %v3739
      %v4097 = vunpack.c.l.b16 %v3740
      %v4098 = vunpack.c.h.b16 %v3740
      %v4099 = vunpack.c.l.b16 %v3741
      %v4100 = vunpack.c.h.b16 %v3741
      %v4101 = vunpack.c.l.b16 %v3742
      %v4102 = vunpack.c.h.b16 %v3742
      %v4103 = vunpack.c.l.b16 %v3743
      %v4104 = vunpack.c.h.b16 %v3743
      %v4105 = vunpack.c.l.b16 %v3744
      %v4106 = vunpack.c.h.b16 %v3744
      %v4107 = vunpack.c.l.b16 %v3745
      %v4108 = vunpack.c.h.b16 %v3745
      %v4109 = vunpack.c.l.b16 %v3746
      %v4110 = vunpack.c.h.b16 %v3746
      %v4111 = vunpack.c.l.b16 %v3747
      %v4112 = vunpack.c.h.b16 %v3747
      %v4113 = vunpack.c.l.b16 %v3748
      %v4114 = vunpack.c.h.b16 %v3748
      %v4115 = vunpack.c.l.b16 %v3749
      %v4116 = vunpack.c.h.b16 %v3749
      %v4117 = vunpack.c.l.b16 %v3750
      %v4118 = vunpack.c.h.b16 %v3750
      %v4119 = vunpack.c.l.b16 %v3751
      %v4120 = vunpack.c.h.b16 %v3751
      %v4121 = vunpack.c.l.b16 %v3752
      %v4122 = vunpack.c.h.b16 %v3752
      %v4123 = vunpack.c.l.b16 %v3753
      %v4124 = vunpack.c.h.b16 %v3753
      %v4125 = vunpack.c.l.b16 %v3754
      %v4126 = vunpack.c.h.b16 %v3754
      %v4127 = vunpack.c.l.b16 %v3755
      %v4128 = vunpack.c.h.b16 %v3755
      %v4129 = vunpack.c.l.b16 %v3756
      %v4130 = vunpack.c.h.b16 %v3756
      %v4131 = vunpack.c.l.b16 %v3757
      %v4132 = vunpack.c.h.b16 %v3757
      %v4133 = vunpack.c.l.b16 %v3758
      %v4134 = vunpack.c.h.b16 %v3758
      %v4135 = vunpack.c.l.b16 %v3759
      %v4136 = vunpack.c.h.b16 %v3759
      %v4137 = vunpack.c.l.b16 %v3760
      %v4138 = vunpack.c.h.b16 %v3760
      %v4139 = vunpack.c.l.b16 %v3761
      %v4140 = vunpack.c.h.b16 %v3761
      %v4141 = vunpack.c.l.b16 %v3762
      %v4142 = vunpack.c.h.b16 %v3762
      %v4143 = vunpack.c.l.b16 %v3763
      %v4144 = vunpack.c.h.b16 %v3763
      %v4145 = vunpack.c.l.b16 %v3764
      %v4146 = vunpack.c.h.b16 %v3764
      %v4147 = vunpack.c.l.b16 %v3765
      %v4148 = vunpack.c.h.b16 %v3765
      %v4149 = vunpack.c.l.b16 %v3766
      %v4150 = vunpack.c.h.b16 %v3766
      %v4151 = vunpack.c.l.b16 %v3767
      %v4152 = vunpack.c.h.b16 %v3767
      %v4153 = vunpack.c.l.b16 %v3768
      %v4154 = vunpack.c.h.b16 %v3768
      %v4155 = vunpack.c.l.b16 %v3769
      %v4156 = vunpack.c.h.b16 %v3769
      %v4157 = vunpack.c.l.b16 %v3770
      %v4158 = vunpack.c.h.b16 %v3770
      %v4159 = vunpack.c.l.b16 %v3771
      %v4160 = vunpack.c.h.b16 %v3771
      %v4161 = vunpack.c.l.b16 %v3772
      %v4162 = vunpack.c.h.b16 %v3772
      %v4163 = vunpack.c.l.b16 %v3773
      %v4164 = vunpack.c.h.b16 %v3773
      %v4165 = vunpack.c.l.b16 %v3774
      %v4166 = vunpack.c.h.b16 %v3774
      %v4167 = vunpack.c.l.b16 %v3775
      %v4168 = vunpack.c.h.b16 %v3775
      %v4169 = vunpack.c.l.b16 %v3776
      %v4170 = vunpack.c.h.b16 %v3776
      %v4171 = vunpack.c.l.b16 %v3777
      %v4172 = vunpack.c.h.b16 %v3777
      %v4173 = vunpack.c.l.b16 %v3778
      %v4174 = vunpack.c.h.b16 %v3778
      %v4175 = vunpack.c.l.b16 %v3779
      %v4176 = vunpack.c.h.b16 %v3779
      %v4177 = vunpack.c.l.b16 %v3780
      %v4178 = vunpack.c.h.b16 %v3780
      %v4179 = vunpack.c.l.b16 %v3781
      %v4180 = vunpack.c.h.b16 %v3781
      %v4181 = vunpack.c.l.b16 %v3782
      %v4182 = vunpack.c.h.b16 %v3782
      %v4183 = vunpack.c.l.b16 %v3783
      %v4184 = vunpack.c.h.b16 %v3783
      %v4185 = vunpack.c.l.b16 %v3784
      %v4186 = vunpack.c.h.b16 %v3784
      %v4187 = vunpack.c.l.b16 %v3785
      %v4188 = vunpack.c.h.b16 %v3785
      %v4189 = vunpack.c.l.b16 %v3786
      %v4190 = vunpack.c.h.b16 %v3786
      %v4191 = vunpack.c.l.b16 %v3787
      %v4192 = vunpack.c.h.b16 %v3787
      %v4193 = vunpack.c.l.b16 %v3788
      %v4194 = vunpack.c.h.b16 %v3788
      %v4195 = vunpack.c.l.b16 %v3789
      %v4196 = vunpack.c.h.b16 %v3789
      %v4197 = vunpack.c.l.b16 %v3790
      %v4198 = vunpack.c.h.b16 %v3790
      %v4199 = vunpack.c.l.b16 %v3791
      %v4200 = vunpack.c.h.b16 %v3791
      %v4201 = vunpack.c.l.b16 %v3792
      %v4202 = vunpack.c.h.b16 %v3792
      %v4203 = vunpack.c.l.b16 %v3793
      %v4204 = vunpack.c.h.b16 %v3793
      %v4205 = vunpack.c.l.b16 %v3794
      %v4206 = vunpack.c.h.b16 %v3794
      %v4207 = vunpack.c.l.b16 %v3795
      %v4208 = vunpack.c.h.b16 %v3795
      %v4209 = vunpack.c.l.b16 %v3796
      %v4210 = vunpack.c.h.b16 %v3796
      %v4211 = vunpack.c.l.b16 %v3797
      %v4212 = vunpack.c.h.b16 %v3797
      %v4213 = vunpack.c.l.b16 %v3798
      %v4214 = vunpack.c.h.b16 %v3798
      %v4215 = vunpack.c.l.b16 %v3799
      %v4216 = vunpack.c.h.b16 %v3799
      %v4217 = vunpack.c.l.b16 %v3800
      %v4218 = vunpack.c.h.b16 %v3800
      %v4219 = vunpack.c.l.b16 %v3801
      %v4220 = vunpack.c.h.b16 %v3801
      %v4221 = vunpack.c.l.b16 %v3802
      %v4222 = vunpack.c.h.b16 %v3802
      %v4223 = vunpack.c.l.b16 %v3803
      %v4224 = vunpack.c.h.b16 %v3803
      %v4225 = vunpack.c.l.b16 %v3804
      %v4226 = vunpack.c.h.b16 %v3804
      %v4227 = vunpack.c.l.b16 %v3805
      %v4228 = vunpack.c.h.b16 %v3805
      %v4229 = vunpack.c.l.b16 %v3806
      %v4230 = vunpack.c.h.b16 %v3806
      %v4231 = vunpack.c.l.b16 %v3807
      %v4232 = vunpack.c.h.b16 %v3807
      %v4233 = vunpack.c.l.b16 %v3808
      %v4234 = vunpack.c.h.b16 %v3808
      %v4235 = vpack.c.b16 %v3987, %v3979
      %v4236 = vpack.c.b16 %v3988, %v3980
      %v4237 = vpack.c.b16 %v3989, %v3981
      %v4238 = vpack.c.b16 %v3990, %v3982
      %v4239 = vpack.c.b16 %v3991, %v3983
      %v4240 = vpack.c.b16 %v3992, %v3984
      %v4241 = vpack.c.b16 %v3993, %v3985
      %v4242 = vpack.c.b16 %v3994, %v3986
      %v4243 = vpack.c.b16 %v4003, %v3995
      %v4244 = vpack.c.b16 %v4004, %v3996
      %v4245 = vpack.c.b16 %v4005, %v3997
      %v4246 = vpack.c.b16 %v4006, %v3998
      %v4247 = vpack.c.b16 %v4007, %v3999
      %v4248 = vpack.c.b16 %v4008, %v4000
      %v4249 = vpack.c.b16 %v4009, %v4001
      %v4250 = vpack.c.b16 %v4010, %v4002
      %v4251 = vpack.c.b16 %v4019, %v4011
      %v4252 = vpack.c.b16 %v4020, %v4012
      %v4253 = vpack.c.b16 %v4021, %v4013
      %v4254 = vpack.c.b16 %v4022, %v4014
      %v4255 = vpack.c.b16 %v4023, %v4015
      %v4256 = vpack.c.b16 %v4024, %v4016
      %v4257 = vpack.c.b16 %v4025, %v4017
      %v4258 = vpack.c.b16 %v4026, %v4018
      %v4259 = vpack.c.b16 %v4035, %v4027
      %v4260 = vpack.c.b16 %v4036, %v4028
      %v4261 = vpack.c.b16 %v4037, %v4029
      %v4262 = vpack.c.b16 %v4038, %v4030
      %v4263 = vpack.c.b16 %v4039, %v4031
      %v4264 = vpack.c.b16 %v4040, %v4032
      %v4265 = vpack.c.b16 %v4041, %v4033
      %v4266 = vpack.c.b16 %v4042, %v4034
      %v4267 = vpack.c.b16 %v4051, %v4043
      %v4268 = vpack.c.b16 %v4052, %v4044
      %v4269 = vpack.c.b16 %v4053, %v4045
      %v4270 = vpack.c.b16 %v4054, %v4046
      %v4271 = vpack.c.b16 %v4055, %v4047
      %v4272 = vpack.c.b16 %v4056, %v4048
      %v4273 = vpack.c.b16 %v4057, %v4049
      %v4274 = vpack.c.b16 %v4058, %v4050
      %v4275 = vpack.c.b16 %v4067, %v4059
      %v4276 = vpack.c.b16 %v4068, %v4060
      %v4277 = vpack.c.b16 %v4069, %v4061
      %v4278 = vpack.c.b16 %v4070, %v4062
      %v4279 = vpack.c.b16 %v4071, %v4063
      %v4280 = vpack.c.b16 %v4072, %v4064
      %v4281 = vpack.c.b16 %v4073, %v4065
      %v4282 = vpack.c.b16 %v4074, %v4066
      %v4283 = vpack.c.b16 %v4083, %v4075
      %v4284 = vpack.c.b16 %v4084, %v4076
      %v4285 = vpack.c.b16 %v4085, %v4077
      %v4286 = vpack.c.b16 %v4086, %v4078
      %v4287 = vpack.c.b16 %v4087, %v4079
      %v4288 = vpack.c.b16 %v4088, %v4080
      %v4289 = vpack.c.b16 %v4089, %v4081
      %v4290 = vpack.c.b16 %v4090, %v4082
      %v4291 = vpack.c.b16 %v4099, %v4091
      %v4292 = vpack.c.b16 %v4100, %v4092
      %v4293 = vpack.c.b16 %v4101, %v4093
      %v4294 = vpack.c.b16 %v4102, %v4094
      %v4295 = vpack.c.b16 %v4103, %v4095
      %v4296 = vpack.c.b16 %v4104, %v4096
      %v4297 = vpack.c.b16 %v4105, %v4097
      %v4298 = vpack.c.b16 %v4106, %v4098
      %v4299 = vpack.c.b16 %v4115, %v4107
      %v4300 = vpack.c.b16 %v4116, %v4108
      %v4301 = vpack.c.b16 %v4117, %v4109
      %v4302 = vpack.c.b16 %v4118, %v4110
      %v4303 = vpack.c.b16 %v4119, %v4111
      %v4304 = vpack.c.b16 %v4120, %v4112
      %v4305 = vpack.c.b16 %v4121, %v4113
      %v4306 = vpack.c.b16 %v4122, %v4114
      %v4307 = vpack.c.b16 %v4131, %v4123
      %v4308 = vpack.c.b16 %v4132, %v4124
      %v4309 = vpack.c.b16 %v4133, %v4125
      %v4310 = vpack.c.b16 %v4134, %v4126
      %v4311 = vpack.c.b16 %v4135, %v4127
      %v4312 = vpack.c.b16 %v4136, %v4128
      %v4313 = vpack.c.b16 %v4137, %v4129
      %v4314 = vpack.c.b16 %v4138, %v4130
      %v4315 = vpack.c.b16 %v4147, %v4139
      %v4316 = vpack.c.b16 %v4148, %v4140
      %v4317 = vpack.c.b16 %v4149, %v4141
      %v4318 = vpack.c.b16 %v4150, %v4142
      %v4319 = vpack.c.b16 %v4151, %v4143
      %v4320 = vpack.c.b16 %v4152, %v4144
      %v4321 = vpack.c.b16 %v4153, %v4145
      %v4322 = vpack.c.b16 %v4154, %v4146
      %v4323 = vpack.c.b16 %v4163, %v4155
      %v4324 = vpack.c.b16 %v4164, %v4156
      %v4325 = vpack.c.b16 %v4165, %v4157
      %v4326 = vpack.c.b16 %v4166, %v4158
      %v4327 = vpack.c.b16 %v4167, %v4159
      %v4328 = vpack.c.b16 %v4168, %v4160
      %v4329 = vpack.c.b16 %v4169, %v4161
      %v4330 = vpack.c.b16 %v4170, %v4162
      %v4331 = vpack.c.b16 %v4179, %v4171
      %v4332 = vpack.c.b16 %v4180, %v4172
      %v4333 = vpack.c.b16 %v4181, %v4173
      %v4334 = vpack.c.b16 %v4182, %v4174
      %v4335 = vpack.c.b16 %v4183, %v4175
      %v4336 = vpack.c.b16 %v4184, %v4176
      %v4337 = vpack.c.b16 %v4185, %v4177
      %v4338 = vpack.c.b16 %v4186, %v4178
      %v4339 = vpack.c.b16 %v4195, %v4187
      %v4340 = vpack.c.b16 %v4196, %v4188
      %v4341 = vpack.c.b16 %v4197, %v4189
      %v4342 = vpack.c.b16 %v4198, %v4190
      %v4343 = vpack.c.b16 %v4199, %v4191
      %v4344 = vpack.c.b16 %v4200, %v4192
      %v4345 = vpack.c.b16 %v4201, %v4193
      %v4346 = vpack.c.b16 %v4202, %v4194
      %v4347 = vpack.c.b16 %v4211, %v4203
      %v4348 = vpack.c.b16 %v4212, %v4204
      %v4349 = vpack.c.b16 %v4213, %v4205
      %v4350 = vpack.c.b16 %v4214, %v4206
      %v4351 = vpack.c.b16 %v4215, %v4207
      %v4352 = vpack.c.b16 %v4216, %v4208
      %v4353 = vpack.c.b16 %v4217, %v4209
      %v4354 = vpack.c.b16 %v4218, %v4210
      %v4355 = vpack.c.b16 %v4227, %v4219
      %v4356 = vpack.c.b16 %v4228, %v4220
      %v4357 = vpack.c.b16 %v4229, %v4221
      %v4358 = vpack.c.b16 %v4230, %v4222
      %v4359 = vpack.c.b16 %v4231, %v4223
      %v4360 = vpack.c.b16 %v4232, %v4224
      %v4361 = vpack.c.b16 %v4233, %v4225
      %v4362 = vpack.c.b16 %v4234, %v4226
      %4491 = vmatprep.subr.bf16.mxu0 %v4236
      %4492 = vmatpush1.bf16.msra.mxu0 %v4235
      %4493 = vmatprep.subr.bf16.mxu0 %v4244
      %4494 = vmatpush1.bf16.msra.mxu0 %v4243
      %4495 = vmatprep.subr.bf16.mxu0 %v4252
      %4496 = vmatpush1.bf16.msra.mxu0 %v4251
      %4497 = vmatprep.subr.bf16.mxu0 %v4260
      %4498 = vmatpush1.bf16.msra.mxu0 %v4259
      %4499 = vmatprep.subr.bf16.mxu0 %v4268
      %4500 = vmatpush1.bf16.msra.mxu0 %v4267
      %4501 = vmatprep.subr.bf16.mxu0 %v4276
      %4502 = vmatpush1.bf16.msra.mxu0 %v4275
      %4503 = vmatprep.subr.bf16.mxu0 %v4284
      %4504 = vmatpush1.bf16.msra.mxu0 %v4283
      %4505 = vmatprep.subr.bf16.mxu0 %v4292
      %4506 = vmatpush1.bf16.msra.mxu0 %v4291
      %4507 = vmatprep.subr.bf16.mxu0 %v4300
      %4508 = vmatpush1.bf16.msra.mxu0 %v4299
      %4509 = vmatprep.subr.bf16.mxu0 %v4308
      %4510 = vmatpush1.bf16.msra.mxu0 %v4307
      %4511 = vmatprep.subr.bf16.mxu0 %v4316
      %4512 = vmatpush1.bf16.msra.mxu0 %v4315
      %4513 = vmatprep.subr.bf16.mxu0 %v4324
      %4514 = vmatpush1.bf16.msra.mxu0 %v4323
      %4515 = vmatprep.subr.bf16.mxu0 %v4332
      %4516 = vmatpush1.bf16.msra.mxu0 %v4331
      %4517 = vmatprep.subr.bf16.mxu0 %v4340
      %4518 = vmatpush1.bf16.msra.mxu0 %v4339
      %4519 = vmatprep.subr.bf16.mxu0 %v4348
      %4520 = vmatpush1.bf16.msra.mxu0 %v4347
      %4521 = vmatprep.subr.bf16.mxu0 %v4356
      %4522 = vmatpush1.bf16.msra.mxu0 %v4355
      %4523 = vmatprep.mubr.bf16.mxu0 %v3680
      %4524 = vmatmul.mubr.bf16.gmra.mrb[0].mxu0 %v3679
      %v4525 = vpop.f32.mrb[0].mxu0
      %v4526 = vadd.f32 %v3814, %v4525
      %v4527 = vpop.f32.mrb[0].mxu0
      %v4528 = vadd.f32 %v3818, %v4527
      %v4529 = vpop.f32.mrb[0].mxu0
      %v4530 = vpop.f32.mrb[0].mxu0
      %4531 = vdwg.mxu0
      %4532 = vmatprep.subr.bf16.mxu0 %v4238
      %4533 = vmatpush1.bf16.msra.mxu0 %v4237
      %4534 = vmatprep.subr.bf16.mxu0 %v4246
      %4535 = vmatpush1.bf16.msra.mxu0 %v4245
      %4536 = vmatprep.subr.bf16.mxu0 %v4254
      %4537 = vmatpush1.bf16.msra.mxu0 %v4253
      %4538 = vmatprep.subr.bf16.mxu0 %v4262
      %4539 = vmatpush1.bf16.msra.mxu0 %v4261
      %4540 = vmatprep.subr.bf16.mxu0 %v4270
      %4541 = vmatpush1.bf16.msra.mxu0 %v4269
      %4542 = vmatprep.subr.bf16.mxu0 %v4278
      %4543 = vmatpush1.bf16.msra.mxu0 %v4277
      %4544 = vmatprep.subr.bf16.mxu0 %v4286
      %4545 = vmatpush1.bf16.msra.mxu0 %v4285
      %4546 = vmatprep.subr.bf16.mxu0 %v4294
      %4547 = vmatpush1.bf16.msra.mxu0 %v4293
      %4548 = vmatprep.subr.bf16.mxu0 %v4302
      %4549 = vmatpush1.bf16.msra.mxu0 %v4301
      %4550 = vmatprep.subr.bf16.mxu0 %v4310
      %4551 = vmatpush1.bf16.msra.mxu0 %v4309
      %4552 = vmatprep.subr.bf16.mxu0 %v4318
      %4553 = vmatpush1.bf16.msra.mxu0 %v4317
      %4554 = vmatprep.subr.bf16.mxu0 %v4326
      %4555 = vmatpush1.bf16.msra.mxu0 %v4325
      %4556 = vmatprep.subr.bf16.mxu0 %v4334
      %4557 = vmatpush1.bf16.msra.mxu0 %v4333
      %4558 = vmatprep.subr.bf16.mxu0 %v4342
      %4559 = vmatpush1.bf16.msra.mxu0 %v4341
      %4560 = vmatprep.subr.bf16.mxu0 %v4350
      %4561 = vmatpush1.bf16.msra.mxu0 %v4349
      %4562 = vmatprep.subr.bf16.mxu0 %v4358
      %4563 = vmatpush1.bf16.msra.mxu0 %v4357
      %4564 = vmatprep.mubr.bf16.mxu0 %v3680
      %4565 = vmatmul.mubr.bf16.gmra.mrb[0].mxu0 %v3679
      %v4566 = vpop.f32.mrb[0].mxu0
      %v4567 = vadd.f32 %v3822, %v4566
      %v4568 = vpop.f32.mrb[0].mxu0
      %v4569 = vadd.f32 %v3826, %v4568
      %v4570 = vpop.f32.mrb[0].mxu0
      %v4571 = vpop.f32.mrb[0].mxu0
      %4572 = vdwg.mxu0
      %4573 = vmatprep.subr.bf16.mxu0 %v4240
      %4574 = vmatpush1.bf16.msra.mxu0 %v4239
      %4575 = vmatprep.subr.bf16.mxu0 %v4248
      %4576 = vmatpush1.bf16.msra.mxu0 %v4247
      %4577 = vmatprep.subr.bf16.mxu0 %v4256
      %4578 = vmatpush1.bf16.msra.mxu0 %v4255
      %4579 = vmatprep.subr.bf16.mxu0 %v4264
      %4580 = vmatpush1.bf16.msra.mxu0 %v4263
      %4581 = vmatprep.subr.bf16.mxu0 %v4272
      %4582 = vmatpush1.bf16.msra.mxu0 %v4271
      %4583 = vmatprep.subr.bf16.mxu0 %v4280
      %4584 = vmatpush1.bf16.msra.mxu0 %v4279
      %4585 = vmatprep.subr.bf16.mxu0 %v4288
      %4586 = vmatpush1.bf16.msra.mxu0 %v4287
      %4587 = vmatprep.subr.bf16.mxu0 %v4296
      %4588 = vmatpush1.bf16.msra.mxu0 %v4295
      %4589 = vmatprep.subr.bf16.mxu0 %v4304
      %4590 = vmatpush1.bf16.msra.mxu0 %v4303
      %4591 = vmatprep.subr.bf16.mxu0 %v4312
      %4592 = vmatpush1.bf16.msra.mxu0 %v4311
      %4593 = vmatprep.subr.bf16.mxu0 %v4320
      %4594 = vmatpush1.bf16.msra.mxu0 %v4319
      %4595 = vmatprep.subr.bf16.mxu0 %v4328
      %4596 = vmatpush1.bf16.msra.mxu0 %v4327
      %4597 = vmatprep.subr.bf16.mxu0 %v4336
      %4598 = vmatpush1.bf16.msra.mxu0 %v4335
      %4599 = vmatprep.subr.bf16.mxu0 %v4344
      %4600 = vmatpush1.bf16.msra.mxu0 %v4343
      %4601 = vmatprep.subr.bf16.mxu0 %v4352
      %4602 = vmatpush1.bf16.msra.mxu0 %v4351
      %4603 = vmatprep.subr.bf16.mxu0 %v4360
      %4604 = vmatpush1.bf16.msra.mxu0 %v4359
      %4605 = vmatprep.mubr.bf16.mxu0 %v3680
      %4606 = vmatmul.mubr.bf16.gmra.mrb[0].mxu0 %v3679
      %v4607 = vpop.f32.mrb[0].mxu0
      %v4608 = vadd.f32 %v3830, %v4607
      %v4609 = vpop.f32.mrb[0].mxu0
      %v4610 = vadd.f32 %v3834, %v4609
      %v4611 = vpop.f32.mrb[0].mxu0
      %v4612 = vpop.f32.mrb[0].mxu0
      %4613 = vdwg.mxu0
      %4614 = vmatprep.subr.bf16.mxu0 %v4242
      %4615 = vmatpush1.bf16.msra.mxu0 %v4241
      %4616 = vmatprep.subr.bf16.mxu0 %v4250
      %4617 = vmatpush1.bf16.msra.mxu0 %v4249
      %4618 = vmatprep.subr.bf16.mxu0 %v4258
      %4619 = vmatpush1.bf16.msra.mxu0 %v4257
      %4620 = vmatprep.subr.bf16.mxu0 %v4266
      %4621 = vmatpush1.bf16.msra.mxu0 %v4265
      %4622 = vmatprep.subr.bf16.mxu0 %v4274
      %4623 = vmatpush1.bf16.msra.mxu0 %v4273
      %4624 = vmatprep.subr.bf16.mxu0 %v4282
      %4625 = vmatpush1.bf16.msra.mxu0 %v4281
      %4626 = vmatprep.subr.bf16.mxu0 %v4290
      %4627 = vmatpush1.bf16.msra.mxu0 %v4289
      %4628 = vmatprep.subr.bf16.mxu0 %v4298
      %4629 = vmatpush1.bf16.msra.mxu0 %v4297
      %4630 = vmatprep.subr.bf16.mxu0 %v4306
      %4631 = vmatpush1.bf16.msra.mxu0 %v4305
      %4632 = vmatprep.subr.bf16.mxu0 %v4314
      %4633 = vmatpush1.bf16.msra.mxu0 %v4313
      %4634 = vmatprep.subr.bf16.mxu0 %v4322
      %4635 = vmatpush1.bf16.msra.mxu0 %v4321
      %4636 = vmatprep.subr.bf16.mxu0 %v4330
      %4637 = vmatpush1.bf16.msra.mxu0 %v4329
      %4638 = vmatprep.subr.bf16.mxu0 %v4338
      %4639 = vmatpush1.bf16.msra.mxu0 %v4337
      %4640 = vmatprep.subr.bf16.mxu0 %v4346
      %4641 = vmatpush1.bf16.msra.mxu0 %v4345
      %4642 = vmatprep.subr.bf16.mxu0 %v4354
      %4643 = vmatpush1.bf16.msra.mxu0 %v4353
      %4644 = vmatprep.subr.bf16.mxu0 %v4362
      %4645 = vmatpush1.bf16.msra.mxu0 %v4361
      %4646 = vmatprep.mubr.bf16.mxu0 %v3680
      %4647 = vmatmul.mubr.bf16.gmra.mrb[0].mxu0 %v3679
      %v4648 = vpop.f32.mrb[0].mxu0
      %v4649 = vadd.f32 %v3838, %v4648
      %v4650 = vpop.f32.mrb[0].mxu0
      %v4651 = vadd.f32 %v3842, %v4650
      %v4652 = vpop.f32.mrb[0].mxu0
      %v4653 = vpop.f32.mrb[0].mxu0
      %4654 = vdwg.mxu0
      %v4655 = vmul.f32 %v4526, %v4526
      %v4656 = vmul.f32 %v4528, %v4528
      %v4657 = vmul.f32 %v4567, %v4567
      %v4658 = vmul.f32 %v4569, %v4569
      %v4659 = vmul.f32 %v4608, %v4608
      %v4660 = vmul.f32 %v4610, %v4610
      %v4661 = vmul.f32 %v4649, %v4649
      %v4662 = vmul.f32 %v4651, %v4651
      %v4663 = vmul.f32 %v4526, %v4655
      %v4664 = vmul.f32 %v4528, %v4656
      %v4665 = vmul.f32 %v4567, %v4657
      %v4666 = vmul.f32 %v4569, %v4658
      %v4667 = vmul.f32 %v4608, %v4659
      %v4668 = vmul.f32 %v4610, %v4660
      %v4669 = vmul.f32 %v4649, %v4661
      %v4670 = vmul.f32 %v4651, %v4662
      %v4671 = vmul.f32 %v4663, 0.044715
      %v4672 = vmul.f32 %v4664, 0.044715
      %v4673 = vmul.f32 %v4665, 0.044715
      %v4674 = vmul.f32 %v4666, 0.044715
      %v4675 = vmul.f32 %v4667, 0.044715
      %v4676 = vmul.f32 %v4668, 0.044715
      %v4677 = vmul.f32 %v4669, 0.044715
      %v4678 = vmul.f32 %v4670, 0.044715
      %v4679 = vadd.f32 %v4526, %v4671
      %v4680 = vadd.f32 %v4528, %v4672
      %v4681 = vadd.f32 %v4567, %v4673
      %v4682 = vadd.f32 %v4569, %v4674
      %v4683 = vadd.f32 %v4608, %v4675
      %v4684 = vadd.f32 %v4610, %v4676
      %v4685 = vadd.f32 %v4649, %v4677
      %v4686 = vadd.f32 %v4651, %v4678
      %v4687 = vmul.f32 %v4679, 0.7978846
      %v4688 = vmul.f32 %v4680, 0.7978846
      %v4689 = vmul.f32 %v4681, 0.7978846
      %v4690 = vmul.f32 %v4682, 0.7978846
      %v4691 = vmul.f32 %v4683, 0.7978846
      %v4692 = vmul.f32 %v4684, 0.7978846
      %v4693 = vmul.f32 %v4685, 0.7978846
      %v4694 = vmul.f32 %v4686, 0.7978846
      %v4695 = vtanh.pop %v4687
      %v4696 = vtanh.pop %v4688
      %v4697 = vtanh.pop %v4689
      %v4698 = vtanh.pop %v4690
      %v4699 = vtanh.pop %v4691
      %v4700 = vtanh.pop %v4692
      %v4701 = vtanh.pop %v4693
      %v4702 = vtanh.pop %v4694
      %v4703 = vadd.f32 %v4695, 1.0
      %v4704 = vadd.f32 %v4696, 1.0
      %v4705 = vadd.f32 %v4697, 1.0
      %v4706 = vadd.f32 %v4698, 1.0
      %v4707 = vadd.f32 %v4699, 1.0
      %v4708 = vadd.f32 %v4700, 1.0
      %v4709 = vadd.f32 %v4701, 1.0
      %v4710 = vadd.f32 %v4702, 1.0
      %v4711 = vmul.f32 %v4703, 0.5
      %v4712 = vmul.f32 %v4704, 0.5
      %v4713 = vmul.f32 %v4705, 0.5
      %v4714 = vmul.f32 %v4706, 0.5
      %v4715 = vmul.f32 %v4707, 0.5
      %v4716 = vmul.f32 %v4708, 0.5
      %v4717 = vmul.f32 %v4709, 0.5
      %v4718 = vmul.f32 %v4710, 0.5
      %v4719 = vmul.f32 %v4526, %v4711
      %v4720 = vmul.f32 %v4528, %v4712
      %v4721 = vmul.f32 %v4567, %v4713
      %v4722 = vmul.f32 %v4569, %v4714
      %v4723 = vmul.f32 %v4608, %v4715
      %v4724 = vmul.f32 %v4610, %v4716
      %v4725 = vmul.f32 %v4649, %v4717
      %v4726 = vmul.f32 %v4651, %v4718
      %v4727 = vpack.c.bf16 %v4719, %v4719
      %v4728 = vpack.c.bf16 %v4720, %v4720
      %v4729 = vpack.c.bf16 %v4721, %v4721
      %v4730 = vpack.c.bf16 %v4722, %v4722
      %v4731 = vpack.c.bf16 %v4723, %v4723
      %v4732 = vpack.c.bf16 %v4724, %v4724
      %v4733 = vpack.c.bf16 %v4725, %v4725
      %v4734 = vpack.c.bf16 %v4726, %v4726
      %v4735 = vld [vmem:[%s1022] sm:$0xff]
      %v4736 = vld [vmem:[%s1022 + $0x8] sm:$0xff]
      %v4737 = vld [vmem:[%s1022 + $0x10] sm:$0xff]
      %v4738 = vld [vmem:[%s1022 + $0x18] sm:$0xff]
      %v4739 = vld [vmem:[%s1022 + $0x20] sm:$0xff]
      %v4740 = vld [vmem:[%s1022 + $0x28] sm:$0xff]
      %v4741 = vld [vmem:[%s1022 + $0x30] sm:$0xff]
      %v4742 = vld [vmem:[%s1022 + $0x38] sm:$0xff]
      %v4743 = vld [vmem:[%s1022 + $0x40] sm:$0xff]
      %v4744 = vld [vmem:[%s1022 + $0x48] sm:$0xff]
      %v4745 = vld [vmem:[%s1022 + $0x50] sm:$0xff]
      %v4746 = vld [vmem:[%s1022 + $0x58] sm:$0xff]
      %v4747 = vld [vmem:[%s1022 + $0x60] sm:$0xff]
      %v4748 = vld [vmem:[%s1022 + $0x68] sm:$0xff]
      %v4749 = vld [vmem:[%s1022 + $0x70] sm:$0xff]
      %v4750 = vld [vmem:[%s1022 + $0x78] sm:$0xff]
      %v4751 = vld [vmem:[%s1022 + $0x80] sm:$0xff]
      %v4752 = vld [vmem:[%s1022 + $0x88] sm:$0xff]
      %v4753 = vld [vmem:[%s1022 + $0x90] sm:$0xff]
      %v4754 = vld [vmem:[%s1022 + $0x98] sm:$0xff]
      %v4755 = vld [vmem:[%s1022 + $0xa0] sm:$0xff]
      %v4756 = vld [vmem:[%s1022 + $0xa8] sm:$0xff]
      %v4757 = vld [vmem:[%s1022 + $0xb0] sm:$0xff]
      %v4758 = vld [vmem:[%s1022 + $0xb8] sm:$0xff]
      %v4759 = vld [vmem:[%s1022 + $0xc0] sm:$0xff]
      %v4760 = vld [vmem:[%s1022 + $0xc8] sm:$0xff]
      %v4761 = vld [vmem:[%s1022 + $0xd0] sm:$0xff]
      %v4762 = vld [vmem:[%s1022 + $0xd8] sm:$0xff]
      %v4763 = vld [vmem:[%s1022 + $0xe0] sm:$0xff]
      %v4764 = vld [vmem:[%s1022 + $0xe8] sm:$0xff]
      %v4765 = vld [vmem:[%s1022 + $0xf0] sm:$0xff]
      %v4766 = vld [vmem:[%s1022 + $0xf8] sm:$0xff]
      %v4767 = vld [vmem:[%s1022 + $0x100] sm:$0xff]
      %v4768 = vld [vmem:[%s1022 + $0x108] sm:$0xff]
      %v4769 = vld [vmem:[%s1022 + $0x110] sm:$0xff]
      %v4770 = vld [vmem:[%s1022 + $0x118] sm:$0xff]
      %v4771 = vld [vmem:[%s1022 + $0x120] sm:$0xff]
      %v4772 = vld [vmem:[%s1022 + $0x128] sm:$0xff]
      %v4773 = vld [vmem:[%s1022 + $0x130] sm:$0xff]
      %v4774 = vld [vmem:[%s1022 + $0x138] sm:$0xff]
      %v4775 = vld [vmem:[%s1022 + $0x140] sm:$0xff]
      %v4776 = vld [vmem:[%s1022 + $0x148] sm:$0xff]
      %v4777 = vld [vmem:[%s1022 + $0x150] sm:$0xff]
      %v4778 = vld [vmem:[%s1022 + $0x158] sm:$0xff]
      %v4779 = vld [vmem:[%s1022 + $0x160] sm:$0xff]
      %v4780 = vld [vmem:[%s1022 + $0x168] sm:$0xff]
      %v4781 = vld [vmem:[%s1022 + $0x170] sm:$0xff]
      %v4782 = vld [vmem:[%s1022 + $0x178] sm:$0xff]
      %v4783 = vld [vmem:[%s1022 + $0x180] sm:$0xff]
      %v4784 = vld [vmem:[%s1022 + $0x188] sm:$0xff]
      %v4785 = vld [vmem:[%s1022 + $0x190] sm:$0xff]
      %v4786 = vld [vmem:[%s1022 + $0x198] sm:$0xff]
      %v4787 = vld [vmem:[%s1022 + $0x1a0] sm:$0xff]
      %v4788 = vld [vmem:[%s1022 + $0x1a8] sm:$0xff]
      %v4789 = vld [vmem:[%s1022 + $0x1b0] sm:$0xff]
      %v4790 = vld [vmem:[%s1022 + $0x1b8] sm:$0xff]
      %v4791 = vld [vmem:[%s1022 + $0x1c0] sm:$0xff]
      %v4792 = vld [vmem:[%s1022 + $0x1c8] sm:$0xff]
      %v4793 = vld [vmem:[%s1022 + $0x1d0] sm:$0xff]
      %v4794 = vld [vmem:[%s1022 + $0x1d8] sm:$0xff]
      %v4795 = vld [vmem:[%s1022 + $0x1e0] sm:$0xff]
      %v4796 = vld [vmem:[%s1022 + $0x1e8] sm:$0xff]
      %v4797 = vld [vmem:[%s1022 + $0x1f0] sm:$0xff]
      %v4798 = vld [vmem:[%s1022 + $0x1f8] sm:$0xff]
      %v4799 = vld [vmem:[%s1022 + $0x200] sm:$0xff]
      %v4800 = vld [vmem:[%s1022 + $0x208] sm:$0xff]
      %v4801 = vld [vmem:[%s1022 + $0x210] sm:$0xff]
      %v4802 = vld [vmem:[%s1022 + $0x218] sm:$0xff]
      %v4803 = vld [vmem:[%s1022 + $0x220] sm:$0xff]
      %v4804 = vld [vmem:[%s1022 + $0x228] sm:$0xff]
      %v4805 = vld [vmem:[%s1022 + $0x230] sm:$0xff]
      %v4806 = vld [vmem:[%s1022 + $0x238] sm:$0xff]
      %v4807 = vld [vmem:[%s1022 + $0x240] sm:$0xff]
      %v4808 = vld [vmem:[%s1022 + $0x248] sm:$0xff]
      %v4809 = vld [vmem:[%s1022 + $0x250] sm:$0xff]
      %v4810 = vld [vmem:[%s1022 + $0x258] sm:$0xff]
      %v4811 = vld [vmem:[%s1022 + $0x260] sm:$0xff]
      %v4812 = vld [vmem:[%s1022 + $0x268] sm:$0xff]
      %v4813 = vld [vmem:[%s1022 + $0x270] sm:$0xff]
      %v4814 = vld [vmem:[%s1022 + $0x278] sm:$0xff]
      %v4815 = vld [vmem:[%s1022 + $0x280] sm:$0xff]
      %v4816 = vld [vmem:[%s1022 + $0x288] sm:$0xff]
      %v4817 = vld [vmem:[%s1022 + $0x290] sm:$0xff]
      %v4818 = vld [vmem:[%s1022 + $0x298] sm:$0xff]
      %v4819 = vld [vmem:[%s1022 + $0x2a0] sm:$0xff]
      %v4820 = vld [vmem:[%s1022 + $0x2a8] sm:$0xff]
      %v4821 = vld [vmem:[%s1022 + $0x2b0] sm:$0xff]
      %v4822 = vld [vmem:[%s1022 + $0x2b8] sm:$0xff]
      %v4823 = vld [vmem:[%s1022 + $0x2c0] sm:$0xff]
      %v4824 = vld [vmem:[%s1022 + $0x2c8] sm:$0xff]
      %v4825 = vld [vmem:[%s1022 + $0x2d0] sm:$0xff]
      %v4826 = vld [vmem:[%s1022 + $0x2d8] sm:$0xff]
      %v4827 = vld [vmem:[%s1022 + $0x2e0] sm:$0xff]
      %v4828 = vld [vmem:[%s1022 + $0x2e8] sm:$0xff]
      %v4829 = vld [vmem:[%s1022 + $0x2f0] sm:$0xff]
      %v4830 = vld [vmem:[%s1022 + $0x2f8] sm:$0xff]
      %v4831 = vld [vmem:[%s1022 + $0x300] sm:$0xff]
      %v4832 = vld [vmem:[%s1022 + $0x308] sm:$0xff]
      %v4833 = vld [vmem:[%s1022 + $0x310] sm:$0xff]
      %v4834 = vld [vmem:[%s1022 + $0x318] sm:$0xff]
      %v4835 = vld [vmem:[%s1022 + $0x320] sm:$0xff]
      %v4836 = vld [vmem:[%s1022 + $0x328] sm:$0xff]
      %v4837 = vld [vmem:[%s1022 + $0x330] sm:$0xff]
      %v4838 = vld [vmem:[%s1022 + $0x338] sm:$0xff]
      %v4839 = vld [vmem:[%s1022 + $0x340] sm:$0xff]
      %v4840 = vld [vmem:[%s1022 + $0x348] sm:$0xff]
      %v4841 = vld [vmem:[%s1022 + $0x350] sm:$0xff]
      %v4842 = vld [vmem:[%s1022 + $0x358] sm:$0xff]
      %v4843 = vld [vmem:[%s1022 + $0x360] sm:$0xff]
      %v4844 = vld [vmem:[%s1022 + $0x368] sm:$0xff]
      %v4845 = vld [vmem:[%s1022 + $0x370] sm:$0xff]
      %v4846 = vld [vmem:[%s1022 + $0x378] sm:$0xff]
      %v4847 = vld [vmem:[%s1022 + $0x380] sm:$0xff]
      %v4848 = vld [vmem:[%s1022 + $0x388] sm:$0xff]
      %v4849 = vld [vmem:[%s1022 + $0x390] sm:$0xff]
      %v4850 = vld [vmem:[%s1022 + $0x398] sm:$0xff]
      %v4851 = vld [vmem:[%s1022 + $0x3a0] sm:$0xff]
      %v4852 = vld [vmem:[%s1022 + $0x3a8] sm:$0xff]
      %v4853 = vld [vmem:[%s1022 + $0x3b0] sm:$0xff]
      %v4854 = vld [vmem:[%s1022 + $0x3b8] sm:$0xff]
      %v4855 = vld [vmem:[%s1022 + $0x3c0] sm:$0xff]
      %v4856 = vld [vmem:[%s1022 + $0x3c8] sm:$0xff]
      %v4857 = vld [vmem:[%s1022 + $0x3d0] sm:$0xff]
      %v4858 = vld [vmem:[%s1022 + $0x3d8] sm:$0xff]
      %v4859 = vld [vmem:[%s1022 + $0x3e0] sm:$0xff]
      %v4860 = vld [vmem:[%s1022 + $0x3e8] sm:$0xff]
      %v4861 = vld [vmem:[%s1022 + $0x3f0] sm:$0xff]
      %v4862 = vld [vmem:[%s1022 + $0x3f8] sm:$0xff]
      %v4863 = vld [vmem:[%s1026] sm:$0x3]
      %v4865 = vlaneseq
      %v4866 = vshrl.u32 %v4865, 7
      %v4867 = vsub.s32 0, %v4866
      %v4868 = vrot.slane %v4863, %v4867
      %v4869 = vlaneseq
      %v4870 = vshrl.u32 %v4869, 7
      %v4871 = vsub.s32 1, %v4870
      %v4872 = vrot.slane %v4863, %v4871
      %v5003 = vunpack.c.l.b16 %v4735
      %v5004 = vunpack.c.h.b16 %v4735
      %v5005 = vunpack.c.l.b16 %v4736
      %v5006 = vunpack.c.h.b16 %v4736
      %v5007 = vunpack.c.l.b16 %v4737
      %v5008 = vunpack.c.h.b16 %v4737
      %v5009 = vunpack.c.l.b16 %v4738
      %v5010 = vunpack.c.h.b16 %v4738
      %v5011 = vunpack.c.l.b16 %v4739
      %v5012 = vunpack.c.h.b16 %v4739
      %v5013 = vunpack.c.l.b16 %v4740
      %v5014 = vunpack.c.h.b16 %v4740
      %v5015 = vunpack.c.l.b16 %v4741
      %v5016 = vunpack.c.h.b16 %v4741
      %v5017 = vunpack.c.l.b16 %v4742
      %v5018 = vunpack.c.h.b16 %v4742
      %v5019 = vunpack.c.l.b16 %v4743
      %v5020 = vunpack.c.h.b16 %v4743
      %v5021 = vunpack.c.l.b16 %v4744
      %v5022 = vunpack.c.h.b16 %v4744
      %v5023 = vunpack.c.l.b16 %v4745
      %v5024 = vunpack.c.h.b16 %v4745
      %v5025 = vunpack.c.l.b16 %v4746
      %v5026 = vunpack.c.h.b16 %v4746
      %v5027 = vunpack.c.l.b16 %v4747
      %v5028 = vunpack.c.h.b16 %v4747
      %v5029 = vunpack.c.l.b16 %v4748
      %v5030 = vunpack.c.h.b16 %v4748
      %v5031 = vunpack.c.l.b16 %v4749
      %v5032 = vunpack.c.h.b16 %v4749
      %v5033 = vunpack.c.l.b16 %v4750
      %v5034 = vunpack.c.h.b16 %v4750
      %v5035 = vunpack.c.l.b16 %v4751
      %v5036 = vunpack.c.h.b16 %v4751
      %v5037 = vunpack.c.l.b16 %v4752
      %v5038 = vunpack.c.h.b16 %v4752
      %v5039 = vunpack.c.l.b16 %v4753
      %v5040 = vunpack.c.h.b16 %v4753
      %v5041 = vunpack.c.l.b16 %v4754
      %v5042 = vunpack.c.h.b16 %v4754
      %v5043 = vunpack.c.l.b16 %v4755
      %v5044 = vunpack.c.h.b16 %v4755
      %v5045 = vunpack.c.l.b16 %v4756
      %v5046 = vunpack.c.h.b16 %v4756
      %v5047 = vunpack.c.l.b16 %v4757
      %v5048 = vunpack.c.h.b16 %v4757
      %v5049 = vunpack.c.l.b16 %v4758
      %v5050 = vunpack.c.h.b16 %v4758
      %v5051 = vunpack.c.l.b16 %v4759
      %v5052 = vunpack.c.h.b16 %v4759
      %v5053 = vunpack.c.l.b16 %v4760
      %v5054 = vunpack.c.h.b16 %v4760
      %v5055 = vunpack.c.l.b16 %v4761
      %v5056 = vunpack.c.h.b16 %v4761
      %v5057 = vunpack.c.l.b16 %v4762
      %v5058 = vunpack.c.h.b16 %v4762
      %v5059 = vunpack.c.l.b16 %v4763
      %v5060 = vunpack.c.h.b16 %v4763
      %v5061 = vunpack.c.l.b16 %v4764
      %v5062 = vunpack.c.h.b16 %v4764
      %v5063 = vunpack.c.l.b16 %v4765
      %v5064 = vunpack.c.h.b16 %v4765
      %v5065 = vunpack.c.l.b16 %v4766
      %v5066 = vunpack.c.h.b16 %v4766
      %v5067 = vunpack.c.l.b16 %v4767
      %v5068 = vunpack.c.h.b16 %v4767
      %v5069 = vunpack.c.l.b16 %v4768
      %v5070 = vunpack.c.h.b16 %v4768
      %v5071 = vunpack.c.l.b16 %v4769
      %v5072 = vunpack.c.h.b16 %v4769
      %v5073 = vunpack.c.l.b16 %v4770
      %v5074 = vunpack.c.h.b16 %v4770
      %v5075 = vunpack.c.l.b16 %v4771
      %v5076 = vunpack.c.h.b16 %v4771
      %v5077 = vunpack.c.l.b16 %v4772
      %v5078 = vunpack.c.h.b16 %v4772
      %v5079 = vunpack.c.l.b16 %v4773
      %v5080 = vunpack.c.h.b16 %v4773
      %v5081 = vunpack.c.l.b16 %v4774
      %v5082 = vunpack.c.h.b16 %v4774
      %v5083 = vunpack.c.l.b16 %v4775
      %v5084 = vunpack.c.h.b16 %v4775
      %v5085 = vunpack.c.l.b16 %v4776
      %v5086 = vunpack.c.h.b16 %v4776
      %v5087 = vunpack.c.l.b16 %v4777
      %v5088 = vunpack.c.h.b16 %v4777
      %v5089 = vunpack.c.l.b16 %v4778
      %v5090 = vunpack.c.h.b16 %v4778
      %v5091 = vunpack.c.l.b16 %v4779
      %v5092 = vunpack.c.h.b16 %v4779
      %v5093 = vunpack.c.l.b16 %v4780
      %v5094 = vunpack.c.h.b16 %v4780
      %v5095 = vunpack.c.l.b16 %v4781
      %v5096 = vunpack.c.h.b16 %v4781
      %v5097 = vunpack.c.l.b16 %v4782
      %v5098 = vunpack.c.h.b16 %v4782
      %v5099 = vunpack.c.l.b16 %v4783
      %v5100 = vunpack.c.h.b16 %v4783
      %v5101 = vunpack.c.l.b16 %v4784
      %v5102 = vunpack.c.h.b16 %v4784
      %v5103 = vunpack.c.l.b16 %v4785
      %v5104 = vunpack.c.h.b16 %v4785
      %v5105 = vunpack.c.l.b16 %v4786
      %v5106 = vunpack.c.h.b16 %v4786
      %v5107 = vunpack.c.l.b16 %v4787
      %v5108 = vunpack.c.h.b16 %v4787
      %v5109 = vunpack.c.l.b16 %v4788
      %v5110 = vunpack.c.h.b16 %v4788
      %v5111 = vunpack.c.l.b16 %v4789
      %v5112 = vunpack.c.h.b16 %v4789
      %v5113 = vunpack.c.l.b16 %v4790
      %v5114 = vunpack.c.h.b16 %v4790
      %v5115 = vunpack.c.l.b16 %v4791
      %v5116 = vunpack.c.h.b16 %v4791
      %v5117 = vunpack.c.l.b16 %v4792
      %v5118 = vunpack.c.h.b16 %v4792
      %v5119 = vunpack.c.l.b16 %v4793
      %v5120 = vunpack.c.h.b16 %v4793
      %v5121 = vunpack.c.l.b16 %v4794
      %v5122 = vunpack.c.h.b16 %v4794
      %v5123 = vunpack.c.l.b16 %v4795
      %v5124 = vunpack.c.h.b16 %v4795
      %v5125 = vunpack.c.l.b16 %v4796
      %v5126 = vunpack.c.h.b16 %v4796
      %v5127 = vunpack.c.l.b16 %v4797
      %v5128 = vunpack.c.h.b16 %v4797
      %v5129 = vunpack.c.l.b16 %v4798
      %v5130 = vunpack.c.h.b16 %v4798
      %v5131 = vunpack.c.l.b16 %v4799
      %v5132 = vunpack.c.h.b16 %v4799
      %v5133 = vunpack.c.l.b16 %v4800
      %v5134 = vunpack.c.h.b16 %v4800
      %v5135 = vunpack.c.l.b16 %v4801
      %v5136 = vunpack.c.h.b16 %v4801
      %v5137 = vunpack.c.l.b16 %v4802
      %v5138 = vunpack.c.h.b16 %v4802
      %v5139 = vunpack.c.l.b16 %v4803
      %v5140 = vunpack.c.h.b16 %v4803
      %v5141 = vunpack.c.l.b16 %v4804
      %v5142 = vunpack.c.h.b16 %v4804
      %v5143 = vunpack.c.l.b16 %v4805
      %v5144 = vunpack.c.h.b16 %v4805
      %v5145 = vunpack.c.l.b16 %v4806
      %v5146 = vunpack.c.h.b16 %v4806
      %v5147 = vunpack.c.l.b16 %v4807
      %v5148 = vunpack.c.h.b16 %v4807
      %v5149 = vunpack.c.l.b16 %v4808
      %v5150 = vunpack.c.h.b16 %v4808
      %v5151 = vunpack.c.l.b16 %v4809
      %v5152 = vunpack.c.h.b16 %v4809
      %v5153 = vunpack.c.l.b16 %v4810
      %v5154 = vunpack.c.h.b16 %v4810
      %v5155 = vunpack.c.l.b16 %v4811
      %v5156 = vunpack.c.h.b16 %v4811
      %v5157 = vunpack.c.l.b16 %v4812
      %v5158 = vunpack.c.h.b16 %v4812
      %v5159 = vunpack.c.l.b16 %v4813
      %v5160 = vunpack.c.h.b16 %v4813
      %v5161 = vunpack.c.l.b16 %v4814
      %v5162 = vunpack.c.h.b16 %v4814
      %v5163 = vunpack.c.l.b16 %v4815
      %v5164 = vunpack.c.h.b16 %v4815
      %v5165 = vunpack.c.l.b16 %v4816
      %v5166 = vunpack.c.h.b16 %v4816
      %v5167 = vunpack.c.l.b16 %v4817
      %v5168 = vunpack.c.h.b16 %v4817
      %v5169 = vunpack.c.l.b16 %v4818
      %v5170 = vunpack.c.h.b16 %v4818
      %v5171 = vunpack.c.l.b16 %v4819
      %v5172 = vunpack.c.h.b16 %v4819
      %v5173 = vunpack.c.l.b16 %v4820
      %v5174 = vunpack.c.h.b16 %v4820
      %v5175 = vunpack.c.l.b16 %v4821
      %v5176 = vunpack.c.h.b16 %v4821
      %v5177 = vunpack.c.l.b16 %v4822
      %v5178 = vunpack.c.h.b16 %v4822
      %v5179 = vunpack.c.l.b16 %v4823
      %v5180 = vunpack.c.h.b16 %v4823
      %v5181 = vunpack.c.l.b16 %v4824
      %v5182 = vunpack.c.h.b16 %v4824
      %v5183 = vunpack.c.l.b16 %v4825
      %v5184 = vunpack.c.h.b16 %v4825
      %v5185 = vunpack.c.l.b16 %v4826
      %v5186 = vunpack.c.h.b16 %v4826
      %v5187 = vunpack.c.l.b16 %v4827
      %v5188 = vunpack.c.h.b16 %v4827
      %v5189 = vunpack.c.l.b16 %v4828
      %v5190 = vunpack.c.h.b16 %v4828
      %v5191 = vunpack.c.l.b16 %v4829
      %v5192 = vunpack.c.h.b16 %v4829
      %v5193 = vunpack.c.l.b16 %v4830
      %v5194 = vunpack.c.h.b16 %v4830
      %v5195 = vunpack.c.l.b16 %v4831
      %v5196 = vunpack.c.h.b16 %v4831
      %v5197 = vunpack.c.l.b16 %v4832
      %v5198 = vunpack.c.h.b16 %v4832
      %v5199 = vunpack.c.l.b16 %v4833
      %v5200 = vunpack.c.h.b16 %v4833
      %v5201 = vunpack.c.l.b16 %v4834
      %v5202 = vunpack.c.h.b16 %v4834
      %v5203 = vunpack.c.l.b16 %v4835
      %v5204 = vunpack.c.h.b16 %v4835
      %v5205 = vunpack.c.l.b16 %v4836
      %v5206 = vunpack.c.h.b16 %v4836
      %v5207 = vunpack.c.l.b16 %v4837
      %v5208 = vunpack.c.h.b16 %v4837
      %v5209 = vunpack.c.l.b16 %v4838
      %v5210 = vunpack.c.h.b16 %v4838
      %v5211 = vunpack.c.l.b16 %v4839
      %v5212 = vunpack.c.h.b16 %v4839
      %v5213 = vunpack.c.l.b16 %v4840
      %v5214 = vunpack.c.h.b16 %v4840
      %v5215 = vunpack.c.l.b16 %v4841
      %v5216 = vunpack.c.h.b16 %v4841
      %v5217 = vunpack.c.l.b16 %v4842
      %v5218 = vunpack.c.h.b16 %v4842
      %v5219 = vunpack.c.l.b16 %v4843
      %v5220 = vunpack.c.h.b16 %v4843
      %v5221 = vunpack.c.l.b16 %v4844
      %v5222 = vunpack.c.h.b16 %v4844
      %v5223 = vunpack.c.l.b16 %v4845
      %v5224 = vunpack.c.h.b16 %v4845
      %v5225 = vunpack.c.l.b16 %v4846
      %v5226 = vunpack.c.h.b16 %v4846
      %v5227 = vunpack.c.l.b16 %v4847
      %v5228 = vunpack.c.h.b16 %v4847
      %v5229 = vunpack.c.l.b16 %v4848
      %v5230 = vunpack.c.h.b16 %v4848
      %v5231 = vunpack.c.l.b16 %v4849
      %v5232 = vunpack.c.h.b16 %v4849
      %v5233 = vunpack.c.l.b16 %v4850
      %v5234 = vunpack.c.h.b16 %v4850
      %v5235 = vunpack.c.l.b16 %v4851
      %v5236 = vunpack.c.h.b16 %v4851
      %v5237 = vunpack.c.l.b16 %v4852
      %v5238 = vunpack.c.h.b16 %v4852
      %v5239 = vunpack.c.l.b16 %v4853
      %v5240 = vunpack.c.h.b16 %v4853
      %v5241 = vunpack.c.l.b16 %v4854
      %v5242 = vunpack.c.h.b16 %v4854
      %v5243 = vunpack.c.l.b16 %v4855
      %v5244 = vunpack.c.h.b16 %v4855
      %v5245 = vunpack.c.l.b16 %v4856
      %v5246 = vunpack.c.h.b16 %v4856
      %v5247 = vunpack.c.l.b16 %v4857
      %v5248 = vunpack.c.h.b16 %v4857
      %v5249 = vunpack.c.l.b16 %v4858
      %v5250 = vunpack.c.h.b16 %v4858
      %v5251 = vunpack.c.l.b16 %v4859
      %v5252 = vunpack.c.h.b16 %v4859
      %v5253 = vunpack.c.l.b16 %v4860
      %v5254 = vunpack.c.h.b16 %v4860
      %v5255 = vunpack.c.l.b16 %v4861
      %v5256 = vunpack.c.h.b16 %v4861
      %v5257 = vunpack.c.l.b16 %v4862
      %v5258 = vunpack.c.h.b16 %v4862
      %v5259 = vpack.c.b16 %v5005, %v5003
      %v5260 = vpack.c.b16 %v5006, %v5004
      %v5261 = vpack.c.b16 %v5009, %v5007
      %v5262 = vpack.c.b16 %v5010, %v5008
      %v5263 = vpack.c.b16 %v5013, %v5011
      %v5264 = vpack.c.b16 %v5014, %v5012
      %v5265 = vpack.c.b16 %v5017, %v5015
      %v5266 = vpack.c.b16 %v5018, %v5016
      %v5267 = vpack.c.b16 %v5021, %v5019
      %v5268 = vpack.c.b16 %v5022, %v5020
      %v5269 = vpack.c.b16 %v5025, %v5023
      %v5270 = vpack.c.b16 %v5026, %v5024
      %v5271 = vpack.c.b16 %v5029, %v5027
      %v5272 = vpack.c.b16 %v5030, %v5028
      %v5273 = vpack.c.b16 %v5033, %v5031
      %v5274 = vpack.c.b16 %v5034, %v5032
      %v5275 = vpack.c.b16 %v5037, %v5035
      %v5276 = vpack.c.b16 %v5038, %v5036
      %v5277 = vpack.c.b16 %v5041, %v5039
      %v5278 = vpack.c.b16 %v5042, %v5040
      %v5279 = vpack.c.b16 %v5045, %v5043
      %v5280 = vpack.c.b16 %v5046, %v5044
      %v5281 = vpack.c.b16 %v5049, %v5047
      %v5282 = vpack.c.b16 %v5050, %v5048
      %v5283 = vpack.c.b16 %v5053, %v5051
      %v5284 = vpack.c.b16 %v5054, %v5052
      %v5285 = vpack.c.b16 %v5057, %v5055
      %v5286 = vpack.c.b16 %v5058, %v5056
      %v5287 = vpack.c.b16 %v5061, %v5059
      %v5288 = vpack.c.b16 %v5062, %v5060
      %v5289 = vpack.c.b16 %v5065, %v5063
      %v5290 = vpack.c.b16 %v5066, %v5064
      %v5291 = vpack.c.b16 %v5069, %v5067
      %v5292 = vpack.c.b16 %v5070, %v5068
      %v5293 = vpack.c.b16 %v5073, %v5071
      %v5294 = vpack.c.b16 %v5074, %v5072
      %v5295 = vpack.c.b16 %v5077, %v5075
      %v5296 = vpack.c.b16 %v5078, %v5076
      %v5297 = vpack.c.b16 %v5081, %v5079
      %v5298 = vpack.c.b16 %v5082, %v5080
      %v5299 = vpack.c.b16 %v5085, %v5083
      %v5300 = vpack.c.b16 %v5086, %v5084
      %v5301 = vpack.c.b16 %v5089, %v5087
      %v5302 = vpack.c.b16 %v5090, %v5088
      %v5303 = vpack.c.b16 %v5093, %v5091
      %v5304 = vpack.c.b16 %v5094, %v5092
      %v5305 = vpack.c.b16 %v5097, %v5095
      %v5306 = vpack.c.b16 %v5098, %v5096
      %v5307 = vpack.c.b16 %v5101, %v5099
      %v5308 = vpack.c.b16 %v5102, %v5100
      %v5309 = vpack.c.b16 %v5105, %v5103
      %v5310 = vpack.c.b16 %v5106, %v5104
      %v5311 = vpack.c.b16 %v5109, %v5107
      %v5312 = vpack.c.b16 %v5110, %v5108
      %v5313 = vpack.c.b16 %v5113, %v5111
      %v5314 = vpack.c.b16 %v5114, %v5112
      %v5315 = vpack.c.b16 %v5117, %v5115
      %v5316 = vpack.c.b16 %v5118, %v5116
      %v5317 = vpack.c.b16 %v5121, %v5119
      %v5318 = vpack.c.b16 %v5122, %v5120
      %v5319 = vpack.c.b16 %v5125, %v5123
      %v5320 = vpack.c.b16 %v5126, %v5124
      %v5321 = vpack.c.b16 %v5129, %v5127
      %v5322 = vpack.c.b16 %v5130, %v5128
      %v5323 = vpack.c.b16 %v5133, %v5131
      %v5324 = vpack.c.b16 %v5134, %v5132
      %v5325 = vpack.c.b16 %v5137, %v5135
      %v5326 = vpack.c.b16 %v5138, %v5136
      %v5327 = vpack.c.b16 %v5141, %v5139
      %v5328 = vpack.c.b16 %v5142, %v5140
      %v5329 = vpack.c.b16 %v5145, %v5143
      %v5330 = vpack.c.b16 %v5146, %v5144
      %v5331 = vpack.c.b16 %v5149, %v5147
      %v5332 = vpack.c.b16 %v5150, %v5148
      %v5333 = vpack.c.b16 %v5153, %v5151
      %v5334 = vpack.c.b16 %v5154, %v5152
      %v5335 = vpack.c.b16 %v5157, %v5155
      %v5336 = vpack.c.b16 %v5158, %v5156
      %v5337 = vpack.c.b16 %v5161, %v5159
      %v5338 = vpack.c.b16 %v5162, %v5160
      %v5339 = vpack.c.b16 %v5165, %v5163
      %v5340 = vpack.c.b16 %v5166, %v5164
      %v5341 = vpack.c.b16 %v5169, %v5167
      %v5342 = vpack.c.b16 %v5170, %v5168
      %v5343 = vpack.c.b16 %v5173, %v5171
      %v5344 = vpack.c.b16 %v5174, %v5172
      %v5345 = vpack.c.b16 %v5177, %v5175
      %v5346 = vpack.c.b16 %v5178, %v5176
      %v5347 = vpack.c.b16 %v5181, %v5179
      %v5348 = vpack.c.b16 %v5182, %v5180
      %v5349 = vpack.c.b16 %v5185, %v5183
      %v5350 = vpack.c.b16 %v5186, %v5184
      %v5351 = vpack.c.b16 %v5189, %v5187
      %v5352 = vpack.c.b16 %v5190, %v5188
      %v5353 = vpack.c.b16 %v5193, %v5191
      %v5354 = vpack.c.b16 %v5194, %v5192
      %v5355 = vpack.c.b16 %v5197, %v5195
      %v5356 = vpack.c.b16 %v5198, %v5196
      %v5357 = vpack.c.b16 %v5201, %v5199
      %v5358 = vpack.c.b16 %v5202, %v5200
      %v5359 = vpack.c.b16 %v5205, %v5203
      %v5360 = vpack.c.b16 %v5206, %v5204
      %v5361 = vpack.c.b16 %v5209, %v5207
      %v5362 = vpack.c.b16 %v5210, %v5208
      %v5363 = vpack.c.b16 %v5213, %v5211
      %v5364 = vpack.c.b16 %v5214, %v5212
      %v5365 = vpack.c.b16 %v5217, %v5215
      %v5366 = vpack.c.b16 %v5218, %v5216
      %v5367 = vpack.c.b16 %v5221, %v5219
      %v5368 = vpack.c.b16 %v5222, %v5220
      %v5369 = vpack.c.b16 %v5225, %v5223
      %v5370 = vpack.c.b16 %v5226, %v5224
      %v5371 = vpack.c.b16 %v5229, %v5227
      %v5372 = vpack.c.b16 %v5230, %v5228
      %v5373 = vpack.c.b16 %v5233, %v5231
      %v5374 = vpack.c.b16 %v5234, %v5232
      %v5375 = vpack.c.b16 %v5237, %v5235
      %v5376 = vpack.c.b16 %v5238, %v5236
      %v5377 = vpack.c.b16 %v5241, %v5239
      %v5378 = vpack.c.b16 %v5242, %v5240
      %v5379 = vpack.c.b16 %v5245, %v5243
      %v5380 = vpack.c.b16 %v5246, %v5244
      %v5381 = vpack.c.b16 %v5249, %v5247
      %v5382 = vpack.c.b16 %v5250, %v5248
      %v5383 = vpack.c.b16 %v5253, %v5251
      %v5384 = vpack.c.b16 %v5254, %v5252
      %v5385 = vpack.c.b16 %v5257, %v5255
      %v5386 = vpack.c.b16 %v5258, %v5256
      %5515 = vmatprep.subr.bf16.mxu0 %v5260
      %5516 = vmatpush1.bf16.msra.mxu0 %v5259
      %5517 = vmatprep.subr.bf16.mxu0 %v5262
      %5518 = vmatpush1.bf16.msra.mxu0 %v5261
      %5519 = vmatprep.subr.bf16.mxu0 %v5264
      %5520 = vmatpush1.bf16.msra.mxu0 %v5263
      %5521 = vmatprep.subr.bf16.mxu0 %v5266
      %5522 = vmatpush1.bf16.msra.mxu0 %v5265
      %5523 = vmatprep.subr.bf16.mxu0 %v5268
      %5524 = vmatpush1.bf16.msra.mxu0 %v5267
      %5525 = vmatprep.subr.bf16.mxu0 %v5270
      %5526 = vmatpush1.bf16.msra.mxu0 %v5269
      %5527 = vmatprep.subr.bf16.mxu0 %v5272
      %5528 = vmatpush1.bf16.msra.mxu0 %v5271
      %5529 = vmatprep.subr.bf16.mxu0 %v5274
      %5530 = vmatpush1.bf16.msra.mxu0 %v5273
      %5531 = vmatprep.subr.bf16.mxu0 %v5276
      %5532 = vmatpush1.bf16.msra.mxu0 %v5275
      %5533 = vmatprep.subr.bf16.mxu0 %v5278
      %5534 = vmatpush1.bf16.msra.mxu0 %v5277
      %5535 = vmatprep.subr.bf16.mxu0 %v5280
      %5536 = vmatpush1.bf16.msra.mxu0 %v5279
      %5537 = vmatprep.subr.bf16.mxu0 %v5282
      %5538 = vmatpush1.bf16.msra.mxu0 %v5281
      %5539 = vmatprep.subr.bf16.mxu0 %v5284
      %5540 = vmatpush1.bf16.msra.mxu0 %v5283
      %5541 = vmatprep.subr.bf16.mxu0 %v5286
      %5542 = vmatpush1.bf16.msra.mxu0 %v5285
      %5543 = vmatprep.subr.bf16.mxu0 %v5288
      %5544 = vmatpush1.bf16.msra.mxu0 %v5287
      %5545 = vmatprep.subr.bf16.mxu0 %v5290
      %5546 = vmatpush1.bf16.msra.mxu0 %v5289
      %5547 = vmatprep.mubr.bf16.mxu0 %v4728
      %5548 = vmatmul.mubr.bf16.gmra.mrb[0].mxu0 %v4727
      %v5549 = vpop.f32.mrb[0].mxu0
      %v5550 = vadd.f32 %v4868, %v5549
      %v5551 = vpop.f32.mrb[0].mxu0
      %v5552 = vadd.f32 %v4872, %v5551
      %v5553 = vpop.f32.mrb[0].mxu0
      %v5554 = vpop.f32.mrb[0].mxu0
      %5555 = vdwg.mxu0
      %5556 = vmatprep.subr.bf16.mxu0 %v5292
      %5557 = vmatpush1.bf16.msra.mxu0 %v5291
      %5558 = vmatprep.subr.bf16.mxu0 %v5294
      %5559 = vmatpush1.bf16.msra.mxu0 %v5293
      %5560 = vmatprep.subr.bf16.mxu0 %v5296
      %5561 = vmatpush1.bf16.msra.mxu0 %v5295
      %5562 = vmatprep.subr.bf16.mxu0 %v5298
      %5563 = vmatpush1.bf16.msra.mxu0 %v5297
      %5564 = vmatprep.subr.bf16.mxu0 %v5300
      %5565 = vmatpush1.bf16.msra.mxu0 %v5299
      %5566 = vmatprep.subr.bf16.mxu0 %v5302
      %5567 = vmatpush1.bf16.msra.mxu0 %v5301
      %5568 = vmatprep.subr.bf16.mxu0 %v5304
      %5569 = vmatpush1.bf16.msra.mxu0 %v5303
      %5570 = vmatprep.subr.bf16.mxu0 %v5306
      %5571 = vmatpush1.bf16.msra.mxu0 %v5305
      %5572 = vmatprep.subr.bf16.mxu0 %v5308
      %5573 = vmatpush1.bf16.msra.mxu0 %v5307
      %5574 = vmatprep.subr.bf16.mxu0 %v5310
      %5575 = vmatpush1.bf16.msra.mxu0 %v5309
      %5576 = vmatprep.subr.bf16.mxu0 %v5312
      %5577 = vmatpush1.bf16.msra.mxu0 %v5311
      %5578 = vmatprep.subr.bf16.mxu0 %v5314
      %5579 = vmatpush1.bf16.msra.mxu0 %v5313
      %5580 = vmatprep.subr.bf16.mxu0 %v5316
      %5581 = vmatpush1.bf16.msra.mxu0 %v5315
      %5582 = vmatprep.subr.bf16.mxu0 %v5318
      %5583 = vmatpush1.bf16.msra.mxu0 %v5317
      %5584 = vmatprep.subr.bf16.mxu0 %v5320
      %5585 = vmatpush1.bf16.msra.mxu0 %v5319
      %5586 = vmatprep.subr.bf16.mxu0 %v5322
      %5587 = vmatpush1.bf16.msra.mxu0 %v5321
      %5588 = vmatprep.mubr.bf16.mxu0 %v4730
      %5589 = vmatmul.mubr.bf16.gmra.mrb[0].mxu0 %v4729
      %v5590 = vpop.f32.mrb[0].mxu0
      %v5591 = vadd.f32 %v5550, %v5590
      %v5592 = vpop.f32.mrb[0].mxu0
      %v5593 = vadd.f32 %v5552, %v5592
      %v5594 = vpop.f32.mrb[0].mxu0
      %v5595 = vpop.f32.mrb[0].mxu0
      %5596 = vdwg.mxu0
      %5597 = vmatprep.subr.bf16.mxu0 %v5324
      %5598 = vmatpush1.bf16.msra.mxu0 %v5323
      %5599 = vmatprep.subr.bf16.mxu0 %v5326
      %5600 = vmatpush1.bf16.msra.mxu0 %v5325
      %5601 = vmatprep.subr.bf16.mxu0 %v5328
      %5602 = vmatpush1.bf16.msra.mxu0 %v5327
      %5603 = vmatprep.subr.bf16.mxu0 %v5330
      %5604 = vmatpush1.bf16.msra.mxu0 %v5329
      %5605 = vmatprep.subr.bf16.mxu0 %v5332
      %5606 = vmatpush1.bf16.msra.mxu0 %v5331
      %5607 = vmatprep.subr.bf16.mxu0 %v5334
      %5608 = vmatpush1.bf16.msra.mxu0 %v5333
      %5609 = vmatprep.subr.bf16.mxu0 %v5336
      %5610 = vmatpush1.bf16.msra.mxu0 %v5335
      %5611 = vmatprep.subr.bf16.mxu0 %v5338
      %5612 = vmatpush1.bf16.msra.mxu0 %v5337
      %5613 = vmatprep.subr.bf16.mxu0 %v5340
      %5614 = vmatpush1.bf16.msra.mxu0 %v5339
      %5615 = vmatprep.subr.bf16.mxu0 %v5342
      %5616 = vmatpush1.bf16.msra.mxu0 %v5341
      %5617 = vmatprep.subr.bf16.mxu0 %v5344
      %5618 = vmatpush1.bf16.msra.mxu0 %v5343
      %5619 = vmatprep.subr.bf16.mxu0 %v5346
      %5620 = vmatpush1.bf16.msra.mxu0 %v5345
      %5621 = vmatprep.subr.bf16.mxu0 %v5348
      %5622 = vmatpush1.bf16.msra.mxu0 %v5347
      %5623 = vmatprep.subr.bf16.mxu0 %v5350
      %5624 = vmatpush1.bf16.msra.mxu0 %v5349
      %5625 = vmatprep.subr.bf16.mxu0 %v5352
      %5626 = vmatpush1.bf16.msra.mxu0 %v5351
      %5627 = vmatprep.subr.bf16.mxu0 %v5354
      %5628 = vmatpush1.bf16.msra.mxu0 %v5353
      %5629 = vmatprep.mubr.bf16.mxu0 %v4732
      %5630 = vmatmul.mubr.bf16.gmra.mrb[0].mxu0 %v4731
      %v5631 = vpop.f32.mrb[0].mxu0
      %v5632 = vadd.f32 %v5591, %v5631
      %v5633 = vpop.f32.mrb[0].mxu0
      %v5634 = vadd.f32 %v5593, %v5633
      %v5635 = vpop.f32.mrb[0].mxu0
      %v5636 = vpop.f32.mrb[0].mxu0
      %5637 = vdwg.mxu0
      %5638 = vmatprep.subr.bf16.mxu0 %v5356
      %5639 = vmatpush1.bf16.msra.mxu0 %v5355
      %5640 = vmatprep.subr.bf16.mxu0 %v5358
      %5641 = vmatpush1.bf16.msra.mxu0 %v5357
      %5642 = vmatprep.subr.bf16.mxu0 %v5360
      %5643 = vmatpush1.bf16.msra.mxu0 %v5359
      %5644 = vmatprep.subr.bf16.mxu0 %v5362
      %5645 = vmatpush1.bf16.msra.mxu0 %v5361
      %5646 = vmatprep.subr.bf16.mxu0 %v5364
      %5647 = vmatpush1.bf16.msra.mxu0 %v5363
      %5648 = vmatprep.subr.bf16.mxu0 %v5366
      %5649 = vmatpush1.bf16.msra.mxu0 %v5365
      %5650 = vmatprep.subr.bf16.mxu0 %v5368
      %5651 = vmatpush1.bf16.msra.mxu0 %v5367
      %5652 = vmatprep.subr.bf16.mxu0 %v5370
      %5653 = vmatpush1.bf16.msra.mxu0 %v5369
      %5654 = vmatprep.subr.bf16.mxu0 %v5372
      %5655 = vmatpush1.bf16.msra.mxu0 %v5371
      %5656 = vmatprep.subr.bf16.mxu0 %v5374
      %5657 = vmatpush1.bf16.msra.mxu0 %v5373
      %5658 = vmatprep.subr.bf16.mxu0 %v5376
      %5659 = vmatpush1.bf16.msra.mxu0 %v5375
      %5660 = vmatprep.subr.bf16.mxu0 %v5378
      %5661 = vmatpush1.bf16.msra.mxu0 %v5377
      %5662 = vmatprep.subr.bf16.mxu0 %v5380
      %5663 = vmatpush1.bf16.msra.mxu0 %v5379
      %5664 = vmatprep.subr.bf16.mxu0 %v5382
      %5665 = vmatpush1.bf16.msra.mxu0 %v5381
      %5666 = vmatprep.subr.bf16.mxu0 %v5384
      %5667 = vmatpush1.bf16.msra.mxu0 %v5383
      %5668 = vmatprep.subr.bf16.mxu0 %v5386
      %5669 = vmatpush1.bf16.msra.mxu0 %v5385
      %5670 = vmatprep.mubr.bf16.mxu0 %v4734
      %5671 = vmatmul.mubr.bf16.gmra.mrb[0].mxu0 %v4733
      %v5672 = vpop.f32.mrb[0].mxu0
      %v5673 = vadd.f32 %v5632, %v5672
      %v5674 = vpop.f32.mrb[0].mxu0
      %v5675 = vadd.f32 %v5634, %v5674
      %v5676 = vpop.f32.mrb[0].mxu0
      %v5677 = vpop.f32.mrb[0].mxu0
      %5678 = vdwg.mxu0
      %v5679 = vlaneseq
      %v5680 = vshrl.u32 %v5679, 7
      %v5681 = vsub.s32 5, %v5680
      %v5682 = vrot.slane %v1044, %v5681
      %v5683 = vlaneseq
      %v5684 = vshrl.u32 %v5683, 7
      %v5685 = vsub.s32 5, %v5684
      %v5686 = vrot.slane %v1045, %v5685
      %v5687 = vmul.f32 %v5682, %v5673
      %v5688 = vmul.f32 %v5686, %v5675
      %v5689 = vadd.f32 %v3641, %v5687
      %v5690 = vadd.f32 %v3642, %v5688
      %5691 = vst [vmem:[#allocation2] sm:$0xff] %v5689
      %5692 = vst [vmem:[#allocation2 + $0x8] sm:$0xff] %v5690
      %p5693 = scmp.eq.s32.totalorder %s37, 1
      // Predicated region
      $region109: #{transformer_forward.1} parent=103 // pred_check
        %p5694 = pneg %p5693
      $region110: #{transformer_forward.1} parent=103 // pred_check_branch
        %5696 = sbr.rel (%p5694) target = $region112
      $region111: #{transformer_forward.1} parent=103 // pred_region
        %v5697 = vld [vmem:[%s963] sm:$0x3]
        %v5698 = vunpack.c.l.bf16 %v5697
        %v5699 = vadd.f32 %v5689, %v5690
        %5700 = vadd.xlane.f32.xlu0 %v5699
        %v5701 = vpop.xlane.xlu0 %5700
        %v5702 = vmul.f32 %v5701, %v1550
        %v5703 = vsub.f32 %v5689, %v5702
        %v5704 = vsub.f32 %v5690, %v5702
        %v5705 = vmul.f32 %v5703, %v5703
        %v5706 = vmul.f32 %v5704, %v5704
        %v5707 = vadd.f32 %v5705, %v5706
        %5708 = vadd.xlane.f32.xlu0 %v5707
        %v5709 = vpop.xlane.xlu0 %5708
        %v5710 = vmul.f32 %v5709, %v1550
        %v5711 = vadd.f32 %v5710, 1e-06
        %v5712 = vrsqrt.pop %v5711
        %v5713 = vmul.f32 %v5703, %v5712
        %v5714 = vmul.f32 %v5704, %v5712
        %v5715 = vadd.f32 %v5698, 1.0
        %v5717 = vlaneseq
        %v5718 = vshrl.u32 %v5717, 7
        %v5719 = vsub.s32 1, %v5718
        %v5720 = vrot.slane %v5715, %v5719
        %v5721 = vlaneseq
        %v5722 = vshrl.u32 %v5721, 7
        %v5723 = vsub.s32 3, %v5722
        %v5724 = vrot.slane %v5715, %v5723
        %v5727 = vlaneseq
        %v5728 = vshrl.u32 %v5727, 7
        %v5729 = vsub.s32 1, %v5728
        %v5730 = vrot.slane %v5720, %v5729
        %v5731 = vlaneseq
        %v5732 = vshrl.u32 %v5731, 7
        %v5733 = vsub.s32 1, %v5732
        %v5734 = vrot.slane %v5724, %v5733
        %v5735 = vmul.f32 %v5713, %v5730
        %v5736 = vmul.f32 %v5714, %v5734
        %v5738 = vlaneseq
        %v5739 = vshrl.u32 %v5738, 7
        %v5740 = vsub.s32 0, %v5739
        %v5741 = vrot.slane %v5698, %v5740
        %v5742 = vlaneseq
        %v5743 = vshrl.u32 %v5742, 7
        %v5744 = vsub.s32 2, %v5743
        %v5745 = vrot.slane %v5698, %v5744
        %v5748 = vlaneseq
        %v5749 = vshrl.u32 %v5748, 7
        %v5750 = vsub.s32 0, %v5749
        %v5751 = vrot.slane %v5741, %v5750
        %v5752 = vlaneseq
        %v5753 = vshrl.u32 %v5752, 7
        %v5754 = vsub.s32 0, %v5753
        %v5755 = vrot.slane %v5745, %v5754
        %v5756 = vadd.f32 %v5735, %v5751
        %v5757 = vadd.f32 %v5736, %v5755
        %v5758 = vpack.c.bf16 %v5756, %v5756
        %v5759 = vpack.c.bf16 %v5757, %v5757
        %v5760 = vld [vmem:[%s19] sm:$0xf]
        %v5761 = vld [vmem:[%s19 + $0x4] sm:$0xf]
        %v5762 = vld [vmem:[%s19 + $0x8] sm:$0xf]
        %v5763 = vld [vmem:[%s19 + $0xc] sm:$0xf]
        %v5764 = vld [vmem:[%s19 + $0x10] sm:$0xf]
        %v5765 = vld [vmem:[%s19 + $0x14] sm:$0xf]
        %v5766 = vld [vmem:[%s19 + $0x18] sm:$0xf]
        %v5767 = vld [vmem:[%s19 + $0x1c] sm:$0xf]
        %v5768 = vld [vmem:[%s19 + $0x20] sm:$0xf]
        %v5769 = vld [vmem:[%s19 + $0x24] sm:$0xf]
        %v5770 = vld [vmem:[%s19 + $0x28] sm:$0xf]
        %v5771 = vld [vmem:[%s19 + $0x2c] sm:$0xf]
        %v5772 = vld [vmem:[%s19 + $0x30] sm:$0xf]
        %v5773 = vld [vmem:[%s19 + $0x34] sm:$0xf]
        %v5774 = vld [vmem:[%s19 + $0x38] sm:$0xf]
        %v5775 = vld [vmem:[%s19 + $0x3c] sm:$0xf]
        %v5776 = vld [vmem:[%s19 + $0x40] sm:$0xf]
        %v5777 = vld [vmem:[%s19 + $0x44] sm:$0xf]
        %v5778 = vld [vmem:[%s19 + $0x48] sm:$0xf]
        %v5779 = vld [vmem:[%s19 + $0x4c] sm:$0xf]
        %v5780 = vld [vmem:[%s19 + $0x50] sm:$0xf]
        %v5781 = vld [vmem:[%s19 + $0x54] sm:$0xf]
        %v5782 = vld [vmem:[%s19 + $0x58] sm:$0xf]
        %v5783 = vld [vmem:[%s19 + $0x5c] sm:$0xf]
        %v5784 = vld [vmem:[%s19 + $0x60] sm:$0xf]
        %v5785 = vld [vmem:[%s19 + $0x64] sm:$0xf]
        %v5786 = vld [vmem:[%s19 + $0x68] sm:$0xf]
        %v5787 = vld [vmem:[%s19 + $0x6c] sm:$0xf]
        %v5788 = vld [vmem:[%s19 + $0x70] sm:$0xf]
        %v5789 = vld [vmem:[%s19 + $0x74] sm:$0xf]
        %v5790 = vld [vmem:[%s19 + $0x78] sm:$0xf]
        %v5791 = vld [vmem:[%s19 + $0x7c] sm:$0xf]
        %v5792 = vld [vmem:[%s20] sm:$0x1]
        %v5794 = vlaneseq
        %v5795 = vshrl.u32 %v5794, 7
        %v5796 = vsub.s32 0, %v5795
        %v5797 = vrot.slane %v5792, %v5796
        %v5831 = vunpack.c.l.b16 %v5760
        %v5832 = vunpack.c.l.b16 %v5761
        %v5833 = vunpack.c.l.b16 %v5762
        %v5834 = vunpack.c.l.b16 %v5763
        %v5835 = vunpack.c.l.b16 %v5764
        %v5836 = vunpack.c.l.b16 %v5765
        %v5837 = vunpack.c.l.b16 %v5766
        %v5838 = vunpack.c.l.b16 %v5767
        %v5839 = vunpack.c.l.b16 %v5768
        %v5840 = vunpack.c.l.b16 %v5769
        %v5841 = vunpack.c.l.b16 %v5770
        %v5842 = vunpack.c.l.b16 %v5771
        %v5843 = vunpack.c.l.b16 %v5772
        %v5844 = vunpack.c.l.b16 %v5773
        %v5845 = vunpack.c.l.b16 %v5774
        %v5846 = vunpack.c.l.b16 %v5775
        %v5847 = vunpack.c.l.b16 %v5776
        %v5848 = vunpack.c.l.b16 %v5777
        %v5849 = vunpack.c.l.b16 %v5778
        %v5850 = vunpack.c.l.b16 %v5779
        %v5851 = vunpack.c.l.b16 %v5780
        %v5852 = vunpack.c.l.b16 %v5781
        %v5853 = vunpack.c.l.b16 %v5782
        %v5854 = vunpack.c.l.b16 %v5783
        %v5855 = vunpack.c.l.b16 %v5784
        %v5856 = vunpack.c.l.b16 %v5785
        %v5857 = vunpack.c.l.b16 %v5786
        %v5858 = vunpack.c.l.b16 %v5787
        %v5859 = vunpack.c.l.b16 %v5788
        %v5860 = vunpack.c.l.b16 %v5789
        %v5861 = vunpack.c.l.b16 %v5790
        %v5862 = vunpack.c.l.b16 %v5791
        %v5863 = vpack.c.b16 %v5832, %v5831
        %v5864 = vpack.c.b16 %v5834, %v5833
        %v5865 = vpack.c.b16 %v5836, %v5835
        %v5866 = vpack.c.b16 %v5838, %v5837
        %v5867 = vpack.c.b16 %v5840, %v5839
        %v5868 = vpack.c.b16 %v5842, %v5841
        %v5869 = vpack.c.b16 %v5844, %v5843
        %v5870 = vpack.c.b16 %v5846, %v5845
        %v5871 = vpack.c.b16 %v5848, %v5847
        %v5872 = vpack.c.b16 %v5850, %v5849
        %v5873 = vpack.c.b16 %v5852, %v5851
        %v5874 = vpack.c.b16 %v5854, %v5853
        %v5875 = vpack.c.b16 %v5856, %v5855
        %v5876 = vpack.c.b16 %v5858, %v5857
        %v5877 = vpack.c.b16 %v5860, %v5859
        %v5878 = vpack.c.b16 %v5862, %v5861
        %5895 = vmatprep.subr.bf16.mxu0 0
        %5896 = vmatpush1.bf16.msra.mxu0 %v5863
        %5897 = vmatprep.subr.bf16.mxu0 0
        %5898 = vmatpush1.bf16.msra.mxu0 %v5864
        %5899 = vmatprep.subr.bf16.mxu0 0
        %5900 = vmatpush1.bf16.msra.mxu0 %v5865
        %5901 = vmatprep.subr.bf16.mxu0 0
        %5902 = vmatpush1.bf16.msra.mxu0 %v5866
        %5903 = vmatprep.subr.bf16.mxu0 0
        %5904 = vmatpush1.bf16.msra.mxu0 %v5867
        %5905 = vmatprep.subr.bf16.mxu0 0
        %5906 = vmatpush1.bf16.msra.mxu0 %v5868
        %5907 = vmatprep.subr.bf16.mxu0 0
        %5908 = vmatpush1.bf16.msra.mxu0 %v5869
        %5909 = vmatprep.subr.bf16.mxu0 0
        %5910 = vmatpush1.bf16.msra.mxu0 %v5870
        %5911 = vmatprep.subr.bf16.mxu0 0
        %5912 = vmatpush1.bf16.msra.mxu0 %v5871
        %5913 = vmatprep.subr.bf16.mxu0 0
        %5914 = vmatpush1.bf16.msra.mxu0 %v5872
        %5915 = vmatprep.subr.bf16.mxu0 0
        %5916 = vmatpush1.bf16.msra.mxu0 %v5873
        %5917 = vmatprep.subr.bf16.mxu0 0
        %5918 = vmatpush1.bf16.msra.mxu0 %v5874
        %5919 = vmatprep.subr.bf16.mxu0 0
        %5920 = vmatpush1.bf16.msra.mxu0 %v5875
        %5921 = vmatprep.subr.bf16.mxu0 0
        %5922 = vmatpush1.bf16.msra.mxu0 %v5876
        %5923 = vmatprep.subr.bf16.mxu0 0
        %5924 = vmatpush1.bf16.msra.mxu0 %v5877
        %5925 = vmatprep.subr.bf16.mxu0 0
        %5926 = vmatpush1.bf16.msra.mxu0 %v5878
        %5927 = vmatprep.mubr.bf16.mxu0 %v5759
        %5928 = vmatmul.mubr.bf16.gmra.mrb[0].mxu0 %v5758
        %v5929 = vpop.f32.mrb[0].mxu0
        %v5930 = vadd.f32 %v5797, %v5929
        %v5931 = vpop.f32.mrb[0].mxu0
        %v5932 = vpop.f32.mrb[0].mxu0
        %v5933 = vpop.f32.mrb[0].mxu0
        %5934 = vdwg.mxu0
        %5935 = vst [vmem:[%s1030] sm:$0xff] %v5930
      $region112: #{transformer_forward.1} parent=103 // pred_fallthru
        _
      %p5936 = scmp.lt.s32.totalorder %s36, 1
      %s5937 = scalar_select %p5936, %s36, 1
      %s5938 = smul.addr %s5937, 8
      %s5939 = scalar_lea.vmem %s21, %s5938
      // Predicated region
      $region113: #{transformer_forward.1} parent=103 // pred_check
        %p5940 = pneg %p602
      $region114: #{transformer_forward.1} parent=103 // pred_check_branch
        %5942 = sbr.rel (%p5940) target = $region116
      $region115: #{transformer_forward.1} parent=103 // pred_region
        _
      $region116: #{transformer_forward.1} parent=103 // pred_fallthru
        _
    $region104: #{transformer_forward.1} parent=5 // pred_fallthru
      _
    %p5943 = scmp.le.s32.totalorder 2, %s27
    // Predicated region
    $region117: #{transformer_forward.1} parent=5 // pred_check
      %p5944 = pneg %p5943
    $region118: #{transformer_forward.1} parent=5 // pred_check_branch
      %5946 = sbr.rel (%p5944) target = $region120
    $region119: #{transformer_forward.1} parent=5 // pred_region
      %s5947 = ssub.s32 %s27, 2
      // Predicated region
      $region121: #{transformer_forward.1} parent=119 // pred_check
        %p5948 = pneg %p608
      $region122: #{transformer_forward.1} parent=119 // pred_check_branch
        %5950 = sbr.rel (%p5948) target = $region124
      $region123: #{transformer_forward.1} parent=119 // pred_region
        %p5951 = scmp.lt.s32.totalorder %s38, 1
        %s5952 = scalar_select %p5951, %s38, 1
        %s5953 = smul.addr %s5952, 8
        %s5954 = scalar_lea.vmem %s21, %s5953
      $region124: #{transformer_forward.1} parent=119 // pred_fallthru
        _
    $region120: #{transformer_forward.1} parent=5 // pred_fallthru
      _
  $region6: #{transformer_forward.1} parent=0 // loop_footer
    %s31 = sadd.s32 1, %s27
  $region7: #{transformer_forward.1} parent=0 // loop_footer_branch
    %26 = sbr.rel target = $region3
  $region8: #{transformer_forward.1} parent=0 // loop_exit
    _

</llo_original>
